<compile_context>
chip_gen: v5e
topology: v5e:2x2
jax: 0.10.0
libtpu: 0.0.40
codegen_flags: <defaults>
</compile_context>

<pallas_src>
import functools

import jax
import jax.numpy as jnp
from jax.experimental import pallas as pl
from jax.experimental.pallas import tpu as pltpu

F32 = jnp.float32

# Order in which prepared parameters are passed to the kernel.
PARAM_ORDER = (
    "wq_s", "bq_s", "wk_s", "bk_s", "wv_s", "bv_s", "wo_s", "bo_s",
    "g0", "be0",
    "wq_c", "bq_c", "wk_c", "bk_c", "wv_c", "bv_c", "wo_c", "bo_c",
    "g1", "be1",
    "wf1", "bf1", "wf2", "bf2", "g2", "be2",
)


# ------------------------------ Fused kernel --------------------------------

def _decoder_block_kernel(
    # data (per batch-tile blocks)
    q_ref, k_ref, v_ref, bias_ref,
    # self-attention weights (Q pre-scaled by 1/sqrt(E)) + decoder LN
    wq_s_ref, bq_s_ref, wk_s_ref, bk_s_ref, wv_s_ref, bv_s_ref,
    wo_s_ref, bo_s_ref, g0_ref, be0_ref,
    # cross-attention weights (Q pre-scaled) + LN1
    wq_c_ref, bq_c_ref, wk_c_ref, bk_c_ref, wv_c_ref, bv_c_ref,
    wo_c_ref, bo_c_ref, g1_ref, be1_ref,
    # feed-forward weights + LN2
    wf1_ref, bf1_ref, wf2_ref, bf2_ref, g2_ref, be2_ref,
    # output
    o_ref,
    *, nb, Q, X, E, H, K, Kp, Y, D):
  """DecoderBlock forward for `nb` row-stacked batch elements (all in VMEM)."""

  XE = X * E

  x_q = q_ref[...]                       # (nb*Q, X*E)
  x_k = k_ref[...]                       # (nb*Kp, Y*E)  (rows >= K are padding)
  x_v = v_ref[...]
  self_bias = bias_ref[...]              # (X*Q, X*Q) additive 0/-1e20 mask

  def proj_blocks(x_flat, w_ref, b_ref, nblocks):
    # Per-output-E-block projections: the results are already in the layout
    # the attention consumes, so no fused-projection + masked column copies.
    return [jnp.dot(x_flat, w_ref[:, i * E:(i + 1) * E],
                    preferred_element_type=F32) + b_ref[:, i * E:(i + 1) * E]
            for i in range(nblocks)]

  def ln2d(x, g_ref, b_ref):
    # layerNorm2D on flat (rows, X*E): LayerNorm over E per x-block, then one
    # full-width affine.  Everything stays in values (no VMEM staging).
    parts = []
    for xi in range(X):
      xs = x[:, xi * E:(xi + 1) * E]
      mu = jnp.mean(xs, axis=-1, keepdims=True)
      xc = xs - mu
      var = jnp.mean(xc * xc, axis=-1, keepdims=True)
      parts.append(xc * jax.lax.rsqrt(var + jnp.float32(1e-5)))
    y = jnp.concatenate(parts, axis=-1)
    return y * g_ref[...] + b_ref[...]

  def attention(q_blocks, k_blocks, v_blocks, rq, rk, bias, wo_ref, bo_ref):
    # q_blocks: X arrays of (nb*rq, E); k/v_blocks: L arrays of (nb*rk, E).
    # Scale is already folded into the Q projection.  Per-batch / per-head
    # score & AV matmuls are statically unrolled; everything is vreg-resident.
    flat_rows = []
    for n in range(nb):
      q_tok = jnp.concatenate([qb[n * rq:(n + 1) * rq, :] for qb in q_blocks],
                              axis=0)                       # (X*rq, E)
      k_tok = jnp.concatenate([kb[n * rk:(n + 1) * rk, :] for kb in k_blocks],
                              axis=0)                       # (L*rk, E)
      v_tok = jnp.concatenate([vb[n * rk:(n + 1) * rk, :] for vb in v_blocks],
                              axis=0)
      head_outs = []
      for h in range(H):
        c0 = h * D
        qh = q_tok[:, c0:c0 + D]
        kh = k_tok[:, c0:c0 + D]
        vh = v_tok[:, c0:c0 + D]
        s = jax.lax.dot_general(qh, kh, (((1,), (1,)), ((), ())),
                                preferred_element_type=F32)  # (X*rq, L*rk)
        if bias is not None:
          s = s + bias                  # masked_fill(-1e20) equivalent
        m = jnp.max(s, axis=-1, keepdims=True)
        p = jnp.exp(s - m)
        denom = jnp.sum(p, axis=-1, keepdims=True)
        attn = p * pl.reciprocal(denom, approx=True)         # softmax (EUP)
        head_outs.append(jnp.dot(attn, vh, preferred_element_type=F32))
      a_tok = jnp.concatenate(head_outs, axis=-1)             # (X*rq, E)
      # Merge heads + x-blocks straight into the flat layout the output
      # projection consumes (rows = (n, q), lanes = x*E + e).
      flat_rows.append(jnp.concatenate(
          [a_tok[xi * rq:(xi + 1) * rq, :] for xi in range(X)], axis=-1))
    a_flat = jnp.concatenate(flat_rows, axis=0)               # (nb*rq, X*E)
    return (jnp.dot(a_flat, wo_ref[...], preferred_element_type=F32)
            + bo_ref[...])

  # ---------------- self attention (per-x-block QKV projections) ------------
  q_blocks = proj_blocks(x_q, wq_s_ref, bq_s_ref, X)
  k_blocks = proj_blocks(x_q, wk_s_ref, bk_s_ref, X)
  v_blocks = proj_blocks(x_q, wv_s_ref, bv_s_ref, X)
  sa = attention(q_blocks, k_blocks, v_blocks, Q, Q, self_bias,
                 wo_s_ref, bo_s_ref)
  q2 = ln2d(sa + x_q, g0_ref, be0_ref)                        # residual + norm

  # --------------------------- cross attention ------------------------------
  if Kp > K:
    # Kill the padded key rows (k index >= K within each y block).
    kcol = jax.lax.broadcasted_iota(jnp.int32, (X * Q, Y * Kp), 1)
    pad_bias = jnp.where(kcol % Kp < K, jnp.float32(0.0), jnp.float32(-1e20))
  else:
    pad_bias = None
  q_blocks = proj_blocks(q2, wq_c_ref, bq_c_ref, X)
  k_blocks = proj_blocks(x_k, wk_c_ref, bk_c_ref, Y)
  v_blocks = proj_blocks(x_v, wv_c_ref, bv_c_ref, Y)
  ca = attention(q_blocks, k_blocks, v_blocks, Q, Kp, pad_bias,
                 wo_c_ref, bo_c_ref)
  x1 = ln2d(ca + q2, g1_ref, be1_ref)                         # residual + norm1

  # ----------------------------- feed forward -------------------------------
  h1 = jnp.dot(x1, wf1_ref[...], preferred_element_type=F32) + bf1_ref[...]
  h1 = jnp.maximum(h1, jnp.float32(0.05) * h1)                # LeakyReLU(0.05)
  ff = jnp.dot(h1, wf2_ref[...], preferred_element_type=F32) + bf2_ref[...]
  out = ln2d(ff + x1, g2_ref, be2_ref)                        # residual + norm2

  o_ref[...] = out.astype(o_ref.dtype)


# ------------------------- One-time parameter prep ---------------------------

def prepare_decoder_block_params(p, E):
  """Fold the softmax scale into the Q projections and flatten biases/LN params.

  Done ONCE (not per forward call), so it is a true constant fold."""
  scale = 1.0 / float(E) ** 0.5
  sa = p["self_attn"]
  tb = p["tblock"]
  ca = tb["attn"]
  row = lambda b: b.reshape(1, -1)
  return dict(
      wq_s=sa["w_q"] * scale, bq_s=row(sa["b_q"]) * scale,
      wk_s=sa["w_k"], bk_s=row(sa["b_k"]),
      wv_s=sa["w_v"], bv_s=row(sa["b_v"]),
      wo_s=sa["w_o"], bo_s=row(sa["b_o"]),
      g0=p["norm_g"].reshape(1, -1), be0=p["norm_b"].reshape(1, -1),
      wq_c=ca["w_q"] * scale, bq_c=row(ca["b_q"]) * scale,
      wk_c=ca["w_k"], bk_c=row(ca["b_k"]),
      wv_c=ca["w_v"], bv_c=row(ca["b_v"]),
      wo_c=ca["w_o"], bo_c=row(ca["b_o"]),
      g1=tb["norm1_g"].reshape(1, -1), be1=tb["norm1_b"].reshape(1, -1),
      wf1=tb["ff_w1"], bf1=row(tb["ff_b1"]),
      wf2=tb["ff_w2"], bf2=row(tb["ff_b2"]),
      g2=tb["norm2_g"].reshape(1, -1), be2=tb["norm2_b"].reshape(1, -1),
  )


def make_self_attn_bias(trg_mask, Q, X):
  """Build the additive 0/-1e20 self-attention bias ONCE.

  Token order is row = x*Q + q, col = x2*Q + k.  Only masks broadcastable from
  (Q, 1, Q, 1) / (Q, X, Q, X) (i.e. (q, x, k)-dependent, not batch/head
  dependent) are supported."""
  if trg_mask is None:
    return jnp.zeros((X * Q, X * Q), F32)
  m4 = jnp.broadcast_to(trg_mask, (Q, X, Q, X))
  bias = jnp.where(m4 == 0, jnp.float32(-1e20), jnp.float32(0.0))
  return bias.transpose(1, 0, 3, 2).reshape(X * Q, X * Q)


# ------------------------------ Kernel wrapper -------------------------------

def decoder_block(prepared, query, key, value, self_bias, E, H, *,
                  batch_tile=16):
  """DecoderBlock.forward as one fused pallas_call, batch-tiled over N.

  batch_tile: batches per grid step (16 -> 128-row matmuls, good for v5e;
  use 32 -> 256 rows to fill the v6e/v7x MXU)."""
  N, Q, X, _E = query.shape
  assert _E == E and E % H == 0
  K_in, Y = key.shape[1], key.shape[2]
  D = E // H

  Kp = ((K_in + 7) // 8) * 8             # pad key rows to a sublane multiple
  nb = max(1, min(batch_tile, N))
  n_pad = pl.cdiv(N, nb) * nb

  qf = query.reshape(N, Q, X * E).astype(F32)
  kf = key.reshape(N, K_in, Y * E).astype(F32)
  vf = value.reshape(N, K_in, Y * E).astype(F32)
  if n_pad != N:
    qf = jnp.pad(qf, ((0, n_pad - N), (0, 0), (0, 0)))
    kf = jnp.pad(kf, ((0, n_pad - N), (0, 0), (0, 0)))
    vf = jnp.pad(vf, ((0, n_pad - N), (0, 0), (0, 0)))
  if Kp != K_in:
    kf = jnp.pad(kf, ((0, 0), (0, Kp - K_in), (0, 0)))
    vf = jnp.pad(vf, ((0, 0), (0, Kp - K_in), (0, 0)))
  qf = qf.reshape(n_pad * Q, X * E)      # flat, lane-dense row-stacked layout
  kf = kf.reshape(n_pad * Kp, Y * E)
  vf = vf.reshape(n_pad * Kp, Y * E)

  weights = [prepared[k] for k in PARAM_ORDER]

  def _fixed(a):
    # Whole-array block, constant index map -> DMA'd once, VMEM-resident.
    assert a.ndim == 2
    return pl.BlockSpec(a.shape, lambda i: (0, 0))

  # Advisory cost estimate so XLA schedules surrounding ops sensibly.
  XQ, YKp = X * Q, Y * Kp
  Fh = int(prepared["wf1"].shape[1])
  macs = (3 * Q * (X * E) * (X * E)          # self QKV projections
          + Q * (X * E) * (X * E)            # self output projection
          + Q * (X * E) * (X * E)            # cross Q projection
          + 2 * Kp * (Y * E) * (Y * E)       # cross K/V projections
          + Q * (X * E) * (X * E)            # cross output projection
          + 2 * H * XQ * XQ * D              # self scores + AV
          + 2 * H * XQ * YKp * D             # cross scores + AV
          + Q * (X * E) * Fh + Q * Fh * (X * E))   # FFN
  cost = pl.CostEstimate(
      flops=2 * macs * n_pad,
      transcendentals=n_pad * (H * (XQ * XQ + XQ * YKp) + 3 * Q * X),
      bytes_accessed=4 * (qf.size + kf.size + vf.size + self_bias.size
                          + sum(int(w.size) for w in weights)
                          + n_pad * Q * X * E))

  kern = functools.partial(_decoder_block_kernel, nb=nb, Q=Q, X=X, E=E, H=H,
                           K=K_in, Kp=Kp, Y=Y, D=D)

  out = pl.pallas_call(
      kern,
      grid=(n_pad // nb,),
      out_shape=jax.ShapeDtypeStruct((n_pad * Q, X * E), F32),
      in_specs=([pl.BlockSpec((nb * Q, X * E), lambda i: (i, 0)),
                 pl.BlockSpec((nb * Kp, Y * E), lambda i: (i, 0)),
                 pl.BlockSpec((nb * Kp, Y * E), lambda i: (i, 0)),
                 _fixed(self_bias)]
                + [_fixed(w) for w in weights]),
      out_specs=pl.BlockSpec((nb * Q, X * E), lambda i: (i, 0)),
      compiler_params=pltpu.CompilerParams(
          dimension_semantics=("parallel",)),
      cost_estimate=cost,
  )(qf, kf, vf, self_bias, *weights)

  return out[:N * Q].reshape(N, Q, X, E)


# ---------------------- Pure-JAX reference (for checking) --------------------

def _mha_ref(pp, query, key, value, mask, E, H):
  N, Q, X, _ = query.shape
  K, Y = value.shape[1], value.shape[2]
  D = E // H
  v = value.reshape(N, K, Y * E) @ pp["w_v"] + pp["b_v"]
  k = key.reshape(N, K, Y * E) @ pp["w_k"] + pp["b_k"]
  q = query.reshape(N, Q, X * E) @ pp["w_q"] + pp["b_q"]
  v = v.reshape(N, K, Y, H, D)
  k = k.reshape(N, K, Y, H, D)
  q = q.reshape(N, Q, X, H, D)
  energy = jnp.einsum('nqxhd,nkyhd->nhqxky', q, k)
  if mask is not None:
    energy = jnp.where(mask == 0, jnp.float32(-1e20), energy)
  energy = energy.reshape(N, H, Q, X, K * Y)
  attn = jax.nn.softmax(energy / jnp.sqrt(jnp.float32(E)), axis=4)
  attn = attn.reshape(N, H, Q, X, K, Y)
  out = jnp.einsum('nhqxky,nkyhd->nqxhd', attn, v).reshape(N, Q, X * H * D)
  out = out @ pp["w_o"] + pp["b_o"]
  return out.reshape(N, Q, X, E)


def _ln2d_ref(g, b, x):
  mu = x.mean(-1, keepdims=True)
  var = ((x - mu) ** 2).mean(-1, keepdims=True)
  return (x - mu) * jax.lax.rsqrt(var + jnp.float32(1e-5)) * g + b


def _decoder_block_ref(p, query, key, value, trg_mask, E, H):
  tb = p["tblock"]
  attn = _mha_ref(p["self_attn"], query, query, query, trg_mask, E, H)
  q2 = _ln2d_ref(p["norm_g"], p["norm_b"], attn + query)
  attn2 = _mha_ref(tb["attn"], q2, key, value, None, E, H)
  x1 = _ln2d_ref(tb["norm1_g"], tb["norm1_b"], attn2 + q2)
  N, Q, X, _ = query.shape
  h = x1.reshape(N, Q, X * E) @ tb["ff_w1"] + tb["ff_b1"]
  h = jnp.where(h >= 0, h, 0.05 * h)
  ff = (h @ tb["ff_w2"] + tb["ff_b2"]).reshape(N, Q, X, E)
  return _ln2d_ref(tb["norm2_g"], tb["norm2_b"], ff + x1)


# --------------------------- Deterministic init ------------------------------

def init_linear(key, fin, fout, scale=0.05):
  kw, kb = jax.random.split(key)
  w = scale * jax.random.normal(kw, (fin, fout), F32)
  b = scale * jax.random.normal(kb, (fout,), F32)
  return w, b


def init_mha(key, query_dim, value_dim, E):
  ks = jax.random.split(key, 4)
  w_v, b_v = init_linear(ks[0], value_dim * E, value_dim * E)
  w_k, b_k = init_linear(ks[1], value_dim * E, value_dim * E)
  w_q, b_q = init_linear(ks[2], query_dim * E, query_dim * E)
  w_o, b_o = init_linear(ks[3], query_dim * E, query_dim * E)
  return dict(w_v=w_v, b_v=b_v, w_k=w_k, b_k=b_k,
              w_q=w_q, b_q=b_q, w_o=w_o, b_o=b_o)


def init_ln2d(key, dim, E):
  kg, kb = jax.random.split(key)
  g = 1.0 + 0.05 * jax.random.normal(kg, (dim, E), F32)
  b = 0.05 * jax.random.normal(kb, (dim, E), F32)
  return g, b


def init_decoder_block(key, output_dim, input_dim, E, forward_expansion):
  ks = jax.random.split(key, 7)
  norm_g, norm_b = init_ln2d(ks[0], output_dim, E)
  self_attn = init_mha(ks[1], output_dim, output_dim, E)
  cross_attn = init_mha(ks[2], output_dim, input_dim, E)
  n1_g, n1_b = init_ln2d(ks[3], output_dim, E)
  n2_g, n2_b = init_ln2d(ks[4], output_dim, E)
  ff_w1, ff_b1 = init_linear(ks[5], output_dim * E,
                             forward_expansion * output_dim * E)
  ff_w2, ff_b2 = init_linear(ks[6], forward_expansion * output_dim * E,
                             output_dim * E)
  tblock = dict(attn=cross_attn, norm1_g=n1_g, norm1_b=n1_b,
                norm2_g=n2_g, norm2_b=n2_b,
                ff_w1=ff_w1, ff_b1=ff_b1, ff_w2=ff_w2, ff_b2=ff_b2)
  return dict(norm_g=norm_g, norm_b=norm_b, self_attn=self_attn,
              tblock=tblock)


# ---------------------------------- Main --------------------------------------

if __name__ == "__main__":
  # transformerInfo: embedSize=32, heads=4 (headDim=8),
  # outputDim=2, inputDim=3, forwardExpansion=2.
  E, H = 32, 4
  output_dim, input_dim = 2, 3
  forward_expansion = 2
  N, out_seq, in_seq = 2, 8, 6

  root = jax.random.PRNGKey(0)
  kp, kq, kk, kv = jax.random.split(root, 4)

  params = init_decoder_block(kp, output_dim, input_dim, E, forward_expansion)

  query = jax.random.normal(kq, (N, out_seq, output_dim, E), F32)
  key_in = jax.random.normal(kk, (N, in_seq, input_dim, E), F32)
  value_in = jax.random.normal(kv, (N, in_seq, input_dim, E), F32)

  # Causal target mask, broadcastable to energy (N,H,Q,X,K,Y).
  trg_mask = jnp.tril(jnp.ones((out_seq, out_seq), F32))[:, None, :, None]

  # One-time prep (scale fold, bias/LN flattening, mask bias) -- NOT per call.
  prepared = prepare_decoder_block_params(params, E)
  self_bias = make_self_attn_bias(trg_mask, out_seq, output_dim)

  out = decoder_block(prepared, query, key_in, value_in, self_bias, E, H)
  out = jax.block_until_ready(out)

  assert out.shape == (N, out_seq, output_dim, E), out.shape
  assert bool(jnp.all(jnp.isfinite(out)))

  # Cross-check against a pure-JAX reference of the PyTorch module (raw params).
  with jax.default_matmul_precision("float32"):
    ref = _decoder_block_ref(params, query, key_in, value_in, trg_mask, E, H)
  ref = jax.block_until_ready(ref)
  max_err = float(jnp.max(jnp.abs(out - ref)))
  assert max_err < 5e-2, f"max abs error vs reference: {max_err}"

  print("KERNEL_OK")
</pallas_src>

<mosaic_0001>
module attributes {stable_mosaic.version = 11 : i64} {
  func.func @_decoder_block_kernel(%arg0: i32, %arg1: memref<16x64xf32, #tpu.memory_space<vmem>>, %arg2: memref<16x96xf32, #tpu.memory_space<vmem>>, %arg3: memref<16x96xf32, #tpu.memory_space<vmem>>, %arg4: memref<16x16xf32, #tpu.memory_space<vmem>>, %arg5: memref<64x64xf32, #tpu.memory_space<vmem>>, %arg6: memref<1x64xf32, #tpu.memory_space<vmem>>, %arg7: memref<64x64xf32, #tpu.memory_space<vmem>>, %arg8: memref<1x64xf32, #tpu.memory_space<vmem>>, %arg9: memref<64x64xf32, #tpu.memory_space<vmem>>, %arg10: memref<1x64xf32, #tpu.memory_space<vmem>>, %arg11: memref<64x64xf32, #tpu.memory_space<vmem>>, %arg12: memref<1x64xf32, #tpu.memory_space<vmem>>, %arg13: memref<1x64xf32, #tpu.memory_space<vmem>>, %arg14: memref<1x64xf32, #tpu.memory_space<vmem>>, %arg15: memref<64x64xf32, #tpu.memory_space<vmem>>, %arg16: memref<1x64xf32, #tpu.memory_space<vmem>>, %arg17: memref<96x96xf32, #tpu.memory_space<vmem>>, %arg18: memref<1x96xf32, #tpu.memory_space<vmem>>, %arg19: memref<96x96xf32, #tpu.memory_space<vmem>>, %arg20: memref<1x96xf32, #tpu.memory_space<vmem>>, %arg21: memref<64x64xf32, #tpu.memory_space<vmem>>, %arg22: memref<1x64xf32, #tpu.memory_space<vmem>>, %arg23: memref<1x64xf32, #tpu.memory_space<vmem>>, %arg24: memref<1x64xf32, #tpu.memory_space<vmem>>, %arg25: memref<64x128xf32, #tpu.memory_space<vmem>>, %arg26: memref<1x128xf32, #tpu.memory_space<vmem>>, %arg27: memref<128x64xf32, #tpu.memory_space<vmem>>, %arg28: memref<1x64xf32, #tpu.memory_space<vmem>>, %arg29: memref<1x64xf32, #tpu.memory_space<vmem>>, %arg30: memref<1x64xf32, #tpu.memory_space<vmem>>, %arg31: memref<16x64xf32, #tpu.memory_space<vmem>>) attributes {dimension_semantics = [#tpu.dimension_semantics<parallel>], iteration_bounds = array<i64: 1>, scalar_prefetch = 0 : i64, scratch_operands = 0 : i64, tpu.core_type = #tpu.core_type<tc>, window_params = [{transform_indices = @transform_0, window_bounds = array<i64: 16, 64>}, {transform_indices = @transform_1, window_bounds = array<i64: 16, 96>}, {transform_indices = @transform_2, window_bounds = array<i64: 16, 96>}, {pipeline_mode = #tpu.pipeline_mode<synchronous>, transform_indices = @transform_3, window_bounds = array<i64: 16, 16>}, {pipeline_mode = #tpu.pipeline_mode<synchronous>, transform_indices = @transform_4, window_bounds = array<i64: 64, 64>}, {pipeline_mode = #tpu.pipeline_mode<synchronous>, transform_indices = @transform_5, window_bounds = array<i64: 1, 64>}, {pipeline_mode = #tpu.pipeline_mode<synchronous>, transform_indices = @transform_6, window_bounds = array<i64: 64, 64>}, {pipeline_mode = #tpu.pipeline_mode<synchronous>, transform_indices = @transform_7, window_bounds = array<i64: 1, 64>}, {pipeline_mode = #tpu.pipeline_mode<synchronous>, transform_indices = @transform_8, window_bounds = array<i64: 64, 64>}, {pipeline_mode = #tpu.pipeline_mode<synchronous>, transform_indices = @transform_9, window_bounds = array<i64: 1, 64>}, {pipeline_mode = #tpu.pipeline_mode<synchronous>, transform_indices = @transform_10, window_bounds = array<i64: 64, 64>}, {pipeline_mode = #tpu.pipeline_mode<synchronous>, transform_indices = @transform_11, window_bounds = array<i64: 1, 64>}, {pipeline_mode = #tpu.pipeline_mode<synchronous>, transform_indices = @transform_12, window_bounds = array<i64: 1, 64>}, {pipeline_mode = #tpu.pipeline_mode<synchronous>, transform_indices = @transform_13, window_bounds = array<i64: 1, 64>}, {pipeline_mode = #tpu.pipeline_mode<synchronous>, transform_indices = @transform_14, window_bounds = array<i64: 64, 64>}, {pipeline_mode = #tpu.pipeline_mode<synchronous>, transform_indices = @transform_15, window_bounds = array<i64: 1, 64>}, {pipeline_mode = #tpu.pipeline_mode<synchronous>, transform_indices = @transform_16, window_bounds = array<i64: 96, 96>}, {pipeline_mode = #tpu.pipeline_mode<synchronous>, transform_indices = @transform_17, window_bounds = array<i64: 1, 96>}, {pipeline_mode = #tpu.pipeline_mode<synchronous>, transform_indices = @transform_18, window_bounds = array<i64: 96, 96>}, {pipeline_mode = #tpu.pipeline_mode<synchronous>, transform_indices = @transform_19, window_bounds = array<i64: 1, 96>}, {pipeline_mode = #tpu.pipeline_mode<synchronous>, transform_indices = @transform_20, window_bounds = array<i64: 64, 64>}, {pipeline_mode = #tpu.pipeline_mode<synchronous>, transform_indices = @transform_21, window_bounds = array<i64: 1, 64>}, {pipeline_mode = #tpu.pipeline_mode<synchronous>, transform_indices = @transform_22, window_bounds = array<i64: 1, 64>}, {pipeline_mode = #tpu.pipeline_mode<synchronous>, transform_indices = @transform_23, window_bounds = array<i64: 1, 64>}, {pipeline_mode = #tpu.pipeline_mode<synchronous>, transform_indices = @transform_24, window_bounds = array<i64: 64, 128>}, {pipeline_mode = #tpu.pipeline_mode<synchronous>, transform_indices = @transform_25, window_bounds = array<i64: 1, 128>}, {pipeline_mode = #tpu.pipeline_mode<synchronous>, transform_indices = @transform_26, window_bounds = array<i64: 128, 64>}, {pipeline_mode = #tpu.pipeline_mode<synchronous>, transform_indices = @transform_27, window_bounds = array<i64: 1, 64>}, {pipeline_mode = #tpu.pipeline_mode<synchronous>, transform_indices = @transform_28, window_bounds = array<i64: 1, 64>}, {pipeline_mode = #tpu.pipeline_mode<synchronous>, transform_indices = @transform_29, window_bounds = array<i64: 1, 64>}, {transform_indices = @transform_30, window_bounds = array<i64: 16, 64>}]} {
    %c0 = arith.constant 0 : index
    %c0_0 = arith.constant 0 : index
    %0 = vector.load %arg1[%c0, %c0_0] : memref<16x64xf32, #tpu.memory_space<vmem>>, vector<16x64xf32>
    %c0_1 = arith.constant 0 : index
    %c0_2 = arith.constant 0 : index
    %1 = vector.load %arg2[%c0_1, %c0_2] : memref<16x96xf32, #tpu.memory_space<vmem>>, vector<16x96xf32>
    %c0_3 = arith.constant 0 : index
    %c0_4 = arith.constant 0 : index
    %2 = vector.load %arg3[%c0_3, %c0_4] : memref<16x96xf32, #tpu.memory_space<vmem>>, vector<16x96xf32>
    %c0_5 = arith.constant 0 : index
    %c0_6 = arith.constant 0 : index
    %3 = vector.load %arg4[%c0_5, %c0_6] : memref<16x16xf32, #tpu.memory_space<vmem>>, vector<16x16xf32>
    %c0_7 = arith.constant 0 : index
    %c0_8 = arith.constant 0 : index
    %4 = vector.load %arg5[%c0_7, %c0_8] : memref<64x64xf32, #tpu.memory_space<vmem>>, vector<64x32xf32>
    %cst = arith.constant dense<0.000000e+00> : vector<16x32xf32>
    %5 = tpu.matmul %0, %4, %cst {dimension_numbers = #tpu.dot_dimension_numbers<[1], [0], [0], [1], [0, 0, 1, 1], [], []>} : vector<16x64xf32>, vector<64x32xf32>, vector<16x32xf32> -> vector<16x32xf32>
    %c0_9 = arith.constant 0 : index
    %c0_10 = arith.constant 0 : index
    %6 = vector.load %arg6[%c0_9, %c0_10] : memref<1x64xf32, #tpu.memory_space<vmem>>, vector<1x32xf32>
    %7 = vector.broadcast %6 : vector<1x32xf32> to vector<16x32xf32>
    %8 = arith.addf %5, %7 : vector<16x32xf32>
    %c0_11 = arith.constant 0 : index
    %c32 = arith.constant 32 : index
    %9 = vector.load %arg5[%c0_11, %c32] : memref<64x64xf32, #tpu.memory_space<vmem>>, vector<64x32xf32>
    %cst_12 = arith.constant dense<0.000000e+00> : vector<16x32xf32>
    %10 = tpu.matmul %0, %9, %cst_12 {dimension_numbers = #tpu.dot_dimension_numbers<[1], [0], [0], [1], [0, 0, 1, 1], [], []>} : vector<16x64xf32>, vector<64x32xf32>, vector<16x32xf32> -> vector<16x32xf32>
    %c0_13 = arith.constant 0 : index
    %c32_14 = arith.constant 32 : index
    %11 = vector.load %arg6[%c0_13, %c32_14] : memref<1x64xf32, #tpu.memory_space<vmem>>, vector<1x32xf32>
    %12 = vector.broadcast %11 : vector<1x32xf32> to vector<16x32xf32>
    %13 = arith.addf %10, %12 : vector<16x32xf32>
    %c0_15 = arith.constant 0 : index
    %c0_16 = arith.constant 0 : index
    %14 = vector.load %arg7[%c0_15, %c0_16] : memref<64x64xf32, #tpu.memory_space<vmem>>, vector<64x32xf32>
    %cst_17 = arith.constant dense<0.000000e+00> : vector<16x32xf32>
    %15 = tpu.matmul %0, %14, %cst_17 {dimension_numbers = #tpu.dot_dimension_numbers<[1], [0], [0], [1], [0, 0, 1, 1], [], []>} : vector<16x64xf32>, vector<64x32xf32>, vector<16x32xf32> -> vector<16x32xf32>
    %c0_18 = arith.constant 0 : index
    %c0_19 = arith.constant 0 : index
    %16 = vector.load %arg8[%c0_18, %c0_19] : memref<1x64xf32, #tpu.memory_space<vmem>>, vector<1x32xf32>
    %17 = vector.broadcast %16 : vector<1x32xf32> to vector<16x32xf32>
    %18 = arith.addf %15, %17 : vector<16x32xf32>
    %c0_20 = arith.constant 0 : index
    %c32_21 = arith.constant 32 : index
    %19 = vector.load %arg7[%c0_20, %c32_21] : memref<64x64xf32, #tpu.memory_space<vmem>>, vector<64x32xf32>
    %cst_22 = arith.constant dense<0.000000e+00> : vector<16x32xf32>
    %20 = tpu.matmul %0, %19, %cst_22 {dimension_numbers = #tpu.dot_dimension_numbers<[1], [0], [0], [1], [0, 0, 1, 1], [], []>} : vector<16x64xf32>, vector<64x32xf32>, vector<16x32xf32> -> vector<16x32xf32>
    %c0_23 = arith.constant 0 : index
    %c32_24 = arith.constant 32 : index
    %21 = vector.load %arg8[%c0_23, %c32_24] : memref<1x64xf32, #tpu.memory_space<vmem>>, vector<1x32xf32>
    %22 = vector.broadcast %21 : vector<1x32xf32> to vector<16x32xf32>
    %23 = arith.addf %20, %22 : vector<16x32xf32>
    %c0_25 = arith.constant 0 : index
    %c0_26 = arith.constant 0 : index
    %24 = vector.load %arg9[%c0_25, %c0_26] : memref<64x64xf32, #tpu.memory_space<vmem>>, vector<64x32xf32>
    %cst_27 = arith.constant dense<0.000000e+00> : vector<16x32xf32>
    %25 = tpu.matmul %0, %24, %cst_27 {dimension_numbers = #tpu.dot_dimension_numbers<[1], [0], [0], [1], [0, 0, 1, 1], [], []>} : vector<16x64xf32>, vector<64x32xf32>, vector<16x32xf32> -> vector<16x32xf32>
    %c0_28 = arith.constant 0 : index
    %c0_29 = arith.constant 0 : index
    %26 = vector.load %arg10[%c0_28, %c0_29] : memref<1x64xf32, #tpu.memory_space<vmem>>, vector<1x32xf32>
    %27 = vector.broadcast %26 : vector<1x32xf32> to vector<16x32xf32>
    %28 = arith.addf %25, %27 : vector<16x32xf32>
    %c0_30 = arith.constant 0 : index
    %c32_31 = arith.constant 32 : index
    %29 = vector.load %arg9[%c0_30, %c32_31] : memref<64x64xf32, #tpu.memory_space<vmem>>, vector<64x32xf32>
    %cst_32 = arith.constant dense<0.000000e+00> : vector<16x32xf32>
    %30 = tpu.matmul %0, %29, %cst_32 {dimension_numbers = #tpu.dot_dimension_numbers<[1], [0], [0], [1], [0, 0, 1, 1], [], []>} : vector<16x64xf32>, vector<64x32xf32>, vector<16x32xf32> -> vector<16x32xf32>
    %c0_33 = arith.constant 0 : index
    %c32_34 = arith.constant 32 : index
    %31 = vector.load %arg10[%c0_33, %c32_34] : memref<1x64xf32, #tpu.memory_space<vmem>>, vector<1x32xf32>
    %32 = vector.broadcast %31 : vector<1x32xf32> to vector<16x32xf32>
    %33 = arith.addf %30, %32 : vector<16x32xf32>
    %34 = vector.extract_strided_slice %8 {offsets = [0, 0], sizes = [8, 32], strides = [1, 1]} : vector<16x32xf32> to vector<8x32xf32>
    %35 = vector.extract_strided_slice %13 {offsets = [0, 0], sizes = [8, 32], strides = [1, 1]} : vector<16x32xf32> to vector<8x32xf32>
    %36 = tpu.concatenate %34, %35 in 0 : vector<8x32xf32>, vector<8x32xf32> -> vector<16x32xf32>
    %37 = vector.extract_strided_slice %18 {offsets = [0, 0], sizes = [8, 32], strides = [1, 1]} : vector<16x32xf32> to vector<8x32xf32>
    %38 = vector.extract_strided_slice %23 {offsets = [0, 0], sizes = [8, 32], strides = [1, 1]} : vector<16x32xf32> to vector<8x32xf32>
    %39 = tpu.concatenate %37, %38 in 0 : vector<8x32xf32>, vector<8x32xf32> -> vector<16x32xf32>
    %40 = vector.extract_strided_slice %28 {offsets = [0, 0], sizes = [8, 32], strides = [1, 1]} : vector<16x32xf32> to vector<8x32xf32>
    %41 = vector.extract_strided_slice %33 {offsets = [0, 0], sizes = [8, 32], strides = [1, 1]} : vector<16x32xf32> to vector<8x32xf32>
    %42 = tpu.concatenate %40, %41 in 0 : vector<8x32xf32>, vector<8x32xf32> -> vector<16x32xf32>
    %43 = vector.extract_strided_slice %36 {offsets = [0, 0], sizes = [16, 8], strides = [1, 1]} : vector<16x32xf32> to vector<16x8xf32>
    %44 = vector.extract_strided_slice %39 {offsets = [0, 0], sizes = [16, 8], strides = [1, 1]} : vector<16x32xf32> to vector<16x8xf32>
    %45 = vector.extract_strided_slice %42 {offsets = [0, 0], sizes = [16, 8], strides = [1, 1]} : vector<16x32xf32> to vector<16x8xf32>
    %cst_35 = arith.constant dense<0.000000e+00> : vector<16x16xf32>
    %46 = tpu.matmul %43, %44, %cst_35 {dimension_numbers = #tpu.dot_dimension_numbers<[1], [1], [0], [0], [0, 0, 1, 0], [], []>} : vector<16x8xf32>, vector<16x8xf32>, vector<16x16xf32> -> vector<16x16xf32>
    %47 = arith.addf %46, %3 : vector<16x16xf32>
    %cst_36 = arith.constant dense<0xFF800000> : vector<16xf32>
    %48 = vector.multi_reduction <maximumf>, %47, %cst_36 [1] : vector<16x16xf32> to vector<16xf32>
    %49 = vector.shape_cast %48 : vector<16xf32> to vector<16x1xf32>
    %50 = vector.broadcast %49 : vector<16x1xf32> to vector<16x16xf32>
    %51 = arith.subf %47, %50 : vector<16x16xf32>
    %52 = math.exp %51 : vector<16x16xf32>
    %cst_37 = arith.constant dense<0.000000e+00> : vector<16xf32>
    %53 = vector.multi_reduction <add>, %52, %cst_37 [1] : vector<16x16xf32> to vector<16xf32>
    %54 = vector.shape_cast %53 : vector<16xf32> to vector<16x1xf32>
    %55 = tpu.reciprocal %54 {approx = true} : vector<16x1xf32> -> vector<16x1xf32>
    %56 = vector.broadcast %55 : vector<16x1xf32> to vector<16x16xf32>
    %57 = arith.mulf %52, %56 : vector<16x16xf32>
    %cst_38 = arith.constant dense<0.000000e+00> : vector<16x8xf32>
    %58 = tpu.matmul %57, %45, %cst_38 {dimension_numbers = #tpu.dot_dimension_numbers<[1], [0], [0], [1], [0, 0, 1, 1], [], []>} : vector<16x16xf32>, vector<16x8xf32>, vector<16x8xf32> -> vector<16x8xf32>
    %59 = vector.extract_strided_slice %36 {offsets = [0, 8], sizes = [16, 8], strides = [1, 1]} : vector<16x32xf32> to vector<16x8xf32>
    %60 = vector.extract_strided_slice %39 {offsets = [0, 8], sizes = [16, 8], strides = [1, 1]} : vector<16x32xf32> to vector<16x8xf32>
    %61 = vector.extract_strided_slice %42 {offsets = [0, 8], sizes = [16, 8], strides = [1, 1]} : vector<16x32xf32> to vector<16x8xf32>
    %cst_39 = arith.constant dense<0.000000e+00> : vector<16x16xf32>
    %62 = tpu.matmul %59, %60, %cst_39 {dimension_numbers = #tpu.dot_dimension_numbers<[1], [1], [0], [0], [0, 0, 1, 0], [], []>} : vector<16x8xf32>, vector<16x8xf32>, vector<16x16xf32> -> vector<16x16xf32>
    %63 = arith.addf %62, %3 : vector<16x16xf32>
    %cst_40 = arith.constant dense<0xFF800000> : vector<16xf32>
    %64 = vector.multi_reduction <maximumf>, %63, %cst_40 [1] : vector<16x16xf32> to vector<16xf32>
    %65 = vector.shape_cast %64 : vector<16xf32> to vector<16x1xf32>
    %66 = vector.broadcast %65 : vector<16x1xf32> to vector<16x16xf32>
    %67 = arith.subf %63, %66 : vector<16x16xf32>
    %68 = math.exp %67 : vector<16x16xf32>
    %cst_41 = arith.constant dense<0.000000e+00> : vector<16xf32>
    %69 = vector.multi_reduction <add>, %68, %cst_41 [1] : vector<16x16xf32> to vector<16xf32>
    %70 = vector.shape_cast %69 : vector<16xf32> to vector<16x1xf32>
    %71 = tpu.reciprocal %70 {approx = true} : vector<16x1xf32> -> vector<16x1xf32>
    %72 = vector.broadcast %71 : vector<16x1xf32> to vector<16x16xf32>
    %73 = arith.mulf %68, %72 : vector<16x16xf32>
    %cst_42 = arith.constant dense<0.000000e+00> : vector<16x8xf32>
    %74 = tpu.matmul %73, %61, %cst_42 {dimension_numbers = #tpu.dot_dimension_numbers<[1], [0], [0], [1], [0, 0, 1, 1], [], []>} : vector<16x16xf32>, vector<16x8xf32>, vector<16x8xf32> -> vector<16x8xf32>
    %75 = vector.extract_strided_slice %36 {offsets = [0, 16], sizes = [16, 8], strides = [1, 1]} : vector<16x32xf32> to vector<16x8xf32>
    %76 = vector.extract_strided_slice %39 {offsets = [0, 16], sizes = [16, 8], strides = [1, 1]} : vector<16x32xf32> to vector<16x8xf32>
    %77 = vector.extract_strided_slice %42 {offsets = [0, 16], sizes = [16, 8], strides = [1, 1]} : vector<16x32xf32> to vector<16x8xf32>
    %cst_43 = arith.constant dense<0.000000e+00> : vector<16x16xf32>
    %78 = tpu.matmul %75, %76, %cst_43 {dimension_numbers = #tpu.dot_dimension_numbers<[1], [1], [0], [0], [0, 0, 1, 0], [], []>} : vector<16x8xf32>, vector<16x8xf32>, vector<16x16xf32> -> vector<16x16xf32>
    %79 = arith.addf %78, %3 : vector<16x16xf32>
    %cst_44 = arith.constant dense<0xFF800000> : vector<16xf32>
    %80 = vector.multi_reduction <maximumf>, %79, %cst_44 [1] : vector<16x16xf32> to vector<16xf32>
    %81 = vector.shape_cast %80 : vector<16xf32> to vector<16x1xf32>
    %82 = vector.broadcast %81 : vector<16x1xf32> to vector<16x16xf32>
    %83 = arith.subf %79, %82 : vector<16x16xf32>
    %84 = math.exp %83 : vector<16x16xf32>
    %cst_45 = arith.constant dense<0.000000e+00> : vector<16xf32>
    %85 = vector.multi_reduction <add>, %84, %cst_45 [1] : vector<16x16xf32> to vector<16xf32>
    %86 = vector.shape_cast %85 : vector<16xf32> to vector<16x1xf32>
    %87 = tpu.reciprocal %86 {approx = true} : vector<16x1xf32> -> vector<16x1xf32>
    %88 = vector.broadcast %87 : vector<16x1xf32> to vector<16x16xf32>
    %89 = arith.mulf %84, %88 : vector<16x16xf32>
    %cst_46 = arith.constant dense<0.000000e+00> : vector<16x8xf32>
    %90 = tpu.matmul %89, %77, %cst_46 {dimension_numbers = #tpu.dot_dimension_numbers<[1], [0], [0], [1], [0, 0, 1, 1], [], []>} : vector<16x16xf32>, vector<16x8xf32>, vector<16x8xf32> -> vector<16x8xf32>
    %91 = vector.extract_strided_slice %36 {offsets = [0, 24], sizes = [16, 8], strides = [1, 1]} : vector<16x32xf32> to vector<16x8xf32>
    %92 = vector.extract_strided_slice %39 {offsets = [0, 24], sizes = [16, 8], strides = [1, 1]} : vector<16x32xf32> to vector<16x8xf32>
    %93 = vector.extract_strided_slice %42 {offsets = [0, 24], sizes = [16, 8], strides = [1, 1]} : vector<16x32xf32> to vector<16x8xf32>
    %cst_47 = arith.constant dense<0.000000e+00> : vector<16x16xf32>
    %94 = tpu.matmul %91, %92, %cst_47 {dimension_numbers = #tpu.dot_dimension_numbers<[1], [1], [0], [0], [0, 0, 1, 0], [], []>} : vector<16x8xf32>, vector<16x8xf32>, vector<16x16xf32> -> vector<16x16xf32>
    %95 = arith.addf %94, %3 : vector<16x16xf32>
    %cst_48 = arith.constant dense<0xFF800000> : vector<16xf32>
    %96 = vector.multi_reduction <maximumf>, %95, %cst_48 [1] : vector<16x16xf32> to vector<16xf32>
    %97 = vector.shape_cast %96 : vector<16xf32> to vector<16x1xf32>
    %98 = vector.broadcast %97 : vector<16x1xf32> to vector<16x16xf32>
    %99 = arith.subf %95, %98 : vector<16x16xf32>
    %100 = math.exp %99 : vector<16x16xf32>
    %cst_49 = arith.constant dense<0.000000e+00> : vector<16xf32>
    %101 = vector.multi_reduction <add>, %100, %cst_49 [1] : vector<16x16xf32> to vector<16xf32>
    %102 = vector.shape_cast %101 : vector<16xf32> to vector<16x1xf32>
    %103 = tpu.reciprocal %102 {approx = true} : vector<16x1xf32> -> vector<16x1xf32>
    %104 = vector.broadcast %103 : vector<16x1xf32> to vector<16x16xf32>
    %105 = arith.mulf %100, %104 : vector<16x16xf32>
    %cst_50 = arith.constant dense<0.000000e+00> : vector<16x8xf32>
    %106 = tpu.matmul %105, %93, %cst_50 {dimension_numbers = #tpu.dot_dimension_numbers<[1], [0], [0], [1], [0, 0, 1, 1], [], []>} : vector<16x16xf32>, vector<16x8xf32>, vector<16x8xf32> -> vector<16x8xf32>
    %107 = tpu.concatenate %58, %74, %90, %106 in 1 : vector<16x8xf32>, vector<16x8xf32>, vector<16x8xf32>, vector<16x8xf32> -> vector<16x32xf32>
    %108 = vector.extract_strided_slice %107 {offsets = [0, 0], sizes = [8, 32], strides = [1, 1]} : vector<16x32xf32> to vector<8x32xf32>
    %109 = vector.extract_strided_slice %107 {offsets = [8, 0], sizes = [8, 32], strides = [1, 1]} : vector<16x32xf32> to vector<8x32xf32>
    %110 = tpu.concatenate %108, %109 in 1 : vector<8x32xf32>, vector<8x32xf32> -> vector<8x64xf32>
    %111 = vector.extract_strided_slice %8 {offsets = [8, 0], sizes = [8, 32], strides = [1, 1]} : vector<16x32xf32> to vector<8x32xf32>
    %112 = vector.extract_strided_slice %13 {offsets = [8, 0], sizes = [8, 32], strides = [1, 1]} : vector<16x32xf32> to vector<8x32xf32>
    %113 = tpu.concatenate %111, %112 in 0 : vector<8x32xf32>, vector<8x32xf32> -> vector<16x32xf32>
    %114 = vector.extract_strided_slice %18 {offsets = [8, 0], sizes = [8, 32], strides = [1, 1]} : vector<16x32xf32> to vector<8x32xf32>
    %115 = vector.extract_strided_slice %23 {offsets = [8, 0], sizes = [8, 32], strides = [1, 1]} : vector<16x32xf32> to vector<8x32xf32>
    %116 = tpu.concatenate %114, %115 in 0 : vector<8x32xf32>, vector<8x32xf32> -> vector<16x32xf32>
    %117 = vector.extract_strided_slice %28 {offsets = [8, 0], sizes = [8, 32], strides = [1, 1]} : vector<16x32xf32> to vector<8x32xf32>
    %118 = vector.extract_strided_slice %33 {offsets = [8, 0], sizes = [8, 32], strides = [1, 1]} : vector<16x32xf32> to vector<8x32xf32>
    %119 = tpu.concatenate %117, %118 in 0 : vector<8x32xf32>, vector<8x32xf32> -> vector<16x32xf32>
    %120 = vector.extract_strided_slice %113 {offsets = [0, 0], sizes = [16, 8], strides = [1, 1]} : vector<16x32xf32> to vector<16x8xf32>
    %121 = vector.extract_strided_slice %116 {offsets = [0, 0], sizes = [16, 8], strides = [1, 1]} : vector<16x32xf32> to vector<16x8xf32>
    %122 = vector.extract_strided_slice %119 {offsets = [0, 0], sizes = [16, 8], strides = [1, 1]} : vector<16x32xf32> to vector<16x8xf32>
    %cst_51 = arith.constant dense<0.000000e+00> : vector<16x16xf32>
    %123 = tpu.matmul %120, %121, %cst_51 {dimension_numbers = #tpu.dot_dimension_numbers<[1], [1], [0], [0], [0, 0, 1, 0], [], []>} : vector<16x8xf32>, vector<16x8xf32>, vector<16x16xf32> -> vector<16x16xf32>
    %124 = arith.addf %123, %3 : vector<16x16xf32>
    %cst_52 = arith.constant dense<0xFF800000> : vector<16xf32>
    %125 = vector.multi_reduction <maximumf>, %124, %cst_52 [1] : vector<16x16xf32> to vector<16xf32>
    %126 = vector.shape_cast %125 : vector<16xf32> to vector<16x1xf32>
    %127 = vector.broadcast %126 : vector<16x1xf32> to vector<16x16xf32>
    %128 = arith.subf %124, %127 : vector<16x16xf32>
    %129 = math.exp %128 : vector<16x16xf32>
    %cst_53 = arith.constant dense<0.000000e+00> : vector<16xf32>
    %130 = vector.multi_reduction <add>, %129, %cst_53 [1] : vector<16x16xf32> to vector<16xf32>
    %131 = vector.shape_cast %130 : vector<16xf32> to vector<16x1xf32>
    %132 = tpu.reciprocal %131 {approx = true} : vector<16x1xf32> -> vector<16x1xf32>
    %133 = vector.broadcast %132 : vector<16x1xf32> to vector<16x16xf32>
    %134 = arith.mulf %129, %133 : vector<16x16xf32>
    %cst_54 = arith.constant dense<0.000000e+00> : vector<16x8xf32>
    %135 = tpu.matmul %134, %122, %cst_54 {dimension_numbers = #tpu.dot_dimension_numbers<[1], [0], [0], [1], [0, 0, 1, 1], [], []>} : vector<16x16xf32>, vector<16x8xf32>, vector<16x8xf32> -> vector<16x8xf32>
    %136 = vector.extract_strided_slice %113 {offsets = [0, 8], sizes = [16, 8], strides = [1, 1]} : vector<16x32xf32> to vector<16x8xf32>
    %137 = vector.extract_strided_slice %116 {offsets = [0, 8], sizes = [16, 8], strides = [1, 1]} : vector<16x32xf32> to vector<16x8xf32>
    %138 = vector.extract_strided_slice %119 {offsets = [0, 8], sizes = [16, 8], strides = [1, 1]} : vector<16x32xf32> to vector<16x8xf32>
    %cst_55 = arith.constant dense<0.000000e+00> : vector<16x16xf32>
    %139 = tpu.matmul %136, %137, %cst_55 {dimension_numbers = #tpu.dot_dimension_numbers<[1], [1], [0], [0], [0, 0, 1, 0], [], []>} : vector<16x8xf32>, vector<16x8xf32>, vector<16x16xf32> -> vector<16x16xf32>
    %140 = arith.addf %139, %3 : vector<16x16xf32>
    %cst_56 = arith.constant dense<0xFF800000> : vector<16xf32>
    %141 = vector.multi_reduction <maximumf>, %140, %cst_56 [1] : vector<16x16xf32> to vector<16xf32>
    %142 = vector.shape_cast %141 : vector<16xf32> to vector<16x1xf32>
    %143 = vector.broadcast %142 : vector<16x1xf32> to vector<16x16xf32>
    %144 = arith.subf %140, %143 : vector<16x16xf32>
    %145 = math.exp %144 : vector<16x16xf32>
    %cst_57 = arith.constant dense<0.000000e+00> : vector<16xf32>
    %146 = vector.multi_reduction <add>, %145, %cst_57 [1] : vector<16x16xf32> to vector<16xf32>
    %147 = vector.shape_cast %146 : vector<16xf32> to vector<16x1xf32>
    %148 = tpu.reciprocal %147 {approx = true} : vector<16x1xf32> -> vector<16x1xf32>
    %149 = vector.broadcast %148 : vector<16x1xf32> to vector<16x16xf32>
    %150 = arith.mulf %145, %149 : vector<16x16xf32>
    %cst_58 = arith.constant dense<0.000000e+00> : vector<16x8xf32>
    %151 = tpu.matmul %150, %138, %cst_58 {dimension_numbers = #tpu.dot_dimension_numbers<[1], [0], [0], [1], [0, 0, 1, 1], [], []>} : vector<16x16xf32>, vector<16x8xf32>, vector<16x8xf32> -> vector<16x8xf32>
    %152 = vector.extract_strided_slice %113 {offsets = [0, 16], sizes = [16, 8], strides = [1, 1]} : vector<16x32xf32> to vector<16x8xf32>
    %153 = vector.extract_strided_slice %116 {offsets = [0, 16], sizes = [16, 8], strides = [1, 1]} : vector<16x32xf32> to vector<16x8xf32>
    %154 = vector.extract_strided_slice %119 {offsets = [0, 16], sizes = [16, 8], strides = [1, 1]} : vector<16x32xf32> to vector<16x8xf32>
    %cst_59 = arith.constant dense<0.000000e+00> : vector<16x16xf32>
    %155 = tpu.matmul %152, %153, %cst_59 {dimension_numbers = #tpu.dot_dimension_numbers<[1], [1], [0], [0], [0, 0, 1, 0], [], []>} : vector<16x8xf32>, vector<16x8xf32>, vector<16x16xf32> -> vector<16x16xf32>
    %156 = arith.addf %155, %3 : vector<16x16xf32>
    %cst_60 = arith.constant dense<0xFF800000> : vector<16xf32>
    %157 = vector.multi_reduction <maximumf>, %156, %cst_60 [1] : vector<16x16xf32> to vector<16xf32>
    %158 = vector.shape_cast %157 : vector<16xf32> to vector<16x1xf32>
    %159 = vector.broadcast %158 : vector<16x1xf32> to vector<16x16xf32>
    %160 = arith.subf %156, %159 : vector<16x16xf32>
    %161 = math.exp %160 : vector<16x16xf32>
    %cst_61 = arith.constant dense<0.000000e+00> : vector<16xf32>
    %162 = vector.multi_reduction <add>, %161, %cst_61 [1] : vector<16x16xf32> to vector<16xf32>
    %163 = vector.shape_cast %162 : vector<16xf32> to vector<16x1xf32>
    %164 = tpu.reciprocal %163 {approx = true} : vector<16x1xf32> -> vector<16x1xf32>
    %165 = vector.broadcast %164 : vector<16x1xf32> to vector<16x16xf32>
    %166 = arith.mulf %161, %165 : vector<16x16xf32>
    %cst_62 = arith.constant dense<0.000000e+00> : vector<16x8xf32>
    %167 = tpu.matmul %166, %154, %cst_62 {dimension_numbers = #tpu.dot_dimension_numbers<[1], [0], [0], [1], [0, 0, 1, 1], [], []>} : vector<16x16xf32>, vector<16x8xf32>, vector<16x8xf32> -> vector<16x8xf32>
    %168 = vector.extract_strided_slice %113 {offsets = [0, 24], sizes = [16, 8], strides = [1, 1]} : vector<16x32xf32> to vector<16x8xf32>
    %169 = vector.extract_strided_slice %116 {offsets = [0, 24], sizes = [16, 8], strides = [1, 1]} : vector<16x32xf32> to vector<16x8xf32>
    %170 = vector.extract_strided_slice %119 {offsets = [0, 24], sizes = [16, 8], strides = [1, 1]} : vector<16x32xf32> to vector<16x8xf32>
    %cst_63 = arith.constant dense<0.000000e+00> : vector<16x16xf32>
    %171 = tpu.matmul %168, %169, %cst_63 {dimension_numbers = #tpu.dot_dimension_numbers<[1], [1], [0], [0], [0, 0, 1, 0], [], []>} : vector<16x8xf32>, vector<16x8xf32>, vector<16x16xf32> -> vector<16x16xf32>
    %172 = arith.addf %171, %3 : vector<16x16xf32>
    %cst_64 = arith.constant dense<0xFF800000> : vector<16xf32>
    %173 = vector.multi_reduction <maximumf>, %172, %cst_64 [1] : vector<16x16xf32> to vector<16xf32>
    %174 = vector.shape_cast %173 : vector<16xf32> to vector<16x1xf32>
    %175 = vector.broadcast %174 : vector<16x1xf32> to vector<16x16xf32>
    %176 = arith.subf %172, %175 : vector<16x16xf32>
    %177 = math.exp %176 : vector<16x16xf32>
    %cst_65 = arith.constant dense<0.000000e+00> : vector<16xf32>
    %178 = vector.multi_reduction <add>, %177, %cst_65 [1] : vector<16x16xf32> to vector<16xf32>
    %179 = vector.shape_cast %178 : vector<16xf32> to vector<16x1xf32>
    %180 = tpu.reciprocal %179 {approx = true} : vector<16x1xf32> -> vector<16x1xf32>
    %181 = vector.broadcast %180 : vector<16x1xf32> to vector<16x16xf32>
    %182 = arith.mulf %177, %181 : vector<16x16xf32>
    %cst_66 = arith.constant dense<0.000000e+00> : vector<16x8xf32>
    %183 = tpu.matmul %182, %170, %cst_66 {dimension_numbers = #tpu.dot_dimension_numbers<[1], [0], [0], [1], [0, 0, 1, 1], [], []>} : vector<16x16xf32>, vector<16x8xf32>, vector<16x8xf32> -> vector<16x8xf32>
    %184 = tpu.concatenate %135, %151, %167, %183 in 1 : vector<16x8xf32>, vector<16x8xf32>, vector<16x8xf32>, vector<16x8xf32> -> vector<16x32xf32>
    %185 = vector.extract_strided_slice %184 {offsets = [0, 0], sizes = [8, 32], strides = [1, 1]} : vector<16x32xf32> to vector<8x32xf32>
    %186 = vector.extract_strided_slice %184 {offsets = [8, 0], sizes = [8, 32], strides = [1, 1]} : vector<16x32xf32> to vector<8x32xf32>
    %187 = tpu.concatenate %185, %186 in 1 : vector<8x32xf32>, vector<8x32xf32> -> vector<8x64xf32>
    %188 = tpu.concatenate %110, %187 in 0 : vector<8x64xf32>, vector<8x64xf32> -> vector<16x64xf32>
    %c0_67 = arith.constant 0 : index
    %c0_68 = arith.constant 0 : index
    %189 = vector.load %arg11[%c0_67, %c0_68] : memref<64x64xf32, #tpu.memory_space<vmem>>, vector<64x64xf32>
    %cst_69 = arith.constant dense<0.000000e+00> : vector<16x64xf32>
    %190 = tpu.matmul %188, %189, %cst_69 {dimension_numbers = #tpu.dot_dimension_numbers<[1], [0], [0], [1], [0, 0, 1, 1], [], []>} : vector<16x64xf32>, vector<64x64xf32>, vector<16x64xf32> -> vector<16x64xf32>
    %c0_70 = arith.constant 0 : index
    %c0_71 = arith.constant 0 : index
    %191 = vector.load %arg12[%c0_70, %c0_71] : memref<1x64xf32, #tpu.memory_space<vmem>>, vector<1x64xf32>
    %192 = vector.broadcast %191 : vector<1x64xf32> to vector<16x64xf32>
    %193 = arith.addf %190, %192 : vector<16x64xf32>
    %194 = arith.addf %193, %0 : vector<16x64xf32>
    %195 = vector.extract_strided_slice %194 {offsets = [0, 0], sizes = [16, 32], strides = [1, 1]} : vector<16x64xf32> to vector<16x32xf32>
    %cst_72 = arith.constant dense<0.000000e+00> : vector<16xf32>
    %196 = vector.multi_reduction <add>, %195, %cst_72 [1] : vector<16x32xf32> to vector<16xf32>
    %197 = vector.shape_cast %196 : vector<16xf32> to vector<16x1xf32>
    %cst_73 = arith.constant 3.200000e+01 : f32
    %198 = vector.broadcast %cst_73 : f32 to vector<16x1xf32>
    %199 = arith.divf %197, %198 : vector<16x1xf32>
    %200 = vector.broadcast %199 : vector<16x1xf32> to vector<16x32xf32>
    %201 = arith.subf %195, %200 : vector<16x32xf32>
    %202 = arith.mulf %201, %201 : vector<16x32xf32>
    %cst_74 = arith.constant dense<0.000000e+00> : vector<16xf32>
    %203 = vector.multi_reduction <add>, %202, %cst_74 [1] : vector<16x32xf32> to vector<16xf32>
    %204 = vector.shape_cast %203 : vector<16xf32> to vector<16x1xf32>
    %cst_75 = arith.constant 3.200000e+01 : f32
    %205 = vector.broadcast %cst_75 : f32 to vector<16x1xf32>
    %206 = arith.divf %204, %205 : vector<16x1xf32>
    %cst_76 = arith.constant 9.99999974E-6 : f32
    %207 = vector.broadcast %cst_76 : f32 to vector<16x1xf32>
    %208 = arith.addf %206, %207 : vector<16x1xf32>
    %209 = math.rsqrt %208 : vector<16x1xf32>
    %210 = vector.broadcast %209 : vector<16x1xf32> to vector<16x32xf32>
    %211 = arith.mulf %201, %210 : vector<16x32xf32>
    %212 = vector.extract_strided_slice %194 {offsets = [0, 32], sizes = [16, 32], strides = [1, 1]} : vector<16x64xf32> to vector<16x32xf32>
    %cst_77 = arith.constant dense<0.000000e+00> : vector<16xf32>
    %213 = vector.multi_reduction <add>, %212, %cst_77 [1] : vector<16x32xf32> to vector<16xf32>
    %214 = vector.shape_cast %213 : vector<16xf32> to vector<16x1xf32>
    %cst_78 = arith.constant 3.200000e+01 : f32
    %215 = vector.broadcast %cst_78 : f32 to vector<16x1xf32>
    %216 = arith.divf %214, %215 : vector<16x1xf32>
    %217 = vector.broadcast %216 : vector<16x1xf32> to vector<16x32xf32>
    %218 = arith.subf %212, %217 : vector<16x32xf32>
    %219 = arith.mulf %218, %218 : vector<16x32xf32>
    %cst_79 = arith.constant dense<0.000000e+00> : vector<16xf32>
    %220 = vector.multi_reduction <add>, %219, %cst_79 [1] : vector<16x32xf32> to vector<16xf32>
    %221 = vector.shape_cast %220 : vector<16xf32> to vector<16x1xf32>
    %cst_80 = arith.constant 3.200000e+01 : f32
    %222 = vector.broadcast %cst_80 : f32 to vector<16x1xf32>
    %223 = arith.divf %221, %222 : vector<16x1xf32>
    %cst_81 = arith.constant 9.99999974E-6 : f32
    %224 = vector.broadcast %cst_81 : f32 to vector<16x1xf32>
    %225 = arith.addf %223, %224 : vector<16x1xf32>
    %226 = math.rsqrt %225 : vector<16x1xf32>
    %227 = vector.broadcast %226 : vector<16x1xf32> to vector<16x32xf32>
    %228 = arith.mulf %218, %227 : vector<16x32xf32>
    %229 = tpu.concatenate %211, %228 in 1 : vector<16x32xf32>, vector<16x32xf32> -> vector<16x64xf32>
    %c0_82 = arith.constant 0 : index
    %c0_83 = arith.constant 0 : index
    %230 = vector.load %arg13[%c0_82, %c0_83] : memref<1x64xf32, #tpu.memory_space<vmem>>, vector<1x64xf32>
    %231 = vector.broadcast %230 : vector<1x64xf32> to vector<16x64xf32>
    %232 = arith.mulf %229, %231 : vector<16x64xf32>
    %c0_84 = arith.constant 0 : index
    %c0_85 = arith.constant 0 : index
    %233 = vector.load %arg14[%c0_84, %c0_85] : memref<1x64xf32, #tpu.memory_space<vmem>>, vector<1x64xf32>
    %234 = vector.broadcast %233 : vector<1x64xf32> to vector<16x64xf32>
    %235 = arith.addf %232, %234 : vector<16x64xf32>
    %236 = tpu.iota {dimensions = array<i32: 1>} : vector<16x24xi32>
    %c8_i32 = arith.constant 8 : i32
    %c0_i32 = arith.constant 0 : i32
    %237 = arith.cmpi eq, %c8_i32, %c0_i32 : i32
    %c1_i32 = arith.constant 1 : i32
    %238 = arith.select %237, %c1_i32, %c8_i32 : i32
    %239 = vector.broadcast %238 : i32 to vector<16x24xi32>
    %240 = arith.remsi %236, %239 : vector<16x24xi32>
    %c0_i32_86 = arith.constant 0 : i32
    %241 = vector.broadcast %c0_i32_86 : i32 to vector<16x24xi32>
    %242 = arith.cmpi ne, %240, %241 : vector<16x24xi32>
    %c0_i32_87 = arith.constant 0 : i32
    %243 = vector.broadcast %c0_i32_87 : i32 to vector<16x24xi32>
    %244 = arith.cmpi slt, %240, %243 : vector<16x24xi32>
    %c0_i32_88 = arith.constant 0 : i32
    %245 = arith.cmpi slt, %238, %c0_i32_88 : i32
    %246 = vector.broadcast %245 : i1 to vector<16x24xi1>
    %247 = vector.broadcast %246 : vector<16x24xi1> to vector<16x24xi1>
    %248 = arith.xori %244, %247 : vector<16x24xi1>
    %249 = arith.andi %248, %242 : vector<16x24xi1>
    %250 = vector.broadcast %238 : i32 to vector<16x24xi32>
    %251 = arith.addi %240, %250 : vector<16x24xi32>
    %252 = arith.select %249, %251, %240 : vector<16x24xi1>, vector<16x24xi32>
    %c6_i32 = arith.constant 6 : i32
    %253 = vector.broadcast %c6_i32 : i32 to vector<16x24xi32>
    %254 = arith.cmpi slt, %252, %253 : vector<16x24xi32>
    %cst_89 = arith.constant 0.000000e+00 : f32
    %cst_90 = arith.constant -1.000000e+20 : f32
    %255 = vector.broadcast %cst_89 : f32 to vector<16x24xf32>
    %256 = vector.broadcast %cst_90 : f32 to vector<16x24xf32>
    %257 = arith.select %254, %255, %256 : vector<16x24xi1>, vector<16x24xf32>
    %c0_91 = arith.constant 0 : index
    %c0_92 = arith.constant 0 : index
    %258 = vector.load %arg15[%c0_91, %c0_92] : memref<64x64xf32, #tpu.memory_space<vmem>>, vector<64x32xf32>
    %cst_93 = arith.constant dense<0.000000e+00> : vector<16x32xf32>
    %259 = tpu.matmul %235, %258, %cst_93 {dimension_numbers = #tpu.dot_dimension_numbers<[1], [0], [0], [1], [0, 0, 1, 1], [], []>} : vector<16x64xf32>, vector<64x32xf32>, vector<16x32xf32> -> vector<16x32xf32>
    %c0_94 = arith.constant 0 : index
    %c0_95 = arith.constant 0 : index
    %260 = vector.load %arg16[%c0_94, %c0_95] : memref<1x64xf32, #tpu.memory_space<vmem>>, vector<1x32xf32>
    %261 = vector.broadcast %260 : vector<1x32xf32> to vector<16x32xf32>
    %262 = arith.addf %259, %261 : vector<16x32xf32>
    %c0_96 = arith.constant 0 : index
    %c32_97 = arith.constant 32 : index
    %263 = vector.load %arg15[%c0_96, %c32_97] : memref<64x64xf32, #tpu.memory_space<vmem>>, vector<64x32xf32>
    %cst_98 = arith.constant dense<0.000000e+00> : vector<16x32xf32>
    %264 = tpu.matmul %235, %263, %cst_98 {dimension_numbers = #tpu.dot_dimension_numbers<[1], [0], [0], [1], [0, 0, 1, 1], [], []>} : vector<16x64xf32>, vector<64x32xf32>, vector<16x32xf32> -> vector<16x32xf32>
    %c0_99 = arith.constant 0 : index
    %c32_100 = arith.constant 32 : index
    %265 = vector.load %arg16[%c0_99, %c32_100] : memref<1x64xf32, #tpu.memory_space<vmem>>, vector<1x32xf32>
    %266 = vector.broadcast %265 : vector<1x32xf32> to vector<16x32xf32>
    %267 = arith.addf %264, %266 : vector<16x32xf32>
    %c0_101 = arith.constant 0 : index
    %c0_102 = arith.constant 0 : index
    %268 = vector.load %arg17[%c0_101, %c0_102] : memref<96x96xf32, #tpu.memory_space<vmem>>, vector<96x32xf32>
    %cst_103 = arith.constant dense<0.000000e+00> : vector<16x32xf32>
    %269 = tpu.matmul %1, %268, %cst_103 {dimension_numbers = #tpu.dot_dimension_numbers<[1], [0], [0], [1], [0, 0, 1, 1], [], []>} : vector<16x96xf32>, vector<96x32xf32>, vector<16x32xf32> -> vector<16x32xf32>
    %c0_104 = arith.constant 0 : index
    %c0_105 = arith.constant 0 : index
    %270 = vector.load %arg18[%c0_104, %c0_105] : memref<1x96xf32, #tpu.memory_space<vmem>>, vector<1x32xf32>
    %271 = vector.broadcast %270 : vector<1x32xf32> to vector<16x32xf32>
    %272 = arith.addf %269, %271 : vector<16x32xf32>
    %c0_106 = arith.constant 0 : index
    %c32_107 = arith.constant 32 : index
    %273 = vector.load %arg17[%c0_106, %c32_107] : memref<96x96xf32, #tpu.memory_space<vmem>>, vector<96x32xf32>
    %cst_108 = arith.constant dense<0.000000e+00> : vector<16x32xf32>
    %274 = tpu.matmul %1, %273, %cst_108 {dimension_numbers = #tpu.dot_dimension_numbers<[1], [0], [0], [1], [0, 0, 1, 1], [], []>} : vector<16x96xf32>, vector<96x32xf32>, vector<16x32xf32> -> vector<16x32xf32>
    %c0_109 = arith.constant 0 : index
    %c32_110 = arith.constant 32 : index
    %275 = vector.load %arg18[%c0_109, %c32_110] : memref<1x96xf32, #tpu.memory_space<vmem>>, vector<1x32xf32>
    %276 = vector.broadcast %275 : vector<1x32xf32> to vector<16x32xf32>
    %277 = arith.addf %274, %276 : vector<16x32xf32>
    %c0_111 = arith.constant 0 : index
    %c64 = arith.constant 64 : index
    %278 = vector.load %arg17[%c0_111, %c64] : memref<96x96xf32, #tpu.memory_space<vmem>>, vector<96x32xf32>
    %cst_112 = arith.constant dense<0.000000e+00> : vector<16x32xf32>
    %279 = tpu.matmul %1, %278, %cst_112 {dimension_numbers = #tpu.dot_dimension_numbers<[1], [0], [0], [1], [0, 0, 1, 1], [], []>} : vector<16x96xf32>, vector<96x32xf32>, vector<16x32xf32> -> vector<16x32xf32>
    %c0_113 = arith.constant 0 : index
    %c64_114 = arith.constant 64 : index
    %280 = vector.load %arg18[%c0_113, %c64_114] : memref<1x96xf32, #tpu.memory_space<vmem>>, vector<1x32xf32>
    %281 = vector.broadcast %280 : vector<1x32xf32> to vector<16x32xf32>
    %282 = arith.addf %279, %281 : vector<16x32xf32>
    %c0_115 = arith.constant 0 : index
    %c0_116 = arith.constant 0 : index
    %283 = vector.load %arg19[%c0_115, %c0_116] : memref<96x96xf32, #tpu.memory_space<vmem>>, vector<96x32xf32>
    %cst_117 = arith.constant dense<0.000000e+00> : vector<16x32xf32>
    %284 = tpu.matmul %2, %283, %cst_117 {dimension_numbers = #tpu.dot_dimension_numbers<[1], [0], [0], [1], [0, 0, 1, 1], [], []>} : vector<16x96xf32>, vector<96x32xf32>, vector<16x32xf32> -> vector<16x32xf32>
    %c0_118 = arith.constant 0 : index
    %c0_119 = arith.constant 0 : index
    %285 = vector.load %arg20[%c0_118, %c0_119] : memref<1x96xf32, #tpu.memory_space<vmem>>, vector<1x32xf32>
    %286 = vector.broadcast %285 : vector<1x32xf32> to vector<16x32xf32>
    %287 = arith.addf %284, %286 : vector<16x32xf32>
    %c0_120 = arith.constant 0 : index
    %c32_121 = arith.constant 32 : index
    %288 = vector.load %arg19[%c0_120, %c32_121] : memref<96x96xf32, #tpu.memory_space<vmem>>, vector<96x32xf32>
    %cst_122 = arith.constant dense<0.000000e+00> : vector<16x32xf32>
    %289 = tpu.matmul %2, %288, %cst_122 {dimension_numbers = #tpu.dot_dimension_numbers<[1], [0], [0], [1], [0, 0, 1, 1], [], []>} : vector<16x96xf32>, vector<96x32xf32>, vector<16x32xf32> -> vector<16x32xf32>
    %c0_123 = arith.constant 0 : index
    %c32_124 = arith.constant 32 : index
    %290 = vector.load %arg20[%c0_123, %c32_124] : memref<1x96xf32, #tpu.memory_space<vmem>>, vector<1x32xf32>
    %291 = vector.broadcast %290 : vector<1x32xf32> to vector<16x32xf32>
    %292 = arith.addf %289, %291 : vector<16x32xf32>
    %c0_125 = arith.constant 0 : index
    %c64_126 = arith.constant 64 : index
    %293 = vector.load %arg19[%c0_125, %c64_126] : memref<96x96xf32, #tpu.memory_space<vmem>>, vector<96x32xf32>
    %cst_127 = arith.constant dense<0.000000e+00> : vector<16x32xf32>
    %294 = tpu.matmul %2, %293, %cst_127 {dimension_numbers = #tpu.dot_dimension_numbers<[1], [0], [0], [1], [0, 0, 1, 1], [], []>} : vector<16x96xf32>, vector<96x32xf32>, vector<16x32xf32> -> vector<16x32xf32>
    %c0_128 = arith.constant 0 : index
    %c64_129 = arith.constant 64 : index
    %295 = vector.load %arg20[%c0_128, %c64_129] : memref<1x96xf32, #tpu.memory_space<vmem>>, vector<1x32xf32>
    %296 = vector.broadcast %295 : vector<1x32xf32> to vector<16x32xf32>
    %297 = arith.addf %294, %296 : vector<16x32xf32>
    %298 = vector.extract_strided_slice %262 {offsets = [0, 0], sizes = [8, 32], strides = [1, 1]} : vector<16x32xf32> to vector<8x32xf32>
    %299 = vector.extract_strided_slice %267 {offsets = [0, 0], sizes = [8, 32], strides = [1, 1]} : vector<16x32xf32> to vector<8x32xf32>
    %300 = tpu.concatenate %298, %299 in 0 : vector<8x32xf32>, vector<8x32xf32> -> vector<16x32xf32>
    %301 = vector.extract_strided_slice %272 {offsets = [0, 0], sizes = [8, 32], strides = [1, 1]} : vector<16x32xf32> to vector<8x32xf32>
    %302 = vector.extract_strided_slice %277 {offsets = [0, 0], sizes = [8, 32], strides = [1, 1]} : vector<16x32xf32> to vector<8x32xf32>
    %303 = vector.extract_strided_slice %282 {offsets = [0, 0], sizes = [8, 32], strides = [1, 1]} : vector<16x32xf32> to vector<8x32xf32>
    %304 = tpu.concatenate %301, %302, %303 in 0 : vector<8x32xf32>, vector<8x32xf32>, vector<8x32xf32> -> vector<24x32xf32>
    %305 = vector.extract_strided_slice %287 {offsets = [0, 0], sizes = [8, 32], strides = [1, 1]} : vector<16x32xf32> to vector<8x32xf32>
    %306 = vector.extract_strided_slice %292 {offsets = [0, 0], sizes = [8, 32], strides = [1, 1]} : vector<16x32xf32> to vector<8x32xf32>
    %307 = vector.extract_strided_slice %297 {offsets = [0, 0], sizes = [8, 32], strides = [1, 1]} : vector<16x32xf32> to vector<8x32xf32>
    %308 = tpu.concatenate %305, %306, %307 in 0 : vector<8x32xf32>, vector<8x32xf32>, vector<8x32xf32> -> vector<24x32xf32>
    %309 = vector.extract_strided_slice %300 {offsets = [0, 0], sizes = [16, 8], strides = [1, 1]} : vector<16x32xf32> to vector<16x8xf32>
    %310 = vector.extract_strided_slice %304 {offsets = [0, 0], sizes = [24, 8], strides = [1, 1]} : vector<24x32xf32> to vector<24x8xf32>
    %311 = vector.extract_strided_slice %308 {offsets = [0, 0], sizes = [24, 8], strides = [1, 1]} : vector<24x32xf32> to vector<24x8xf32>
    %cst_130 = arith.constant dense<0.000000e+00> : vector<16x24xf32>
    %312 = tpu.matmul %309, %310, %cst_130 {dimension_numbers = #tpu.dot_dimension_numbers<[1], [1], [0], [0], [0, 0, 1, 0], [], []>} : vector<16x8xf32>, vector<24x8xf32>, vector<16x24xf32> -> vector<16x24xf32>
    %313 = arith.addf %312, %257 : vector<16x24xf32>
    %cst_131 = arith.constant dense<0xFF800000> : vector<16xf32>
    %314 = vector.multi_reduction <maximumf>, %313, %cst_131 [1] : vector<16x24xf32> to vector<16xf32>
    %315 = vector.shape_cast %314 : vector<16xf32> to vector<16x1xf32>
    %316 = vector.broadcast %315 : vector<16x1xf32> to vector<16x24xf32>
    %317 = arith.subf %313, %316 : vector<16x24xf32>
    %318 = math.exp %317 : vector<16x24xf32>
    %cst_132 = arith.constant dense<0.000000e+00> : vector<16xf32>
    %319 = vector.multi_reduction <add>, %318, %cst_132 [1] : vector<16x24xf32> to vector<16xf32>
    %320 = vector.shape_cast %319 : vector<16xf32> to vector<16x1xf32>
    %321 = tpu.reciprocal %320 {approx = true} : vector<16x1xf32> -> vector<16x1xf32>
    %322 = vector.broadcast %321 : vector<16x1xf32> to vector<16x24xf32>
    %323 = arith.mulf %318, %322 : vector<16x24xf32>
    %cst_133 = arith.constant dense<0.000000e+00> : vector<16x8xf32>
    %324 = tpu.matmul %323, %311, %cst_133 {dimension_numbers = #tpu.dot_dimension_numbers<[1], [0], [0], [1], [0, 0, 1, 1], [], []>} : vector<16x24xf32>, vector<24x8xf32>, vector<16x8xf32> -> vector<16x8xf32>
    %325 = vector.extract_strided_slice %300 {offsets = [0, 8], sizes = [16, 8], strides = [1, 1]} : vector<16x32xf32> to vector<16x8xf32>
    %326 = vector.extract_strided_slice %304 {offsets = [0, 8], sizes = [24, 8], strides = [1, 1]} : vector<24x32xf32> to vector<24x8xf32>
    %327 = vector.extract_strided_slice %308 {offsets = [0, 8], sizes = [24, 8], strides = [1, 1]} : vector<24x32xf32> to vector<24x8xf32>
    %cst_134 = arith.constant dense<0.000000e+00> : vector<16x24xf32>
    %328 = tpu.matmul %325, %326, %cst_134 {dimension_numbers = #tpu.dot_dimension_numbers<[1], [1], [0], [0], [0, 0, 1, 0], [], []>} : vector<16x8xf32>, vector<24x8xf32>, vector<16x24xf32> -> vector<16x24xf32>
    %329 = arith.addf %328, %257 : vector<16x24xf32>
    %cst_135 = arith.constant dense<0xFF800000> : vector<16xf32>
    %330 = vector.multi_reduction <maximumf>, %329, %cst_135 [1] : vector<16x24xf32> to vector<16xf32>
    %331 = vector.shape_cast %330 : vector<16xf32> to vector<16x1xf32>
    %332 = vector.broadcast %331 : vector<16x1xf32> to vector<16x24xf32>
    %333 = arith.subf %329, %332 : vector<16x24xf32>
    %334 = math.exp %333 : vector<16x24xf32>
    %cst_136 = arith.constant dense<0.000000e+00> : vector<16xf32>
    %335 = vector.multi_reduction <add>, %334, %cst_136 [1] : vector<16x24xf32> to vector<16xf32>
    %336 = vector.shape_cast %335 : vector<16xf32> to vector<16x1xf32>
    %337 = tpu.reciprocal %336 {approx = true} : vector<16x1xf32> -> vector<16x1xf32>
    %338 = vector.broadcast %337 : vector<16x1xf32> to vector<16x24xf32>
    %339 = arith.mulf %334, %338 : vector<16x24xf32>
    %cst_137 = arith.constant dense<0.000000e+00> : vector<16x8xf32>
    %340 = tpu.matmul %339, %327, %cst_137 {dimension_numbers = #tpu.dot_dimension_numbers<[1], [0], [0], [1], [0, 0, 1, 1], [], []>} : vector<16x24xf32>, vector<24x8xf32>, vector<16x8xf32> -> vector<16x8xf32>
    %341 = vector.extract_strided_slice %300 {offsets = [0, 16], sizes = [16, 8], strides = [1, 1]} : vector<16x32xf32> to vector<16x8xf32>
    %342 = vector.extract_strided_slice %304 {offsets = [0, 16], sizes = [24, 8], strides = [1, 1]} : vector<24x32xf32> to vector<24x8xf32>
    %343 = vector.extract_strided_slice %308 {offsets = [0, 16], sizes = [24, 8], strides = [1, 1]} : vector<24x32xf32> to vector<24x8xf32>
    %cst_138 = arith.constant dense<0.000000e+00> : vector<16x24xf32>
    %344 = tpu.matmul %341, %342, %cst_138 {dimension_numbers = #tpu.dot_dimension_numbers<[1], [1], [0], [0], [0, 0, 1, 0], [], []>} : vector<16x8xf32>, vector<24x8xf32>, vector<16x24xf32> -> vector<16x24xf32>
    %345 = arith.addf %344, %257 : vector<16x24xf32>
    %cst_139 = arith.constant dense<0xFF800000> : vector<16xf32>
    %346 = vector.multi_reduction <maximumf>, %345, %cst_139 [1] : vector<16x24xf32> to vector<16xf32>
    %347 = vector.shape_cast %346 : vector<16xf32> to vector<16x1xf32>
    %348 = vector.broadcast %347 : vector<16x1xf32> to vector<16x24xf32>
    %349 = arith.subf %345, %348 : vector<16x24xf32>
    %350 = math.exp %349 : vector<16x24xf32>
    %cst_140 = arith.constant dense<0.000000e+00> : vector<16xf32>
    %351 = vector.multi_reduction <add>, %350, %cst_140 [1] : vector<16x24xf32> to vector<16xf32>
    %352 = vector.shape_cast %351 : vector<16xf32> to vector<16x1xf32>
    %353 = tpu.reciprocal %352 {approx = true} : vector<16x1xf32> -> vector<16x1xf32>
    %354 = vector.broadcast %353 : vector<16x1xf32> to vector<16x24xf32>
    %355 = arith.mulf %350, %354 : vector<16x24xf32>
    %cst_141 = arith.constant dense<0.000000e+00> : vector<16x8xf32>
    %356 = tpu.matmul %355, %343, %cst_141 {dimension_numbers = #tpu.dot_dimension_numbers<[1], [0], [0], [1], [0, 0, 1, 1], [], []>} : vector<16x24xf32>, vector<24x8xf32>, vector<16x8xf32> -> vector<16x8xf32>
    %357 = vector.extract_strided_slice %300 {offsets = [0, 24], sizes = [16, 8], strides = [1, 1]} : vector<16x32xf32> to vector<16x8xf32>
    %358 = vector.extract_strided_slice %304 {offsets = [0, 24], sizes = [24, 8], strides = [1, 1]} : vector<24x32xf32> to vector<24x8xf32>
    %359 = vector.extract_strided_slice %308 {offsets = [0, 24], sizes = [24, 8], strides = [1, 1]} : vector<24x32xf32> to vector<24x8xf32>
    %cst_142 = arith.constant dense<0.000000e+00> : vector<16x24xf32>
    %360 = tpu.matmul %357, %358, %cst_142 {dimension_numbers = #tpu.dot_dimension_numbers<[1], [1], [0], [0], [0, 0, 1, 0], [], []>} : vector<16x8xf32>, vector<24x8xf32>, vector<16x24xf32> -> vector<16x24xf32>
    %361 = arith.addf %360, %257 : vector<16x24xf32>
    %cst_143 = arith.constant dense<0xFF800000> : vector<16xf32>
    %362 = vector.multi_reduction <maximumf>, %361, %cst_143 [1] : vector<16x24xf32> to vector<16xf32>
    %363 = vector.shape_cast %362 : vector<16xf32> to vector<16x1xf32>
    %364 = vector.broadcast %363 : vector<16x1xf32> to vector<16x24xf32>
    %365 = arith.subf %361, %364 : vector<16x24xf32>
    %366 = math.exp %365 : vector<16x24xf32>
    %cst_144 = arith.constant dense<0.000000e+00> : vector<16xf32>
    %367 = vector.multi_reduction <add>, %366, %cst_144 [1] : vector<16x24xf32> to vector<16xf32>
    %368 = vector.shape_cast %367 : vector<16xf32> to vector<16x1xf32>
    %369 = tpu.reciprocal %368 {approx = true} : vector<16x1xf32> -> vector<16x1xf32>
    %370 = vector.broadcast %369 : vector<16x1xf32> to vector<16x24xf32>
    %371 = arith.mulf %366, %370 : vector<16x24xf32>
    %cst_145 = arith.constant dense<0.000000e+00> : vector<16x8xf32>
    %372 = tpu.matmul %371, %359, %cst_145 {dimension_numbers = #tpu.dot_dimension_numbers<[1], [0], [0], [1], [0, 0, 1, 1], [], []>} : vector<16x24xf32>, vector<24x8xf32>, vector<16x8xf32> -> vector<16x8xf32>
    %373 = tpu.concatenate %324, %340, %356, %372 in 1 : vector<16x8xf32>, vector<16x8xf32>, vector<16x8xf32>, vector<16x8xf32> -> vector<16x32xf32>
    %374 = vector.extract_strided_slice %373 {offsets = [0, 0], sizes = [8, 32], strides = [1, 1]} : vector<16x32xf32> to vector<8x32xf32>
    %375 = vector.extract_strided_slice %373 {offsets = [8, 0], sizes = [8, 32], strides = [1, 1]} : vector<16x32xf32> to vector<8x32xf32>
    %376 = tpu.concatenate %374, %375 in 1 : vector<8x32xf32>, vector<8x32xf32> -> vector<8x64xf32>
    %377 = vector.extract_strided_slice %262 {offsets = [8, 0], sizes = [8, 32], strides = [1, 1]} : vector<16x32xf32> to vector<8x32xf32>
    %378 = vector.extract_strided_slice %267 {offsets = [8, 0], sizes = [8, 32], strides = [1, 1]} : vector<16x32xf32> to vector<8x32xf32>
    %379 = tpu.concatenate %377, %378 in 0 : vector<8x32xf32>, vector<8x32xf32> -> vector<16x32xf32>
    %380 = vector.extract_strided_slice %272 {offsets = [8, 0], sizes = [8, 32], strides = [1, 1]} : vector<16x32xf32> to vector<8x32xf32>
    %381 = vector.extract_strided_slice %277 {offsets = [8, 0], sizes = [8, 32], strides = [1, 1]} : vector<16x32xf32> to vector<8x32xf32>
    %382 = vector.extract_strided_slice %282 {offsets = [8, 0], sizes = [8, 32], strides = [1, 1]} : vector<16x32xf32> to vector<8x32xf32>
    %383 = tpu.concatenate %380, %381, %382 in 0 : vector<8x32xf32>, vector<8x32xf32>, vector<8x32xf32> -> vector<24x32xf32>
    %384 = vector.extract_strided_slice %287 {offsets = [8, 0], sizes = [8, 32], strides = [1, 1]} : vector<16x32xf32> to vector<8x32xf32>
    %385 = vector.extract_strided_slice %292 {offsets = [8, 0], sizes = [8, 32], strides = [1, 1]} : vector<16x32xf32> to vector<8x32xf32>
    %386 = vector.extract_strided_slice %297 {offsets = [8, 0], sizes = [8, 32], strides = [1, 1]} : vector<16x32xf32> to vector<8x32xf32>
    %387 = tpu.concatenate %384, %385, %386 in 0 : vector<8x32xf32>, vector<8x32xf32>, vector<8x32xf32> -> vector<24x32xf32>
    %388 = vector.extract_strided_slice %379 {offsets = [0, 0], sizes = [16, 8], strides = [1, 1]} : vector<16x32xf32> to vector<16x8xf32>
    %389 = vector.extract_strided_slice %383 {offsets = [0, 0], sizes = [24, 8], strides = [1, 1]} : vector<24x32xf32> to vector<24x8xf32>
    %390 = vector.extract_strided_slice %387 {offsets = [0, 0], sizes = [24, 8], strides = [1, 1]} : vector<24x32xf32> to vector<24x8xf32>
    %cst_146 = arith.constant dense<0.000000e+00> : vector<16x24xf32>
    %391 = tpu.matmul %388, %389, %cst_146 {dimension_numbers = #tpu.dot_dimension_numbers<[1], [1], [0], [0], [0, 0, 1, 0], [], []>} : vector<16x8xf32>, vector<24x8xf32>, vector<16x24xf32> -> vector<16x24xf32>
    %392 = arith.addf %391, %257 : vector<16x24xf32>
    %cst_147 = arith.constant dense<0xFF800000> : vector<16xf32>
    %393 = vector.multi_reduction <maximumf>, %392, %cst_147 [1] : vector<16x24xf32> to vector<16xf32>
    %394 = vector.shape_cast %393 : vector<16xf32> to vector<16x1xf32>
    %395 = vector.broadcast %394 : vector<16x1xf32> to vector<16x24xf32>
    %396 = arith.subf %392, %395 : vector<16x24xf32>
    %397 = math.exp %396 : vector<16x24xf32>
    %cst_148 = arith.constant dense<0.000000e+00> : vector<16xf32>
    %398 = vector.multi_reduction <add>, %397, %cst_148 [1] : vector<16x24xf32> to vector<16xf32>
    %399 = vector.shape_cast %398 : vector<16xf32> to vector<16x1xf32>
    %400 = tpu.reciprocal %399 {approx = true} : vector<16x1xf32> -> vector<16x1xf32>
    %401 = vector.broadcast %400 : vector<16x1xf32> to vector<16x24xf32>
    %402 = arith.mulf %397, %401 : vector<16x24xf32>
    %cst_149 = arith.constant dense<0.000000e+00> : vector<16x8xf32>
    %403 = tpu.matmul %402, %390, %cst_149 {dimension_numbers = #tpu.dot_dimension_numbers<[1], [0], [0], [1], [0, 0, 1, 1], [], []>} : vector<16x24xf32>, vector<24x8xf32>, vector<16x8xf32> -> vector<16x8xf32>
    %404 = vector.extract_strided_slice %379 {offsets = [0, 8], sizes = [16, 8], strides = [1, 1]} : vector<16x32xf32> to vector<16x8xf32>
    %405 = vector.extract_strided_slice %383 {offsets = [0, 8], sizes = [24, 8], strides = [1, 1]} : vector<24x32xf32> to vector<24x8xf32>
    %406 = vector.extract_strided_slice %387 {offsets = [0, 8], sizes = [24, 8], strides = [1, 1]} : vector<24x32xf32> to vector<24x8xf32>
    %cst_150 = arith.constant dense<0.000000e+00> : vector<16x24xf32>
    %407 = tpu.matmul %404, %405, %cst_150 {dimension_numbers = #tpu.dot_dimension_numbers<[1], [1], [0], [0], [0, 0, 1, 0], [], []>} : vector<16x8xf32>, vector<24x8xf32>, vector<16x24xf32> -> vector<16x24xf32>
    %408 = arith.addf %407, %257 : vector<16x24xf32>
    %cst_151 = arith.constant dense<0xFF800000> : vector<16xf32>
    %409 = vector.multi_reduction <maximumf>, %408, %cst_151 [1] : vector<16x24xf32> to vector<16xf32>
    %410 = vector.shape_cast %409 : vector<16xf32> to vector<16x1xf32>
    %411 = vector.broadcast %410 : vector<16x1xf32> to vector<16x24xf32>
    %412 = arith.subf %408, %411 : vector<16x24xf32>
    %413 = math.exp %412 : vector<16x24xf32>
    %cst_152 = arith.constant dense<0.000000e+00> : vector<16xf32>
    %414 = vector.multi_reduction <add>, %413, %cst_152 [1] : vector<16x24xf32> to vector<16xf32>
    %415 = vector.shape_cast %414 : vector<16xf32> to vector<16x1xf32>
    %416 = tpu.reciprocal %415 {approx = true} : vector<16x1xf32> -> vector<16x1xf32>
    %417 = vector.broadcast %416 : vector<16x1xf32> to vector<16x24xf32>
    %418 = arith.mulf %413, %417 : vector<16x24xf32>
    %cst_153 = arith.constant dense<0.000000e+00> : vector<16x8xf32>
    %419 = tpu.matmul %418, %406, %cst_153 {dimension_numbers = #tpu.dot_dimension_numbers<[1], [0], [0], [1], [0, 0, 1, 1], [], []>} : vector<16x24xf32>, vector<24x8xf32>, vector<16x8xf32> -> vector<16x8xf32>
    %420 = vector.extract_strided_slice %379 {offsets = [0, 16], sizes = [16, 8], strides = [1, 1]} : vector<16x32xf32> to vector<16x8xf32>
    %421 = vector.extract_strided_slice %383 {offsets = [0, 16], sizes = [24, 8], strides = [1, 1]} : vector<24x32xf32> to vector<24x8xf32>
    %422 = vector.extract_strided_slice %387 {offsets = [0, 16], sizes = [24, 8], strides = [1, 1]} : vector<24x32xf32> to vector<24x8xf32>
    %cst_154 = arith.constant dense<0.000000e+00> : vector<16x24xf32>
    %423 = tpu.matmul %420, %421, %cst_154 {dimension_numbers = #tpu.dot_dimension_numbers<[1], [1], [0], [0], [0, 0, 1, 0], [], []>} : vector<16x8xf32>, vector<24x8xf32>, vector<16x24xf32> -> vector<16x24xf32>
    %424 = arith.addf %423, %257 : vector<16x24xf32>
    %cst_155 = arith.constant dense<0xFF800000> : vector<16xf32>
    %425 = vector.multi_reduction <maximumf>, %424, %cst_155 [1] : vector<16x24xf32> to vector<16xf32>
    %426 = vector.shape_cast %425 : vector<16xf32> to vector<16x1xf32>
    %427 = vector.broadcast %426 : vector<16x1xf32> to vector<16x24xf32>
    %428 = arith.subf %424, %427 : vector<16x24xf32>
    %429 = math.exp %428 : vector<16x24xf32>
    %cst_156 = arith.constant dense<0.000000e+00> : vector<16xf32>
    %430 = vector.multi_reduction <add>, %429, %cst_156 [1] : vector<16x24xf32> to vector<16xf32>
    %431 = vector.shape_cast %430 : vector<16xf32> to vector<16x1xf32>
    %432 = tpu.reciprocal %431 {approx = true} : vector<16x1xf32> -> vector<16x1xf32>
    %433 = vector.broadcast %432 : vector<16x1xf32> to vector<16x24xf32>
    %434 = arith.mulf %429, %433 : vector<16x24xf32>
    %cst_157 = arith.constant dense<0.000000e+00> : vector<16x8xf32>
    %435 = tpu.matmul %434, %422, %cst_157 {dimension_numbers = #tpu.dot_dimension_numbers<[1], [0], [0], [1], [0, 0, 1, 1], [], []>} : vector<16x24xf32>, vector<24x8xf32>, vector<16x8xf32> -> vector<16x8xf32>
    %436 = vector.extract_strided_slice %379 {offsets = [0, 24], sizes = [16, 8], strides = [1, 1]} : vector<16x32xf32> to vector<16x8xf32>
    %437 = vector.extract_strided_slice %383 {offsets = [0, 24], sizes = [24, 8], strides = [1, 1]} : vector<24x32xf32> to vector<24x8xf32>
    %438 = vector.extract_strided_slice %387 {offsets = [0, 24], sizes = [24, 8], strides = [1, 1]} : vector<24x32xf32> to vector<24x8xf32>
    %cst_158 = arith.constant dense<0.000000e+00> : vector<16x24xf32>
    %439 = tpu.matmul %436, %437, %cst_158 {dimension_numbers = #tpu.dot_dimension_numbers<[1], [1], [0], [0], [0, 0, 1, 0], [], []>} : vector<16x8xf32>, vector<24x8xf32>, vector<16x24xf32> -> vector<16x24xf32>
    %440 = arith.addf %439, %257 : vector<16x24xf32>
    %cst_159 = arith.constant dense<0xFF800000> : vector<16xf32>
    %441 = vector.multi_reduction <maximumf>, %440, %cst_159 [1] : vector<16x24xf32> to vector<16xf32>
    %442 = vector.shape_cast %441 : vector<16xf32> to vector<16x1xf32>
    %443 = vector.broadcast %442 : vector<16x1xf32> to vector<16x24xf32>
    %444 = arith.subf %440, %443 : vector<16x24xf32>
    %445 = math.exp %444 : vector<16x24xf32>
    %cst_160 = arith.constant dense<0.000000e+00> : vector<16xf32>
    %446 = vector.multi_reduction <add>, %445, %cst_160 [1] : vector<16x24xf32> to vector<16xf32>
    %447 = vector.shape_cast %446 : vector<16xf32> to vector<16x1xf32>
    %448 = tpu.reciprocal %447 {approx = true} : vector<16x1xf32> -> vector<16x1xf32>
    %449 = vector.broadcast %448 : vector<16x1xf32> to vector<16x24xf32>
    %450 = arith.mulf %445, %449 : vector<16x24xf32>
    %cst_161 = arith.constant dense<0.000000e+00> : vector<16x8xf32>
    %451 = tpu.matmul %450, %438, %cst_161 {dimension_numbers = #tpu.dot_dimension_numbers<[1], [0], [0], [1], [0, 0, 1, 1], [], []>} : vector<16x24xf32>, vector<24x8xf32>, vector<16x8xf32> -> vector<16x8xf32>
    %452 = tpu.concatenate %403, %419, %435, %451 in 1 : vector<16x8xf32>, vector<16x8xf32>, vector<16x8xf32>, vector<16x8xf32> -> vector<16x32xf32>
    %453 = vector.extract_strided_slice %452 {offsets = [0, 0], sizes = [8, 32], strides = [1, 1]} : vector<16x32xf32> to vector<8x32xf32>
    %454 = vector.extract_strided_slice %452 {offsets = [8, 0], sizes = [8, 32], strides = [1, 1]} : vector<16x32xf32> to vector<8x32xf32>
    %455 = tpu.concatenate %453, %454 in 1 : vector<8x32xf32>, vector<8x32xf32> -> vector<8x64xf32>
    %456 = tpu.concatenate %376, %455 in 0 : vector<8x64xf32>, vector<8x64xf32> -> vector<16x64xf32>
    %c0_162 = arith.constant 0 : index
    %c0_163 = arith.constant 0 : index
    %457 = vector.load %arg21[%c0_162, %c0_163] : memref<64x64xf32, #tpu.memory_space<vmem>>, vector<64x64xf32>
    %cst_164 = arith.constant dense<0.000000e+00> : vector<16x64xf32>
    %458 = tpu.matmul %456, %457, %cst_164 {dimension_numbers = #tpu.dot_dimension_numbers<[1], [0], [0], [1], [0, 0, 1, 1], [], []>} : vector<16x64xf32>, vector<64x64xf32>, vector<16x64xf32> -> vector<16x64xf32>
    %c0_165 = arith.constant 0 : index
    %c0_166 = arith.constant 0 : index
    %459 = vector.load %arg22[%c0_165, %c0_166] : memref<1x64xf32, #tpu.memory_space<vmem>>, vector<1x64xf32>
    %460 = vector.broadcast %459 : vector<1x64xf32> to vector<16x64xf32>
    %461 = arith.addf %458, %460 : vector<16x64xf32>
    %462 = arith.addf %461, %235 : vector<16x64xf32>
    %463 = vector.extract_strided_slice %462 {offsets = [0, 0], sizes = [16, 32], strides = [1, 1]} : vector<16x64xf32> to vector<16x32xf32>
    %cst_167 = arith.constant dense<0.000000e+00> : vector<16xf32>
    %464 = vector.multi_reduction <add>, %463, %cst_167 [1] : vector<16x32xf32> to vector<16xf32>
    %465 = vector.shape_cast %464 : vector<16xf32> to vector<16x1xf32>
    %cst_168 = arith.constant 3.200000e+01 : f32
    %466 = vector.broadcast %cst_168 : f32 to vector<16x1xf32>
    %467 = arith.divf %465, %466 : vector<16x1xf32>
    %468 = vector.broadcast %467 : vector<16x1xf32> to vector<16x32xf32>
    %469 = arith.subf %463, %468 : vector<16x32xf32>
    %470 = arith.mulf %469, %469 : vector<16x32xf32>
    %cst_169 = arith.constant dense<0.000000e+00> : vector<16xf32>
    %471 = vector.multi_reduction <add>, %470, %cst_169 [1] : vector<16x32xf32> to vector<16xf32>
    %472 = vector.shape_cast %471 : vector<16xf32> to vector<16x1xf32>
    %cst_170 = arith.constant 3.200000e+01 : f32
    %473 = vector.broadcast %cst_170 : f32 to vector<16x1xf32>
    %474 = arith.divf %472, %473 : vector<16x1xf32>
    %cst_171 = arith.constant 9.99999974E-6 : f32
    %475 = vector.broadcast %cst_171 : f32 to vector<16x1xf32>
    %476 = arith.addf %474, %475 : vector<16x1xf32>
    %477 = math.rsqrt %476 : vector<16x1xf32>
    %478 = vector.broadcast %477 : vector<16x1xf32> to vector<16x32xf32>
    %479 = arith.mulf %469, %478 : vector<16x32xf32>
    %480 = vector.extract_strided_slice %462 {offsets = [0, 32], sizes = [16, 32], strides = [1, 1]} : vector<16x64xf32> to vector<16x32xf32>
    %cst_172 = arith.constant dense<0.000000e+00> : vector<16xf32>
    %481 = vector.multi_reduction <add>, %480, %cst_172 [1] : vector<16x32xf32> to vector<16xf32>
    %482 = vector.shape_cast %481 : vector<16xf32> to vector<16x1xf32>
    %cst_173 = arith.constant 3.200000e+01 : f32
    %483 = vector.broadcast %cst_173 : f32 to vector<16x1xf32>
    %484 = arith.divf %482, %483 : vector<16x1xf32>
    %485 = vector.broadcast %484 : vector<16x1xf32> to vector<16x32xf32>
    %486 = arith.subf %480, %485 : vector<16x32xf32>
    %487 = arith.mulf %486, %486 : vector<16x32xf32>
    %cst_174 = arith.constant dense<0.000000e+00> : vector<16xf32>
    %488 = vector.multi_reduction <add>, %487, %cst_174 [1] : vector<16x32xf32> to vector<16xf32>
    %489 = vector.shape_cast %488 : vector<16xf32> to vector<16x1xf32>
    %cst_175 = arith.constant 3.200000e+01 : f32
    %490 = vector.broadcast %cst_175 : f32 to vector<16x1xf32>
    %491 = arith.divf %489, %490 : vector<16x1xf32>
    %cst_176 = arith.constant 9.99999974E-6 : f32
    %492 = vector.broadcast %cst_176 : f32 to vector<16x1xf32>
    %493 = arith.addf %491, %492 : vector<16x1xf32>
    %494 = math.rsqrt %493 : vector<16x1xf32>
    %495 = vector.broadcast %494 : vector<16x1xf32> to vector<16x32xf32>
    %496 = arith.mulf %486, %495 : vector<16x32xf32>
    %497 = tpu.concatenate %479, %496 in 1 : vector<16x32xf32>, vector<16x32xf32> -> vector<16x64xf32>
    %c0_177 = arith.constant 0 : index
    %c0_178 = arith.constant 0 : index
    %498 = vector.load %arg23[%c0_177, %c0_178] : memref<1x64xf32, #tpu.memory_space<vmem>>, vector<1x64xf32>
    %499 = vector.broadcast %498 : vector<1x64xf32> to vector<16x64xf32>
    %500 = arith.mulf %497, %499 : vector<16x64xf32>
    %c0_179 = arith.constant 0 : index
    %c0_180 = arith.constant 0 : index
    %501 = vector.load %arg24[%c0_179, %c0_180] : memref<1x64xf32, #tpu.memory_space<vmem>>, vector<1x64xf32>
    %502 = vector.broadcast %501 : vector<1x64xf32> to vector<16x64xf32>
    %503 = arith.addf %500, %502 : vector<16x64xf32>
    %c0_181 = arith.constant 0 : index
    %c0_182 = arith.constant 0 : index
    %504 = vector.load %arg25[%c0_181, %c0_182] : memref<64x128xf32, #tpu.memory_space<vmem>>, vector<64x128xf32>
    %cst_183 = arith.constant dense<0.000000e+00> : vector<16x128xf32>
    %505 = tpu.matmul %503, %504, %cst_183 {dimension_numbers = #tpu.dot_dimension_numbers<[1], [0], [0], [1], [0, 0, 1, 1], [], []>} : vector<16x64xf32>, vector<64x128xf32>, vector<16x128xf32> -> vector<16x128xf32>
    %c0_184 = arith.constant 0 : index
    %c0_185 = arith.constant 0 : index
    %506 = vector.load %arg26[%c0_184, %c0_185] : memref<1x128xf32, #tpu.memory_space<vmem>>, vector<1x128xf32>
    %507 = vector.broadcast %506 : vector<1x128xf32> to vector<16x128xf32>
    %508 = arith.addf %505, %507 : vector<16x128xf32>
    %cst_186 = arith.constant 5.000000e-02 : f32
    %509 = vector.broadcast %cst_186 : f32 to vector<16x128xf32>
    %510 = arith.mulf %509, %508 : vector<16x128xf32>
    %511 = arith.maximumf %508, %510 : vector<16x128xf32>
    %c0_187 = arith.constant 0 : index
    %c0_188 = arith.constant 0 : index
    %512 = vector.load %arg27[%c0_187, %c0_188] : memref<128x64xf32, #tpu.memory_space<vmem>>, vector<128x64xf32>
    %cst_189 = arith.constant dense<0.000000e+00> : vector<16x64xf32>
    %513 = tpu.matmul %511, %512, %cst_189 {dimension_numbers = #tpu.dot_dimension_numbers<[1], [0], [0], [1], [0, 0, 1, 1], [], []>} : vector<16x128xf32>, vector<128x64xf32>, vector<16x64xf32> -> vector<16x64xf32>
    %c0_190 = arith.constant 0 : index
    %c0_191 = arith.constant 0 : index
    %514 = vector.load %arg28[%c0_190, %c0_191] : memref<1x64xf32, #tpu.memory_space<vmem>>, vector<1x64xf32>
    %515 = vector.broadcast %514 : vector<1x64xf32> to vector<16x64xf32>
    %516 = arith.addf %513, %515 : vector<16x64xf32>
    %517 = arith.addf %516, %503 : vector<16x64xf32>
    %518 = vector.extract_strided_slice %517 {offsets = [0, 0], sizes = [16, 32], strides = [1, 1]} : vector<16x64xf32> to vector<16x32xf32>
    %cst_192 = arith.constant dense<0.000000e+00> : vector<16xf32>
    %519 = vector.multi_reduction <add>, %518, %cst_192 [1] : vector<16x32xf32> to vector<16xf32>
    %520 = vector.shape_cast %519 : vector<16xf32> to vector<16x1xf32>
    %cst_193 = arith.constant 3.200000e+01 : f32
    %521 = vector.broadcast %cst_193 : f32 to vector<16x1xf32>
    %522 = arith.divf %520, %521 : vector<16x1xf32>
    %523 = vector.broadcast %522 : vector<16x1xf32> to vector<16x32xf32>
    %524 = arith.subf %518, %523 : vector<16x32xf32>
    %525 = arith.mulf %524, %524 : vector<16x32xf32>
    %cst_194 = arith.constant dense<0.000000e+00> : vector<16xf32>
    %526 = vector.multi_reduction <add>, %525, %cst_194 [1] : vector<16x32xf32> to vector<16xf32>
    %527 = vector.shape_cast %526 : vector<16xf32> to vector<16x1xf32>
    %cst_195 = arith.constant 3.200000e+01 : f32
    %528 = vector.broadcast %cst_195 : f32 to vector<16x1xf32>
    %529 = arith.divf %527, %528 : vector<16x1xf32>
    %cst_196 = arith.constant 9.99999974E-6 : f32
    %530 = vector.broadcast %cst_196 : f32 to vector<16x1xf32>
    %531 = arith.addf %529, %530 : vector<16x1xf32>
    %532 = math.rsqrt %531 : vector<16x1xf32>
    %533 = vector.broadcast %532 : vector<16x1xf32> to vector<16x32xf32>
    %534 = arith.mulf %524, %533 : vector<16x32xf32>
    %535 = vector.extract_strided_slice %517 {offsets = [0, 32], sizes = [16, 32], strides = [1, 1]} : vector<16x64xf32> to vector<16x32xf32>
    %cst_197 = arith.constant dense<0.000000e+00> : vector<16xf32>
    %536 = vector.multi_reduction <add>, %535, %cst_197 [1] : vector<16x32xf32> to vector<16xf32>
    %537 = vector.shape_cast %536 : vector<16xf32> to vector<16x1xf32>
    %cst_198 = arith.constant 3.200000e+01 : f32
    %538 = vector.broadcast %cst_198 : f32 to vector<16x1xf32>
    %539 = arith.divf %537, %538 : vector<16x1xf32>
    %540 = vector.broadcast %539 : vector<16x1xf32> to vector<16x32xf32>
    %541 = arith.subf %535, %540 : vector<16x32xf32>
    %542 = arith.mulf %541, %541 : vector<16x32xf32>
    %cst_199 = arith.constant dense<0.000000e+00> : vector<16xf32>
    %543 = vector.multi_reduction <add>, %542, %cst_199 [1] : vector<16x32xf32> to vector<16xf32>
    %544 = vector.shape_cast %543 : vector<16xf32> to vector<16x1xf32>
    %cst_200 = arith.constant 3.200000e+01 : f32
    %545 = vector.broadcast %cst_200 : f32 to vector<16x1xf32>
    %546 = arith.divf %544, %545 : vector<16x1xf32>
    %cst_201 = arith.constant 9.99999974E-6 : f32
    %547 = vector.broadcast %cst_201 : f32 to vector<16x1xf32>
    %548 = arith.addf %546, %547 : vector<16x1xf32>
    %549 = math.rsqrt %548 : vector<16x1xf32>
    %550 = vector.broadcast %549 : vector<16x1xf32> to vector<16x32xf32>
    %551 = arith.mulf %541, %550 : vector<16x32xf32>
    %552 = tpu.concatenate %534, %551 in 1 : vector<16x32xf32>, vector<16x32xf32> -> vector<16x64xf32>
    %c0_202 = arith.constant 0 : index
    %c0_203 = arith.constant 0 : index
    %553 = vector.load %arg29[%c0_202, %c0_203] : memref<1x64xf32, #tpu.memory_space<vmem>>, vector<1x64xf32>
    %554 = vector.broadcast %553 : vector<1x64xf32> to vector<16x64xf32>
    %555 = arith.mulf %552, %554 : vector<16x64xf32>
    %c0_204 = arith.constant 0 : index
    %c0_205 = arith.constant 0 : index
    %556 = vector.load %arg30[%c0_204, %c0_205] : memref<1x64xf32, #tpu.memory_space<vmem>>, vector<1x64xf32>
    %557 = vector.broadcast %556 : vector<1x64xf32> to vector<16x64xf32>
    %558 = arith.addf %555, %557 : vector<16x64xf32>
    %c0_206 = arith.constant 0 : index
    %c0_207 = arith.constant 0 : index
    %559 = vector.load %arg31[%c0_206, %c0_207] : memref<16x64xf32, #tpu.memory_space<vmem>>, vector<16x64xf32>
    tpu.vector_store %arg31[%c0_206, %c0_207], %558 {strides = array<i32>} : memref<16x64xf32, #tpu.memory_space<vmem>>, vector<16x64xf32>,
    return
  }
  func.func @transform_0(%arg0: i32) -> (i32, i32) {
    %c0_i32 = arith.constant 0 : i32
    %c0_i32_0 = arith.constant 0 : i32
    return %arg0, %c0_i32 : i32, i32
  }
  func.func @transform_1(%arg0: i32) -> (i32, i32) {
    %c0_i32 = arith.constant 0 : i32
    %c0_i32_0 = arith.constant 0 : i32
    return %arg0, %c0_i32 : i32, i32
  }
  func.func @transform_2(%arg0: i32) -> (i32, i32) {
    %c0_i32 = arith.constant 0 : i32
    %c0_i32_0 = arith.constant 0 : i32
    return %arg0, %c0_i32 : i32, i32
  }
  func.func @transform_3(%arg0: i32) -> (i32, i32) {
    %c0_i32 = arith.constant 0 : i32
    %c0_i32_0 = arith.constant 0 : i32
    %c0_i32_1 = arith.constant 0 : i32
    return %c0_i32, %c0_i32_0 : i32, i32
  }
  func.func @transform_4(%arg0: i32) -> (i32, i32) {
    %c0_i32 = arith.constant 0 : i32
    %c0_i32_0 = arith.constant 0 : i32
    %c0_i32_1 = arith.constant 0 : i32
    return %c0_i32, %c0_i32_0 : i32, i32
  }
  func.func @transform_5(%arg0: i32) -> (i32, i32) {
    %c0_i32 = arith.constant 0 : i32
    %c0_i32_0 = arith.constant 0 : i32
    %c0_i32_1 = arith.constant 0 : i32
    return %c0_i32, %c0_i32_0 : i32, i32
  }
  func.func @transform_6(%arg0: i32) -> (i32, i32) {
    %c0_i32 = arith.constant 0 : i32
    %c0_i32_0 = arith.constant 0 : i32
    %c0_i32_1 = arith.constant 0 : i32
    return %c0_i32, %c0_i32_0 : i32, i32
  }
  func.func @transform_7(%arg0: i32) -> (i32, i32) {
    %c0_i32 = arith.constant 0 : i32
    %c0_i32_0 = arith.constant 0 : i32
    %c0_i32_1 = arith.constant 0 : i32
    return %c0_i32, %c0_i32_0 : i32, i32
  }
  func.func @transform_8(%arg0: i32) -> (i32, i32) {
    %c0_i32 = arith.constant 0 : i32
    %c0_i32_0 = arith.constant 0 : i32
    %c0_i32_1 = arith.constant 0 : i32
    return %c0_i32, %c0_i32_0 : i32, i32
  }
  func.func @transform_9(%arg0: i32) -> (i32, i32) {
    %c0_i32 = arith.constant 0 : i32
    %c0_i32_0 = arith.constant 0 : i32
    %c0_i32_1 = arith.constant 0 : i32
    return %c0_i32, %c0_i32_0 : i32, i32
  }
  func.func @transform_10(%arg0: i32) -> (i32, i32) {
    %c0_i32 = arith.constant 0 : i32
    %c0_i32_0 = arith.constant 0 : i32
    %c0_i32_1 = arith.constant 0 : i32
    return %c0_i32, %c0_i32_0 : i32, i32
  }
  func.func @transform_11(%arg0: i32) -> (i32, i32) {
    %c0_i32 = arith.constant 0 : i32
    %c0_i32_0 = arith.constant 0 : i32
    %c0_i32_1 = arith.constant 0 : i32
    return %c0_i32, %c0_i32_0 : i32, i32
  }
  func.func @transform_12(%arg0: i32) -> (i32, i32) {
    %c0_i32 = arith.constant 0 : i32
    %c0_i32_0 = arith.constant 0 : i32
    %c0_i32_1 = arith.constant 0 : i32
    return %c0_i32, %c0_i32_0 : i32, i32
  }
  func.func @transform_13(%arg0: i32) -> (i32, i32) {
    %c0_i32 = arith.constant 0 : i32
    %c0_i32_0 = arith.constant 0 : i32
    %c0_i32_1 = arith.constant 0 : i32
    return %c0_i32, %c0_i32_0 : i32, i32
  }
  func.func @transform_14(%arg0: i32) -> (i32, i32) {
    %c0_i32 = arith.constant 0 : i32
    %c0_i32_0 = arith.constant 0 : i32
    %c0_i32_1 = arith.constant 0 : i32
    return %c0_i32, %c0_i32_0 : i32, i32
  }
  func.func @transform_15(%arg0: i32) -> (i32, i32) {
    %c0_i32 = arith.constant 0 : i32
    %c0_i32_0 = arith.constant 0 : i32
    %c0_i32_1 = arith.constant 0 : i32
    return %c0_i32, %c0_i32_0 : i32, i32
  }
  func.func @transform_16(%arg0: i32) -> (i32, i32) {
    %c0_i32 = arith.constant 0 : i32
    %c0_i32_0 = arith.constant 0 : i32
    %c0_i32_1 = arith.constant 0 : i32
    return %c0_i32, %c0_i32_0 : i32, i32
  }
  func.func @transform_17(%arg0: i32) -> (i32, i32) {
    %c0_i32 = arith.constant 0 : i32
    %c0_i32_0 = arith.constant 0 : i32
    %c0_i32_1 = arith.constant 0 : i32
    return %c0_i32, %c0_i32_0 : i32, i32
  }
  func.func @transform_18(%arg0: i32) -> (i32, i32) {
    %c0_i32 = arith.constant 0 : i32
    %c0_i32_0 = arith.constant 0 : i32
    %c0_i32_1 = arith.constant 0 : i32
    return %c0_i32, %c0_i32_0 : i32, i32
  }
  func.func @transform_19(%arg0: i32) -> (i32, i32) {
    %c0_i32 = arith.constant 0 : i32
    %c0_i32_0 = arith.constant 0 : i32
    %c0_i32_1 = arith.constant 0 : i32
    return %c0_i32, %c0_i32_0 : i32, i32
  }
  func.func @transform_20(%arg0: i32) -> (i32, i32) {
    %c0_i32 = arith.constant 0 : i32
    %c0_i32_0 = arith.constant 0 : i32
    %c0_i32_1 = arith.constant 0 : i32
    return %c0_i32, %c0_i32_0 : i32, i32
  }
  func.func @transform_21(%arg0: i32) -> (i32, i32) {
    %c0_i32 = arith.constant 0 : i32
    %c0_i32_0 = arith.constant 0 : i32
    %c0_i32_1 = arith.constant 0 : i32
    return %c0_i32, %c0_i32_0 : i32, i32
  }
  func.func @transform_22(%arg0: i32) -> (i32, i32) {
    %c0_i32 = arith.constant 0 : i32
    %c0_i32_0 = arith.constant 0 : i32
    %c0_i32_1 = arith.constant 0 : i32
    return %c0_i32, %c0_i32_0 : i32, i32
  }
  func.func @transform_23(%arg0: i32) -> (i32, i32) {
    %c0_i32 = arith.constant 0 : i32
    %c0_i32_0 = arith.constant 0 : i32
    %c0_i32_1 = arith.constant 0 : i32
    return %c0_i32, %c0_i32_0 : i32, i32
  }
  func.func @transform_24(%arg0: i32) -> (i32, i32) {
    %c0_i32 = arith.constant 0 : i32
    %c0_i32_0 = arith.constant 0 : i32
    %c0_i32_1 = arith.constant 0 : i32
    return %c0_i32, %c0_i32_0 : i32, i32
  }
  func.func @transform_25(%arg0: i32) -> (i32, i32) {
    %c0_i32 = arith.constant 0 : i32
    %c0_i32_0 = arith.constant 0 : i32
    %c0_i32_1 = arith.constant 0 : i32
    return %c0_i32, %c0_i32_0 : i32, i32
  }
  func.func @transform_26(%arg0: i32) -> (i32, i32) {
    %c0_i32 = arith.constant 0 : i32
    %c0_i32_0 = arith.constant 0 : i32
    %c0_i32_1 = arith.constant 0 : i32
    return %c0_i32, %c0_i32_0 : i32, i32
  }
  func.func @transform_27(%arg0: i32) -> (i32, i32) {
    %c0_i32 = arith.constant 0 : i32
    %c0_i32_0 = arith.constant 0 : i32
    %c0_i32_1 = arith.constant 0 : i32
    return %c0_i32, %c0_i32_0 : i32, i32
  }
  func.func @transform_28(%arg0: i32) -> (i32, i32) {
    %c0_i32 = arith.constant 0 : i32
    %c0_i32_0 = arith.constant 0 : i32
    %c0_i32_1 = arith.constant 0 : i32
    return %c0_i32, %c0_i32_0 : i32, i32
  }
  func.func @transform_29(%arg0: i32) -> (i32, i32) {
    %c0_i32 = arith.constant 0 : i32
    %c0_i32_0 = arith.constant 0 : i32
    %c0_i32_1 = arith.constant 0 : i32
    return %c0_i32, %c0_i32_0 : i32, i32
  }
  func.func @transform_30(%arg0: i32) -> (i32, i32) {
    %c0_i32 = arith.constant 0 : i32
    %c0_i32_0 = arith.constant 0 : i32
    return %arg0, %c0_i32 : i32, i32
  }
}

</mosaic_0001>

<llo_original>
// kernel: tpu_custom_call.1
$region0: #{tpu_custom_call.1}
  #allocation0 [shape = 'u32[]', space=smem, size = 0x4, offset = 0x4, fixed_abs, tag = 'smem constant byte address 0x4 - core index']
  #allocation1 [shape = 'u32[72,128]{1,0:T(1,128)}', space=vmem, size = 0x9000, scoped, tag = 'internal scratch']
  %s0 = inlined_call_operand.smem [shape: u32[31], index: -1, kind: input, shape index: {}]
  %s1 = sld [smem:[%s0]]
  %s2 = scalar_lea.smem %s0, 1
  %s3 = sld [smem:[%s2]]
  %s4 = scalar_lea.smem %s0, 2
  %s5 = sld [smem:[%s4]]
  %s6 = scalar_lea.smem %s0, 3
  %s7 = sld [smem:[%s6]]
  %s8 = scalar_lea.smem %s0, 4
  %s9 = sld [smem:[%s8]]
  %s10 = scalar_lea.smem %s0, 5
  %s11 = sld [smem:[%s10]]
  %s12 = scalar_lea.smem %s0, 6
  %s13 = sld [smem:[%s12]]
  %s14 = scalar_lea.smem %s0, 7
  %s15 = sld [smem:[%s14]]
  %s16 = scalar_lea.smem %s0, 8
  %s17 = sld [smem:[%s16]]
  %s18 = scalar_lea.smem %s0, 9
  %s19 = sld [smem:[%s18]]
  %s20 = scalar_lea.smem %s0, 10
  %s21 = sld [smem:[%s20]]
  %s22 = scalar_lea.smem %s0, 11
  %s23 = sld [smem:[%s22]]
  %s24 = scalar_lea.smem %s0, 12
  %s25 = sld [smem:[%s24]]
  %s26 = scalar_lea.smem %s0, 13
  %s27 = sld [smem:[%s26]]
  %s28 = scalar_lea.smem %s0, 14
  %s29 = sld [smem:[%s28]]
  %s30 = scalar_lea.smem %s0, 15
  %s31 = sld [smem:[%s30]]
  %s32 = scalar_lea.smem %s0, 16
  %s33 = sld [smem:[%s32]]
  %s34 = scalar_lea.smem %s0, 17
  %s35 = sld [smem:[%s34]]
  %s36 = scalar_lea.smem %s0, 18
  %s37 = sld [smem:[%s36]]
  %s38 = scalar_lea.smem %s0, 19
  %s39 = sld [smem:[%s38]]
  %s40 = scalar_lea.smem %s0, 20
  %s41 = sld [smem:[%s40]]
  %s42 = scalar_lea.smem %s0, 21
  %s43 = sld [smem:[%s42]]
  %s44 = scalar_lea.smem %s0, 22
  %s45 = sld [smem:[%s44]]
  %s46 = scalar_lea.smem %s0, 23
  %s47 = sld [smem:[%s46]]
  %s48 = scalar_lea.smem %s0, 24
  %s49 = sld [smem:[%s48]]
  %s50 = scalar_lea.smem %s0, 25
  %s51 = sld [smem:[%s50]]
  %s52 = scalar_lea.smem %s0, 26
  %s53 = sld [smem:[%s52]]
  %s54 = scalar_lea.smem %s0, 27
  %s55 = sld [smem:[%s54]]
  %s56 = scalar_lea.smem %s0, 28
  %s57 = sld [smem:[%s56]]
  %s58 = scalar_lea.smem %s0, 29
  %s59 = sld [smem:[%s58]]
  %s60 = scalar_lea.smem %s0, 30
  %s61 = sld [smem:[%s60]]
  %s62 = sld [smem:[#allocation0]]
  $region174: #{tpu_custom_call.1} parent=0
    _
  %s64 = ssub.s32 1, %s62
  %s65 = scalar_select 0, %s64, %s62
  $region1: #{tpu_custom_call.1} parent=0
    #allocation2 [shape = 'u8[8192]{0}', space=vmem, size = 0x2000, scoped, tag = 'input window, operand 0, single buffered']
    #allocation3 [shape = 's32[1]{0}', space=sflag, size = 0x4, scoped, tag = 'scoped memory for tpu_custom_call.1']
    #allocation4 [shape = 's32[1]{0}', space=sflag, size = 0x4, scoped, tag = 'scoped memory for tpu_custom_call.1']
    #allocation5 [shape = 'u8[8192]{0}', space=vmem, size = 0x2000, scoped, tag = 'input window, operand 1, single buffered']
    #allocation6 [shape = 's32[1]{0}', space=sflag, size = 0x4, scoped, tag = 'scoped memory for tpu_custom_call.1']
    #allocation7 [shape = 'u8[8192]{0}', space=vmem, size = 0x2000, scoped, tag = 'input window, operand 2, single buffered']
    #allocation8 [shape = 'u8[8192]{0}', space=vmem, size = 0x2000, scoped, tag = 'input window, operand 3, single buffered']
    #allocation9 [shape = 's32[1]{0}', space=sflag, size = 0x4, scoped, tag = 'scoped memory for tpu_custom_call.1']
    #allocation10 [shape = 'u8[32768]{0}', space=vmem, size = 0x8000, scoped, tag = 'input window, operand 4, single buffered']
    #allocation11 [shape = 'u8[32768]{0}', space=vmem, size = 0x8000, scoped, tag = 'input window, operand 6, single buffered']
    #allocation12 [shape = 's32[1]{0}', space=sflag, size = 0x4, scoped, tag = 'scoped memory for tpu_custom_call.1']
    #allocation13 [shape = 'u8[32768]{0}', space=vmem, size = 0x8000, scoped, tag = 'input window, operand 8, single buffered']
    #allocation14 [shape = 'u8[32768]{0}', space=vmem, size = 0x8000, scoped, tag = 'input window, operand 10, single buffered']
    #allocation15 [shape = 's32[1]{0}', space=sflag, size = 0x4, scoped, tag = 'scoped memory for tpu_custom_call.1']
    #allocation16 [shape = 'u8[32768]{0}', space=vmem, size = 0x8000, scoped, tag = 'input window, operand 14, single buffered']
    #allocation17 [shape = 'u8[32768]{0}', space=vmem, size = 0x8000, scoped, tag = 'input window, operand 20, single buffered']
    #allocation18 [shape = 's32[1]{0}', space=sflag, size = 0x4, scoped, tag = 'scoped memory for tpu_custom_call.1']
    #allocation19 [shape = 'u8[32768]{0}', space=vmem, size = 0x8000, scoped, tag = 'input window, operand 24, single buffered']
    #allocation20 [shape = 'u8[8192]{0}', space=vmem, size = 0x2000, scoped, tag = 'output window, operand 0, single buffered']
    %66 = vsyncpa [#allocation3], 0
    %67 = vsyncpa [#allocation6], 0
    %68 = vsyncpa [#allocation9], 0
    %69 = vsyncpa [#allocation12], 0
    %70 = vsyncpa [#allocation15], 0
    %71 = vsyncpa [#allocation18], 0
    %72 = vsyncpa [#allocation4], 0
    // Predicated region
    $region2: #{tpu_custom_call.1} parent=1 // pred_check
      _
    $region3: #{tpu_custom_call.1} parent=1 // pred_check_branch
      %74 = sbr.rel (0) target = $region5
    $region4: #{tpu_custom_call.1} parent=1 // pred_region
      %76 = vsyncadd [#allocation3], 0
      %s77 = sshll.u32 %s1, 4
      %s78 = int_to_ptr.hbm [resolvable:$true] %s77
      %s79 = sshll.u32 [#allocation2], 4
      %s80 = int_to_ptr.vmem [resolvable:$true] %s79
      %85 = dma.hbm_to_vmem [thread:$0]  %s78, 256, %s80, [#allocation3], 128, 128, 8
    $region5: #{tpu_custom_call.1} parent=1 // pred_fallthru
      _
    // Predicated region
    $region6: #{tpu_custom_call.1} parent=1 // pred_check
      _
    $region7: #{tpu_custom_call.1} parent=1 // pred_check_branch
      %87 = sbr.rel (0) target = $region9
    $region8: #{tpu_custom_call.1} parent=1 // pred_region
      %89 = vsyncadd [#allocation6], 0
      %s90 = sshll.u32 %s3, 4
      %s91 = int_to_ptr.hbm [resolvable:$true] %s90
      %s92 = sshll.u32 [#allocation5], 4
      %s93 = int_to_ptr.vmem [resolvable:$true] %s92
      %98 = dma.hbm_to_vmem [thread:$0]  %s91, 256, %s93, [#allocation6], 128, 128, 8
    $region9: #{tpu_custom_call.1} parent=1 // pred_fallthru
      _
    // Predicated region
    $region10: #{tpu_custom_call.1} parent=1 // pred_check
      _
    $region11: #{tpu_custom_call.1} parent=1 // pred_check_branch
      %100 = sbr.rel (0) target = $region13
    $region12: #{tpu_custom_call.1} parent=1 // pred_region
      %102 = vsyncadd [#allocation6], 0
      %s103 = sshll.u32 %s5, 4
      %s104 = int_to_ptr.hbm [resolvable:$true] %s103
      %s105 = sshll.u32 [#allocation7], 4
      %s106 = int_to_ptr.vmem [resolvable:$true] %s105
      %111 = dma.hbm_to_vmem [thread:$0]  %s104, 256, %s106, [#allocation6], 128, 128, 8
    $region13: #{tpu_custom_call.1} parent=1 // pred_fallthru
      _
    // Predicated region
    $region14: #{tpu_custom_call.1} parent=1 // pred_check
      _
    $region15: #{tpu_custom_call.1} parent=1 // pred_check_branch
      %113 = sbr.rel (0) target = $region17
    $region16: #{tpu_custom_call.1} parent=1 // pred_region
      %115 = vsyncadd [#allocation9], 0
      %s116 = sshll.u32 %s7, 4
      %s117 = int_to_ptr.hbm [resolvable:$true] %s116
      %s118 = sshll.u32 [#allocation8], 4
      %s119 = int_to_ptr.vmem [resolvable:$true] %s118
      %124 = dma.hbm_to_vmem [thread:$0]  %s117, 256, %s119, [#allocation9], 128, 128, 8
    $region17: #{tpu_custom_call.1} parent=1 // pred_fallthru
      _
    // Predicated region
    $region18: #{tpu_custom_call.1} parent=1 // pred_check
      _
    $region19: #{tpu_custom_call.1} parent=1 // pred_check_branch
      %126 = sbr.rel (0) target = $region21
    $region20: #{tpu_custom_call.1} parent=1 // pred_region
      %128 = vsyncadd [#allocation9], 0
      %s129 = sshll.u32 %s9, 4
      %s130 = int_to_ptr.hbm [resolvable:$true] %s129
      %s131 = sshll.u32 [#allocation10], 4
      %s132 = int_to_ptr.vmem [resolvable:$true] %s131
      %137 = dma.hbm_to_vmem [thread:$0]  %s130, 1024, %s132, [#allocation9], 128, 128, 8
    $region21: #{tpu_custom_call.1} parent=1 // pred_fallthru
      _
    // Predicated region
    $region22: #{tpu_custom_call.1} parent=1 // pred_check
      _
    $region23: #{tpu_custom_call.1} parent=1 // pred_check_branch
      %139 = sbr.rel (0) target = $region25
    $region24: #{tpu_custom_call.1} parent=1 // pred_region
      _
    $region25: #{tpu_custom_call.1} parent=1 // pred_fallthru
      _
    // Predicated region
    $region26: #{tpu_custom_call.1} parent=1 // pred_check
      _
    $region27: #{tpu_custom_call.1} parent=1 // pred_check_branch
      %141 = sbr.rel (0) target = $region29
    $region28: #{tpu_custom_call.1} parent=1 // pred_region
      %143 = vsyncadd [#allocation12], 0
      %s144 = sshll.u32 %s13, 4
      %s145 = int_to_ptr.hbm [resolvable:$true] %s144
      %s146 = sshll.u32 [#allocation11], 4
      %s147 = int_to_ptr.vmem [resolvable:$true] %s146
      %152 = dma.hbm_to_vmem [thread:$0]  %s145, 1024, %s147, [#allocation12], 128, 128, 8
    $region29: #{tpu_custom_call.1} parent=1 // pred_fallthru
      _
    // Predicated region
    $region30: #{tpu_custom_call.1} parent=1 // pred_check
      _
    $region31: #{tpu_custom_call.1} parent=1 // pred_check_branch
      %154 = sbr.rel (0) target = $region33
    $region32: #{tpu_custom_call.1} parent=1 // pred_region
      _
    $region33: #{tpu_custom_call.1} parent=1 // pred_fallthru
      _
    // Predicated region
    $region34: #{tpu_custom_call.1} parent=1 // pred_check
      _
    $region35: #{tpu_custom_call.1} parent=1 // pred_check_branch
      %156 = sbr.rel (0) target = $region37
    $region36: #{tpu_custom_call.1} parent=1 // pred_region
      %158 = vsyncadd [#allocation12], 0
      %s159 = sshll.u32 %s17, 4
      %s160 = int_to_ptr.hbm [resolvable:$true] %s159
      %s161 = sshll.u32 [#allocation13], 4
      %s162 = int_to_ptr.vmem [resolvable:$true] %s161
      %167 = dma.hbm_to_vmem [thread:$0]  %s160, 1024, %s162, [#allocation12], 128, 128, 8
    $region37: #{tpu_custom_call.1} parent=1 // pred_fallthru
      _
    // Predicated region
    $region38: #{tpu_custom_call.1} parent=1 // pred_check
      _
    $region39: #{tpu_custom_call.1} parent=1 // pred_check_branch
      %169 = sbr.rel (0) target = $region41
    $region40: #{tpu_custom_call.1} parent=1 // pred_region
      _
    $region41: #{tpu_custom_call.1} parent=1 // pred_fallthru
      _
    // Predicated region
    $region42: #{tpu_custom_call.1} parent=1 // pred_check
      _
    $region43: #{tpu_custom_call.1} parent=1 // pred_check_branch
      %171 = sbr.rel (0) target = $region45
    $region44: #{tpu_custom_call.1} parent=1 // pred_region
      %173 = vsyncadd [#allocation15], 0
      %s174 = sshll.u32 %s21, 4
      %s175 = int_to_ptr.hbm [resolvable:$true] %s174
      %s176 = sshll.u32 [#allocation14], 4
      %s177 = int_to_ptr.vmem [resolvable:$true] %s176
      %182 = dma.hbm_to_vmem [thread:$0]  %s175, 1024, %s177, [#allocation15], 128, 128, 8
    $region45: #{tpu_custom_call.1} parent=1 // pred_fallthru
      _
    // Predicated region
    $region46: #{tpu_custom_call.1} parent=1 // pred_check
      _
    $region47: #{tpu_custom_call.1} parent=1 // pred_check_branch
      %184 = sbr.rel (0) target = $region49
    $region48: #{tpu_custom_call.1} parent=1 // pred_region
      _
    $region49: #{tpu_custom_call.1} parent=1 // pred_fallthru
      _
    // Predicated region
    $region50: #{tpu_custom_call.1} parent=1 // pred_check
      _
    $region51: #{tpu_custom_call.1} parent=1 // pred_check_branch
      %186 = sbr.rel (0) target = $region53
    $region52: #{tpu_custom_call.1} parent=1 // pred_region
      _
    $region53: #{tpu_custom_call.1} parent=1 // pred_fallthru
      _
    // Predicated region
    $region54: #{tpu_custom_call.1} parent=1 // pred_check
      _
    $region55: #{tpu_custom_call.1} parent=1 // pred_check_branch
      %188 = sbr.rel (0) target = $region57
    $region56: #{tpu_custom_call.1} parent=1 // pred_region
      _
    $region57: #{tpu_custom_call.1} parent=1 // pred_fallthru
      _
    // Predicated region
    $region58: #{tpu_custom_call.1} parent=1 // pred_check
      _
    $region59: #{tpu_custom_call.1} parent=1 // pred_check_branch
      %190 = sbr.rel (0) target = $region61
    $region60: #{tpu_custom_call.1} parent=1 // pred_region
      %192 = vsyncadd [#allocation15], 0
      %s193 = sshll.u32 %s29, 4
      %s194 = int_to_ptr.hbm [resolvable:$true] %s193
      %s195 = sshll.u32 [#allocation16], 4
      %s196 = int_to_ptr.vmem [resolvable:$true] %s195
      %201 = dma.hbm_to_vmem [thread:$0]  %s194, 1024, %s196, [#allocation15], 128, 128, 8
    $region61: #{tpu_custom_call.1} parent=1 // pred_fallthru
      _
    // Predicated region
    $region62: #{tpu_custom_call.1} parent=1 // pred_check
      _
    $region63: #{tpu_custom_call.1} parent=1 // pred_check_branch
      %203 = sbr.rel (0) target = $region65
    $region64: #{tpu_custom_call.1} parent=1 // pred_region
      _
    $region65: #{tpu_custom_call.1} parent=1 // pred_fallthru
      _
    // Predicated region
    $region66: #{tpu_custom_call.1} parent=1 // pred_check
      _
    $region67: #{tpu_custom_call.1} parent=1 // pred_check_branch
      %205 = sbr.rel (0) target = $region69
    $region68: #{tpu_custom_call.1} parent=1 // pred_region
      _
    $region69: #{tpu_custom_call.1} parent=1 // pred_fallthru
      _
    // Predicated region
    $region70: #{tpu_custom_call.1} parent=1 // pred_check
      _
    $region71: #{tpu_custom_call.1} parent=1 // pred_check_branch
      %207 = sbr.rel (0) target = $region73
    $region72: #{tpu_custom_call.1} parent=1 // pred_region
      _
    $region73: #{tpu_custom_call.1} parent=1 // pred_fallthru
      _
    // Predicated region
    $region74: #{tpu_custom_call.1} parent=1 // pred_check
      _
    $region75: #{tpu_custom_call.1} parent=1 // pred_check_branch
      %209 = sbr.rel (0) target = $region77
    $region76: #{tpu_custom_call.1} parent=1 // pred_region
      _
    $region77: #{tpu_custom_call.1} parent=1 // pred_fallthru
      _
    // Predicated region
    $region78: #{tpu_custom_call.1} parent=1 // pred_check
      _
    $region79: #{tpu_custom_call.1} parent=1 // pred_check_branch
      %211 = sbr.rel (0) target = $region81
    $region80: #{tpu_custom_call.1} parent=1 // pred_region
      _
    $region81: #{tpu_custom_call.1} parent=1 // pred_fallthru
      _
    // Predicated region
    $region82: #{tpu_custom_call.1} parent=1 // pred_check
      _
    $region83: #{tpu_custom_call.1} parent=1 // pred_check_branch
      %213 = sbr.rel (0) target = $region85
    $region84: #{tpu_custom_call.1} parent=1 // pred_region
      %215 = vsyncadd [#allocation18], 0
      %s216 = sshll.u32 %s41, 4
      %s217 = int_to_ptr.hbm [resolvable:$true] %s216
      %s218 = sshll.u32 [#allocation17], 4
      %s219 = int_to_ptr.vmem [resolvable:$true] %s218
      %224 = dma.hbm_to_vmem [thread:$0]  %s217, 1024, %s219, [#allocation18], 128, 128, 8
    $region85: #{tpu_custom_call.1} parent=1 // pred_fallthru
      _
    // Predicated region
    $region86: #{tpu_custom_call.1} parent=1 // pred_check
      _
    $region87: #{tpu_custom_call.1} parent=1 // pred_check_branch
      %226 = sbr.rel (0) target = $region89
    $region88: #{tpu_custom_call.1} parent=1 // pred_region
      _
    $region89: #{tpu_custom_call.1} parent=1 // pred_fallthru
      _
    // Predicated region
    $region90: #{tpu_custom_call.1} parent=1 // pred_check
      _
    $region91: #{tpu_custom_call.1} parent=1 // pred_check_branch
      %228 = sbr.rel (0) target = $region93
    $region92: #{tpu_custom_call.1} parent=1 // pred_region
      _
    $region93: #{tpu_custom_call.1} parent=1 // pred_fallthru
      _
    // Predicated region
    $region94: #{tpu_custom_call.1} parent=1 // pred_check
      _
    $region95: #{tpu_custom_call.1} parent=1 // pred_check_branch
      %230 = sbr.rel (0) target = $region97
    $region96: #{tpu_custom_call.1} parent=1 // pred_region
      _
    $region97: #{tpu_custom_call.1} parent=1 // pred_fallthru
      _
    // Predicated region
    $region98: #{tpu_custom_call.1} parent=1 // pred_check
      _
    $region99: #{tpu_custom_call.1} parent=1 // pred_check_branch
      %232 = sbr.rel (0) target = $region101
    $region100: #{tpu_custom_call.1} parent=1 // pred_region
      %234 = vsyncadd [#allocation18], 0
      %s235 = sshll.u32 %s49, 4
      %s236 = int_to_ptr.hbm [resolvable:$true] %s235
      %s237 = sshll.u32 [#allocation19], 4
      %s238 = int_to_ptr.vmem [resolvable:$true] %s237
      %243 = dma.hbm_to_vmem [thread:$0]  %s236, 1024, %s238, [#allocation18], 128, 128, 8
    $region101: #{tpu_custom_call.1} parent=1 // pred_fallthru
      _
    // Predicated region
    $region102: #{tpu_custom_call.1} parent=1 // pred_check
      _
    $region103: #{tpu_custom_call.1} parent=1 // pred_check_branch
      %245 = sbr.rel (0) target = $region105
    $region104: #{tpu_custom_call.1} parent=1 // pred_region
      _
    $region105: #{tpu_custom_call.1} parent=1 // pred_fallthru
      _
    // Predicated region
    $region106: #{tpu_custom_call.1} parent=1 // pred_check
      _
    $region107: #{tpu_custom_call.1} parent=1 // pred_check_branch
      %247 = sbr.rel (0) target = $region109
    $region108: #{tpu_custom_call.1} parent=1 // pred_region
      _
    $region109: #{tpu_custom_call.1} parent=1 // pred_fallthru
      _
    // Predicated region
    $region110: #{tpu_custom_call.1} parent=1 // pred_check
      _
    $region111: #{tpu_custom_call.1} parent=1 // pred_check_branch
      %249 = sbr.rel (0) target = $region113
    $region112: #{tpu_custom_call.1} parent=1 // pred_region
      _
    $region113: #{tpu_custom_call.1} parent=1 // pred_fallthru
      _
    // Predicated region
    $region114: #{tpu_custom_call.1} parent=1 // pred_check
      _
    $region115: #{tpu_custom_call.1} parent=1 // pred_check_branch
      %251 = sbr.rel (0) target = $region117
    $region116: #{tpu_custom_call.1} parent=1 // pred_region
      _
    $region117: #{tpu_custom_call.1} parent=1 // pred_fallthru
      _
    // Predicated region
    $region118: #{tpu_custom_call.1} parent=1 // pred_check
      _
    $region119: #{tpu_custom_call.1} parent=1 // pred_check_branch
      %253 = sbr.rel (0) target = $region121
    $region120: #{tpu_custom_call.1} parent=1 // pred_region
      _
    $region121: #{tpu_custom_call.1} parent=1 // pred_fallthru
      _
    // Predicated region
    $region122: #{tpu_custom_call.1} parent=1 // pred_check
      _
    $region123: #{tpu_custom_call.1} parent=1 // pred_check_branch
      %255 = sbr.rel (0) target = $region125
    $region124: #{tpu_custom_call.1} parent=1 // pred_region
      %257 = dma.done [#allocation3], 256
    $region125: #{tpu_custom_call.1} parent=1 // pred_fallthru
      _
    // Predicated region
    $region126: #{tpu_custom_call.1} parent=1 // pred_check
      _
    $region127: #{tpu_custom_call.1} parent=1 // pred_check_branch
      %259 = sbr.rel (0) target = $region129
    $region128: #{tpu_custom_call.1} parent=1 // pred_region
      %261 = dma.done [#allocation6], 256
    $region129: #{tpu_custom_call.1} parent=1 // pred_fallthru
      _
    // Predicated region
    $region130: #{tpu_custom_call.1} parent=1 // pred_check
      _
    $region131: #{tpu_custom_call.1} parent=1 // pred_check_branch
      %263 = sbr.rel (0) target = $region133
    $region132: #{tpu_custom_call.1} parent=1 // pred_region
      %265 = dma.done [#allocation6], 256
    $region133: #{tpu_custom_call.1} parent=1 // pred_fallthru
      _
    // Predicated region
    $region134: #{tpu_custom_call.1} parent=1 // pred_check
      _
    $region135: #{tpu_custom_call.1} parent=1 // pred_check_branch
      %267 = sbr.rel (0) target = $region137
    $region136: #{tpu_custom_call.1} parent=1 // pred_region
      %269 = dma.done [#allocation9], 256
    $region137: #{tpu_custom_call.1} parent=1 // pred_fallthru
      _
    // Predicated region
    $region138: #{tpu_custom_call.1} parent=1 // pred_check
      _
    $region139: #{tpu_custom_call.1} parent=1 // pred_check_branch
      %271 = sbr.rel (0) target = $region141
    $region140: #{tpu_custom_call.1} parent=1 // pred_region
      %273 = dma.done [#allocation9], 1024
    $region141: #{tpu_custom_call.1} parent=1 // pred_fallthru
      _
    // Predicated region
    $region142: #{tpu_custom_call.1} parent=1 // pred_check
      _
    $region143: #{tpu_custom_call.1} parent=1 // pred_check_branch
      %275 = sbr.rel (0) target = $region145
    $region144: #{tpu_custom_call.1} parent=1 // pred_region
      %277 = dma.done [#allocation12], 1024
    $region145: #{tpu_custom_call.1} parent=1 // pred_fallthru
      _
    // Predicated region
    $region146: #{tpu_custom_call.1} parent=1 // pred_check
      _
    $region147: #{tpu_custom_call.1} parent=1 // pred_check_branch
      %279 = sbr.rel (0) target = $region149
    $region148: #{tpu_custom_call.1} parent=1 // pred_region
      %281 = dma.done [#allocation12], 1024
    $region149: #{tpu_custom_call.1} parent=1 // pred_fallthru
      _
    // Predicated region
    $region150: #{tpu_custom_call.1} parent=1 // pred_check
      _
    $region151: #{tpu_custom_call.1} parent=1 // pred_check_branch
      %283 = sbr.rel (0) target = $region153
    $region152: #{tpu_custom_call.1} parent=1 // pred_region
      %285 = dma.done [#allocation15], 1024
    $region153: #{tpu_custom_call.1} parent=1 // pred_fallthru
      _
    // Predicated region
    $region154: #{tpu_custom_call.1} parent=1 // pred_check
      _
    $region155: #{tpu_custom_call.1} parent=1 // pred_check_branch
      %287 = sbr.rel (0) target = $region157
    $region156: #{tpu_custom_call.1} parent=1 // pred_region
      %289 = dma.done [#allocation15], 1024
    $region157: #{tpu_custom_call.1} parent=1 // pred_fallthru
      _
    // Predicated region
    $region158: #{tpu_custom_call.1} parent=1 // pred_check
      _
    $region159: #{tpu_custom_call.1} parent=1 // pred_check_branch
      %291 = sbr.rel (0) target = $region161
    $region160: #{tpu_custom_call.1} parent=1 // pred_region
      %293 = dma.done [#allocation18], 1024
    $region161: #{tpu_custom_call.1} parent=1 // pred_fallthru
      _
    // Predicated region
    $region162: #{tpu_custom_call.1} parent=1 // pred_check
      _
    $region163: #{tpu_custom_call.1} parent=1 // pred_check_branch
      %295 = sbr.rel (0) target = $region165
    $region164: #{tpu_custom_call.1} parent=1 // pred_region
      %297 = dma.done [#allocation18], 1024
    $region165: #{tpu_custom_call.1} parent=1 // pred_fallthru
      _
    %v298 = vld [vmem:[#allocation2] sm:$0xff]
    %v299 = vld [vmem:[#allocation2 + $0x8] sm:$0xff]
    %v300 = vld [vmem:[#allocation5] sm:$0xff]
    %v301 = vld [vmem:[#allocation5 + $0x8] sm:$0xff]
    %v302 = vld [vmem:[#allocation7] sm:$0xff]
    %v303 = vld [vmem:[#allocation7 + $0x8] sm:$0xff]
    %v304 = vld [vmem:[#allocation8] sm:$0xff]
    %v305 = vld [vmem:[#allocation8 + $0x8] sm:$0xff]
    %v306 = vld [vmem:[#allocation10] sm:$0xff]
    %v307 = vld [vmem:[#allocation10 + $0x8] sm:$0xff]
    %v308 = vld [vmem:[#allocation10 + $0x10] sm:$0xff]
    %v309 = vld [vmem:[#allocation10 + $0x18] sm:$0xff]
    %v310 = vld [vmem:[#allocation10 + $0x20] sm:$0xff]
    %v311 = vld [vmem:[#allocation10 + $0x28] sm:$0xff]
    %v312 = vld [vmem:[#allocation10 + $0x30] sm:$0xff]
    %v313 = vld [vmem:[#allocation10 + $0x38] sm:$0xff]
    %v314 = vld [vmem:[%s11] sm:$0x1]
    %v316 = vperm.slane %v314, 0
    %vm318 = vcmask 523264
    %v320 = vsel %vm318, %v298, 0
    %v323 = vsel %vm318, %v299, 0
    %325 = vmatpush.msra.mxu0 0.0
    %326 = vmatpush.msra.mxu0 0.0
    %327 = vmatpush.msra.mxu0 0.0
    %328 = vmatpush.msra.mxu0 0.0
    %329 = vmatpush.msra.mxu0 0.0
    %330 = vmatpush.msra.mxu0 0.0
    %331 = vmatpush.msra.mxu0 0.0
    %332 = vmatpush.msra.mxu0 0.0
    %333 = vmatpush.msra.mxu0 %v313
    %334 = vmatpush.msra.mxu0 %v312
    %335 = vmatpush.msra.mxu0 %v311
    %336 = vmatpush.msra.mxu0 %v310
    %337 = vmatpush.msra.mxu0 %v309
    %338 = vmatpush.msra.mxu0 %v308
    %339 = vmatpush.msra.mxu0 %v307
    %340 = vmatpush.msra.mxu0 %v306
    %341 = vmatmul.f32.gmra.mxu0 %v320
    %v342 = vpop.f32.mrf.mxu0
    %v343 = vadd.f32 %v316, %v342
    %344 = vmatmul.f32.gmra.mxu0 %v323
    %v345 = vpop.f32.mrf.mxu0
    %v346 = vadd.f32 %v316, %v345
    %347 = vdwg.mxu0
    %356 = vrot.lane.b32.xlu0 %v306, 96
    %v357 = vpop.permute.xlu0 %356
    %358 = vrot.lane.b32.xlu0 %v307, 96
    %v359 = vpop.permute.xlu0 %358
    %360 = vrot.lane.b32.xlu0 %v308, 96
    %v361 = vpop.permute.xlu0 %360
    %362 = vrot.lane.b32.xlu0 %v309, 96
    %v363 = vpop.permute.xlu0 %362
    %364 = vrot.lane.b32.xlu0 %v310, 96
    %v365 = vpop.permute.xlu0 %364
    %366 = vrot.lane.b32.xlu0 %v311, 96
    %v367 = vpop.permute.xlu0 %366
    %368 = vrot.lane.b32.xlu0 %v312, 96
    %v369 = vpop.permute.xlu0 %368
    %370 = vrot.lane.b32.xlu0 %v313, 96
    %v371 = vpop.permute.xlu0 %370
    %380 = vrot.lane.b32.xlu0 %v316, 96
    %v381 = vpop.permute.xlu0 %380
    %383 = vmatpush.msra.mxu0 0.0
    %384 = vmatpush.msra.mxu0 0.0
    %385 = vmatpush.msra.mxu0 0.0
    %386 = vmatpush.msra.mxu0 0.0
    %387 = vmatpush.msra.mxu0 0.0
    %388 = vmatpush.msra.mxu0 0.0
    %389 = vmatpush.msra.mxu0 0.0
    %390 = vmatpush.msra.mxu0 0.0
    %391 = vmatpush.msra.mxu0 %v371
    %392 = vmatpush.msra.mxu0 %v369
    %393 = vmatpush.msra.mxu0 %v367
    %394 = vmatpush.msra.mxu0 %v365
    %395 = vmatpush.msra.mxu0 %v363
    %396 = vmatpush.msra.mxu0 %v361
    %397 = vmatpush.msra.mxu0 %v359
    %398 = vmatpush.msra.mxu0 %v357
    %399 = vmatmul.f32.gmra.mxu0 %v320
    %v400 = vpop.f32.mrf.mxu0
    %v401 = vadd.f32 %v381, %v400
    %402 = vmatmul.f32.gmra.mxu0 %v323
    %v403 = vpop.f32.mrf.mxu0
    %v404 = vadd.f32 %v381, %v403
    %405 = vdwg.mxu0
    %v406 = vld [vmem:[#allocation11] sm:$0xff]
    %v407 = vld [vmem:[#allocation11 + $0x8] sm:$0xff]
    %v408 = vld [vmem:[#allocation11 + $0x10] sm:$0xff]
    %v409 = vld [vmem:[#allocation11 + $0x18] sm:$0xff]
    %v410 = vld [vmem:[#allocation11 + $0x20] sm:$0xff]
    %v411 = vld [vmem:[#allocation11 + $0x28] sm:$0xff]
    %v412 = vld [vmem:[#allocation11 + $0x30] sm:$0xff]
    %v413 = vld [vmem:[#allocation11 + $0x38] sm:$0xff]
    %v414 = vld [vmem:[%s15] sm:$0x1]
    %v416 = vperm.slane %v414, 0
    %418 = vmatpush.msra.mxu0 0.0
    %419 = vmatpush.msra.mxu0 0.0
    %420 = vmatpush.msra.mxu0 0.0
    %421 = vmatpush.msra.mxu0 0.0
    %422 = vmatpush.msra.mxu0 0.0
    %423 = vmatpush.msra.mxu0 0.0
    %424 = vmatpush.msra.mxu0 0.0
    %425 = vmatpush.msra.mxu0 0.0
    %426 = vmatpush.msra.mxu0 %v413
    %427 = vmatpush.msra.mxu0 %v412
    %428 = vmatpush.msra.mxu0 %v411
    %429 = vmatpush.msra.mxu0 %v410
    %430 = vmatpush.msra.mxu0 %v409
    %431 = vmatpush.msra.mxu0 %v408
    %432 = vmatpush.msra.mxu0 %v407
    %433 = vmatpush.msra.mxu0 %v406
    %434 = vmatmul.f32.gmra.mxu0 %v320
    %v435 = vpop.f32.mrf.mxu0
    %v436 = vadd.f32 %v416, %v435
    %437 = vmatmul.f32.gmra.mxu0 %v323
    %v438 = vpop.f32.mrf.mxu0
    %v439 = vadd.f32 %v416, %v438
    %440 = vdwg.mxu0
    %449 = vrot.lane.b32.xlu0 %v406, 96
    %v450 = vpop.permute.xlu0 %449
    %451 = vrot.lane.b32.xlu0 %v407, 96
    %v452 = vpop.permute.xlu0 %451
    %453 = vrot.lane.b32.xlu0 %v408, 96
    %v454 = vpop.permute.xlu0 %453
    %455 = vrot.lane.b32.xlu0 %v409, 96
    %v456 = vpop.permute.xlu0 %455
    %457 = vrot.lane.b32.xlu0 %v410, 96
    %v458 = vpop.permute.xlu0 %457
    %459 = vrot.lane.b32.xlu0 %v411, 96
    %v460 = vpop.permute.xlu0 %459
    %461 = vrot.lane.b32.xlu0 %v412, 96
    %v462 = vpop.permute.xlu0 %461
    %463 = vrot.lane.b32.xlu0 %v413, 96
    %v464 = vpop.permute.xlu0 %463
    %473 = vrot.lane.b32.xlu0 %v416, 96
    %v474 = vpop.permute.xlu0 %473
    %476 = vmatpush.msra.mxu0 0.0
    %477 = vmatpush.msra.mxu0 0.0
    %478 = vmatpush.msra.mxu0 0.0
    %479 = vmatpush.msra.mxu0 0.0
    %480 = vmatpush.msra.mxu0 0.0
    %481 = vmatpush.msra.mxu0 0.0
    %482 = vmatpush.msra.mxu0 0.0
    %483 = vmatpush.msra.mxu0 0.0
    %484 = vmatpush.msra.mxu0 %v464
    %485 = vmatpush.msra.mxu0 %v462
    %486 = vmatpush.msra.mxu0 %v460
    %487 = vmatpush.msra.mxu0 %v458
    %488 = vmatpush.msra.mxu0 %v456
    %489 = vmatpush.msra.mxu0 %v454
    %490 = vmatpush.msra.mxu0 %v452
    %491 = vmatpush.msra.mxu0 %v450
    %492 = vmatmul.f32.gmra.mxu0 %v320
    %v493 = vpop.f32.mrf.mxu0
    %v494 = vadd.f32 %v474, %v493
    %495 = vmatmul.f32.gmra.mxu0 %v323
    %v496 = vpop.f32.mrf.mxu0
    %v497 = vadd.f32 %v474, %v496
    %498 = vdwg.mxu0
    %v499 = vld [vmem:[#allocation13] sm:$0xff]
    %v500 = vld [vmem:[#allocation13 + $0x8] sm:$0xff]
    %v501 = vld [vmem:[#allocation13 + $0x10] sm:$0xff]
    %v502 = vld [vmem:[#allocation13 + $0x18] sm:$0xff]
    %v503 = vld [vmem:[#allocation13 + $0x20] sm:$0xff]
    %v504 = vld [vmem:[#allocation13 + $0x28] sm:$0xff]
    %v505 = vld [vmem:[#allocation13 + $0x30] sm:$0xff]
    %v506 = vld [vmem:[#allocation13 + $0x38] sm:$0xff]
    %v507 = vld [vmem:[%s19] sm:$0x1]
    %v509 = vperm.slane %v507, 0
    %511 = vmatpush.msra.mxu0 0.0
    %512 = vmatpush.msra.mxu0 0.0
    %513 = vmatpush.msra.mxu0 0.0
    %514 = vmatpush.msra.mxu0 0.0
    %515 = vmatpush.msra.mxu0 0.0
    %516 = vmatpush.msra.mxu0 0.0
    %517 = vmatpush.msra.mxu0 0.0
    %518 = vmatpush.msra.mxu0 0.0
    %519 = vmatpush.msra.mxu0 %v506
    %520 = vmatpush.msra.mxu0 %v505
    %521 = vmatpush.msra.mxu0 %v504
    %522 = vmatpush.msra.mxu0 %v503
    %523 = vmatpush.msra.mxu0 %v502
    %524 = vmatpush.msra.mxu0 %v501
    %525 = vmatpush.msra.mxu0 %v500
    %526 = vmatpush.msra.mxu0 %v499
    %527 = vmatmul.f32.gmra.mxu0 %v320
    %v528 = vpop.f32.mrf.mxu0
    %v529 = vadd.f32 %v509, %v528
    %530 = vmatmul.f32.gmra.mxu0 %v323
    %v531 = vpop.f32.mrf.mxu0
    %v532 = vadd.f32 %v509, %v531
    %533 = vdwg.mxu0
    %542 = vrot.lane.b32.xlu0 %v499, 96
    %v543 = vpop.permute.xlu0 %542
    %544 = vrot.lane.b32.xlu0 %v500, 96
    %v545 = vpop.permute.xlu0 %544
    %546 = vrot.lane.b32.xlu0 %v501, 96
    %v547 = vpop.permute.xlu0 %546
    %548 = vrot.lane.b32.xlu0 %v502, 96
    %v549 = vpop.permute.xlu0 %548
    %550 = vrot.lane.b32.xlu0 %v503, 96
    %v551 = vpop.permute.xlu0 %550
    %552 = vrot.lane.b32.xlu0 %v504, 96
    %v553 = vpop.permute.xlu0 %552
    %554 = vrot.lane.b32.xlu0 %v505, 96
    %v555 = vpop.permute.xlu0 %554
    %556 = vrot.lane.b32.xlu0 %v506, 96
    %v557 = vpop.permute.xlu0 %556
    %566 = vrot.lane.b32.xlu0 %v509, 96
    %v567 = vpop.permute.xlu0 %566
    %569 = vmatpush.msra.mxu0 0.0
    %570 = vmatpush.msra.mxu0 0.0
    %571 = vmatpush.msra.mxu0 0.0
    %572 = vmatpush.msra.mxu0 0.0
    %573 = vmatpush.msra.mxu0 0.0
    %574 = vmatpush.msra.mxu0 0.0
    %575 = vmatpush.msra.mxu0 0.0
    %576 = vmatpush.msra.mxu0 0.0
    %577 = vmatpush.msra.mxu0 %v557
    %578 = vmatpush.msra.mxu0 %v555
    %579 = vmatpush.msra.mxu0 %v553
    %580 = vmatpush.msra.mxu0 %v551
    %581 = vmatpush.msra.mxu0 %v549
    %582 = vmatpush.msra.mxu0 %v547
    %583 = vmatpush.msra.mxu0 %v545
    %584 = vmatpush.msra.mxu0 %v543
    %585 = vmatmul.f32.gmra.mxu0 %v320
    %v586 = vpop.f32.mrf.mxu0
    %v587 = vadd.f32 %v567, %v586
    %588 = vmatmul.f32.gmra.mxu0 %v323
    %v589 = vpop.f32.mrf.mxu0
    %v590 = vadd.f32 %v567, %v589
    %591 = vdwg.mxu0
    %vm592 = vcmask 64512
    %v594 = vsel %vm592, %v343, 0
    %v597 = vsel %vm592, %v401, 0
    %v600 = vsel %vm592, %v436, 0
    %v603 = vsel %vm592, %v494, 0
    %605 = vmatpush.xpose.msra.mxu0 0.0
    %606 = vmatpush.xpose.msra.mxu0 0.0
    %607 = vmatpush.xpose.msra.mxu0 0.0
    %608 = vmatpush.xpose.msra.mxu0 0.0
    %609 = vmatpush.xpose.msra.mxu0 0.0
    %610 = vmatpush.xpose.msra.mxu0 0.0
    %611 = vmatpush.xpose.msra.mxu0 0.0
    %612 = vmatpush.xpose.msra.mxu0 0.0
    %613 = vmatpush.xpose.msra.mxu0 0.0
    %614 = vmatpush.xpose.msra.mxu0 0.0
    %615 = vmatpush.xpose.msra.mxu0 0.0
    %616 = vmatpush.xpose.msra.mxu0 0.0
    %617 = vmatpush.xpose.msra.mxu0 0.0
    %618 = vmatpush.xpose.msra.mxu0 0.0
    %619 = vmatpush.xpose.msra.mxu0 %v603
    %620 = vmatpush.xpose.msra.mxu0 %v600
    %621 = vmatmul.f32.gmra.mxu0 %v594
    %v622 = vpop.f32.mrf.mxu0
    %v623 = vadd.f32 %v304, %v622
    %624 = vmatmul.f32.gmra.mxu0 %v597
    %v625 = vpop.f32.mrf.mxu0
    %v626 = vadd.f32 %v305, %v625
    %627 = vdwg.mxu0
    %vm628 = vcmask 130048
    %v629 = vsel %vm628, %v623, -inf
    %630 = vmax.xlane.f32.xlu0 %v629
    %v631 = vpop.xlane.xlu0 %630
    %v632 = vsel %vm628, %v626, -inf
    %633 = vmax.xlane.f32.xlu0 %v632
    %v634 = vpop.xlane.xlu0 %633
    %v635 = vsub.f32 %v623, %v631
    %v636 = vsub.f32 %v626, %v634
    %v637 = vmul.f32 %v635, 1.442695
    %v638 = vpow.pop %v637
    %v639 = vmul.f32 %v636, 1.442695
    %v640 = vpow.pop %v639
    %v641 = vsel %vm628, %v638, 0.0
    %642 = vadd.xlane.f32.xlu0 %v641
    %v643 = vpop.xlane.xlu0 %642
    %v644 = vsel %vm628, %v640, 0.0
    %645 = vadd.xlane.f32.xlu0 %v644
    %v646 = vpop.xlane.xlu0 %645
    %v647 = vrcp.pop %v643
    %v648 = vrcp.pop %v646
    %v649 = vmul.f32 %v638, %v647
    %v650 = vmul.f32 %v640, %v648
    %v652 = vsel %vm628, %v649, 0
    %v655 = vsel %vm628, %v650, 0
    %657 = vmatpush.msra.mxu0 0.0
    %658 = vmatpush.msra.mxu0 0.0
    %659 = vmatpush.msra.mxu0 0.0
    %660 = vmatpush.msra.mxu0 0.0
    %661 = vmatpush.msra.mxu0 0.0
    %662 = vmatpush.msra.mxu0 0.0
    %663 = vmatpush.msra.mxu0 0.0
    %664 = vmatpush.msra.mxu0 0.0
    %665 = vmatpush.msra.mxu0 0.0
    %666 = vmatpush.msra.mxu0 0.0
    %667 = vmatpush.msra.mxu0 0.0
    %668 = vmatpush.msra.mxu0 0.0
    %669 = vmatpush.msra.mxu0 0.0
    %670 = vmatpush.msra.mxu0 0.0
    %671 = vmatpush.msra.mxu0 %v587
    %672 = vmatpush.msra.mxu0 %v529
    %673 = vmatmul.f32.gmra.mxu0 %v652
    %v674 = vpop.f32.mrf.mxu0
    %v675 = vadd.f32 0.0, %v674
    %676 = vmatmul.f32.gmra.mxu0 %v655
    %v677 = vpop.f32.mrf.mxu0
    %v678 = vadd.f32 0.0, %v677
    %679 = vdwg.mxu0
    %680 = vrot.lane.b32.xlu0 %v343, 120
    %v681 = vpop.permute.xlu0 %680
    %682 = vrot.lane.b32.xlu0 %v401, 120
    %v683 = vpop.permute.xlu0 %682
    %684 = vrot.lane.b32.xlu0 %v436, 120
    %v685 = vpop.permute.xlu0 %684
    %686 = vrot.lane.b32.xlu0 %v494, 120
    %v687 = vpop.permute.xlu0 %686
    %v688 = vsel %vm592, %v681, 0
    %v690 = vsel %vm592, %v683, 0
    %v692 = vsel %vm592, %v685, 0
    %v694 = vsel %vm592, %v687, 0
    %696 = vmatpush.xpose.msra.mxu0 0.0
    %697 = vmatpush.xpose.msra.mxu0 0.0
    %698 = vmatpush.xpose.msra.mxu0 0.0
    %699 = vmatpush.xpose.msra.mxu0 0.0
    %700 = vmatpush.xpose.msra.mxu0 0.0
    %701 = vmatpush.xpose.msra.mxu0 0.0
    %702 = vmatpush.xpose.msra.mxu0 0.0
    %703 = vmatpush.xpose.msra.mxu0 0.0
    %704 = vmatpush.xpose.msra.mxu0 0.0
    %705 = vmatpush.xpose.msra.mxu0 0.0
    %706 = vmatpush.xpose.msra.mxu0 0.0
    %707 = vmatpush.xpose.msra.mxu0 0.0
    %708 = vmatpush.xpose.msra.mxu0 0.0
    %709 = vmatpush.xpose.msra.mxu0 0.0
    %710 = vmatpush.xpose.msra.mxu0 %v694
    %711 = vmatpush.xpose.msra.mxu0 %v692
    %712 = vmatmul.f32.gmra.mxu0 %v688
    %v713 = vpop.f32.mrf.mxu0
    %v714 = vadd.f32 %v304, %v713
    %715 = vmatmul.f32.gmra.mxu0 %v690
    %v716 = vpop.f32.mrf.mxu0
    %v717 = vadd.f32 %v305, %v716
    %718 = vdwg.mxu0
    %v719 = vsel %vm628, %v714, -inf
    %720 = vmax.xlane.f32.xlu0 %v719
    %v721 = vpop.xlane.xlu0 %720
    %v722 = vsel %vm628, %v717, -inf
    %723 = vmax.xlane.f32.xlu0 %v722
    %v724 = vpop.xlane.xlu0 %723
    %v725 = vsub.f32 %v714, %v721
    %v726 = vsub.f32 %v717, %v724
    %v727 = vmul.f32 %v725, 1.442695
    %v728 = vpow.pop %v727
    %v729 = vmul.f32 %v726, 1.442695
    %v730 = vpow.pop %v729
    %v731 = vsel %vm628, %v728, 0.0
    %732 = vadd.xlane.f32.xlu0 %v731
    %v733 = vpop.xlane.xlu0 %732
    %v734 = vsel %vm628, %v730, 0.0
    %735 = vadd.xlane.f32.xlu0 %v734
    %v736 = vpop.xlane.xlu0 %735
    %v737 = vrcp.pop %v733
    %v738 = vrcp.pop %v736
    %v739 = vmul.f32 %v728, %v737
    %v740 = vmul.f32 %v730, %v738
    %743 = vrot.lane.b32.xlu0 %v529, 120
    %v744 = vpop.permute.xlu0 %743
    %745 = vrot.lane.b32.xlu0 %v587, 120
    %v746 = vpop.permute.xlu0 %745
    %v750 = vsel %vm628, %v739, 0
    %v753 = vsel %vm628, %v740, 0
    %755 = vmatpush.msra.mxu0 0.0
    %756 = vmatpush.msra.mxu0 0.0
    %757 = vmatpush.msra.mxu0 0.0
    %758 = vmatpush.msra.mxu0 0.0
    %759 = vmatpush.msra.mxu0 0.0
    %760 = vmatpush.msra.mxu0 0.0
    %761 = vmatpush.msra.mxu0 0.0
    %762 = vmatpush.msra.mxu0 0.0
    %763 = vmatpush.msra.mxu0 0.0
    %764 = vmatpush.msra.mxu0 0.0
    %765 = vmatpush.msra.mxu0 0.0
    %766 = vmatpush.msra.mxu0 0.0
    %767 = vmatpush.msra.mxu0 0.0
    %768 = vmatpush.msra.mxu0 0.0
    %769 = vmatpush.msra.mxu0 %v746
    %770 = vmatpush.msra.mxu0 %v744
    %771 = vmatmul.f32.gmra.mxu0 %v750
    %v772 = vpop.f32.mrf.mxu0
    %v773 = vadd.f32 0.0, %v772
    %774 = vmatmul.f32.gmra.mxu0 %v753
    %v775 = vpop.f32.mrf.mxu0
    %v776 = vadd.f32 0.0, %v775
    %777 = vdwg.mxu0
    %778 = vrot.lane.b32.xlu0 %v343, 112
    %v779 = vpop.permute.xlu0 %778
    %780 = vrot.lane.b32.xlu0 %v401, 112
    %v781 = vpop.permute.xlu0 %780
    %782 = vrot.lane.b32.xlu0 %v436, 112
    %v783 = vpop.permute.xlu0 %782
    %784 = vrot.lane.b32.xlu0 %v494, 112
    %v785 = vpop.permute.xlu0 %784
    %v786 = vsel %vm592, %v779, 0
    %v788 = vsel %vm592, %v781, 0
    %v790 = vsel %vm592, %v783, 0
    %v792 = vsel %vm592, %v785, 0
    %794 = vmatpush.xpose.msra.mxu0 0.0
    %795 = vmatpush.xpose.msra.mxu0 0.0
    %796 = vmatpush.xpose.msra.mxu0 0.0
    %797 = vmatpush.xpose.msra.mxu0 0.0
    %798 = vmatpush.xpose.msra.mxu0 0.0
    %799 = vmatpush.xpose.msra.mxu0 0.0
    %800 = vmatpush.xpose.msra.mxu0 0.0
    %801 = vmatpush.xpose.msra.mxu0 0.0
    %802 = vmatpush.xpose.msra.mxu0 0.0
    %803 = vmatpush.xpose.msra.mxu0 0.0
    %804 = vmatpush.xpose.msra.mxu0 0.0
    %805 = vmatpush.xpose.msra.mxu0 0.0
    %806 = vmatpush.xpose.msra.mxu0 0.0
    %807 = vmatpush.xpose.msra.mxu0 0.0
    %808 = vmatpush.xpose.msra.mxu0 %v792
    %809 = vmatpush.xpose.msra.mxu0 %v790
    %810 = vmatmul.f32.gmra.mxu0 %v786
    %v811 = vpop.f32.mrf.mxu0
    %v812 = vadd.f32 %v304, %v811
    %813 = vmatmul.f32.gmra.mxu0 %v788
    %v814 = vpop.f32.mrf.mxu0
    %v815 = vadd.f32 %v305, %v814
    %816 = vdwg.mxu0
    %v817 = vsel %vm628, %v812, -inf
    %818 = vmax.xlane.f32.xlu0 %v817
    %v819 = vpop.xlane.xlu0 %818
    %v820 = vsel %vm628, %v815, -inf
    %821 = vmax.xlane.f32.xlu0 %v820
    %v822 = vpop.xlane.xlu0 %821
    %v823 = vsub.f32 %v812, %v819
    %v824 = vsub.f32 %v815, %v822
    %v825 = vmul.f32 %v823, 1.442695
    %v826 = vpow.pop %v825
    %v827 = vmul.f32 %v824, 1.442695
    %v828 = vpow.pop %v827
    %v829 = vsel %vm628, %v826, 0.0
    %830 = vadd.xlane.f32.xlu0 %v829
    %v831 = vpop.xlane.xlu0 %830
    %v832 = vsel %vm628, %v828, 0.0
    %833 = vadd.xlane.f32.xlu0 %v832
    %v834 = vpop.xlane.xlu0 %833
    %v835 = vrcp.pop %v831
    %v836 = vrcp.pop %v834
    %v837 = vmul.f32 %v826, %v835
    %v838 = vmul.f32 %v828, %v836
    %839 = vrot.lane.b32.xlu0 %v529, 112
    %v840 = vpop.permute.xlu0 %839
    %841 = vrot.lane.b32.xlu0 %v587, 112
    %v842 = vpop.permute.xlu0 %841
    %v846 = vsel %vm628, %v837, 0
    %v849 = vsel %vm628, %v838, 0
    %851 = vmatpush.msra.mxu0 0.0
    %852 = vmatpush.msra.mxu0 0.0
    %853 = vmatpush.msra.mxu0 0.0
    %854 = vmatpush.msra.mxu0 0.0
    %855 = vmatpush.msra.mxu0 0.0
    %856 = vmatpush.msra.mxu0 0.0
    %857 = vmatpush.msra.mxu0 0.0
    %858 = vmatpush.msra.mxu0 0.0
    %859 = vmatpush.msra.mxu0 0.0
    %860 = vmatpush.msra.mxu0 0.0
    %861 = vmatpush.msra.mxu0 0.0
    %862 = vmatpush.msra.mxu0 0.0
    %863 = vmatpush.msra.mxu0 0.0
    %864 = vmatpush.msra.mxu0 0.0
    %865 = vmatpush.msra.mxu0 %v842
    %866 = vmatpush.msra.mxu0 %v840
    %867 = vmatmul.f32.gmra.mxu0 %v846
    %v868 = vpop.f32.mrf.mxu0
    %v869 = vadd.f32 0.0, %v868
    %870 = vmatmul.f32.gmra.mxu0 %v849
    %v871 = vpop.f32.mrf.mxu0
    %v872 = vadd.f32 0.0, %v871
    %873 = vdwg.mxu0
    %874 = vrot.lane.b32.xlu0 %v343, 104
    %v875 = vpop.permute.xlu0 %874
    %876 = vrot.lane.b32.xlu0 %v401, 104
    %v877 = vpop.permute.xlu0 %876
    %878 = vrot.lane.b32.xlu0 %v436, 104
    %v879 = vpop.permute.xlu0 %878
    %880 = vrot.lane.b32.xlu0 %v494, 104
    %v881 = vpop.permute.xlu0 %880
    %v882 = vsel %vm592, %v875, 0
    %v884 = vsel %vm592, %v877, 0
    %v886 = vsel %vm592, %v879, 0
    %v888 = vsel %vm592, %v881, 0
    %890 = vmatpush.xpose.msra.mxu0 0.0
    %891 = vmatpush.xpose.msra.mxu0 0.0
    %892 = vmatpush.xpose.msra.mxu0 0.0
    %893 = vmatpush.xpose.msra.mxu0 0.0
    %894 = vmatpush.xpose.msra.mxu0 0.0
    %895 = vmatpush.xpose.msra.mxu0 0.0
    %896 = vmatpush.xpose.msra.mxu0 0.0
    %897 = vmatpush.xpose.msra.mxu0 0.0
    %898 = vmatpush.xpose.msra.mxu0 0.0
    %899 = vmatpush.xpose.msra.mxu0 0.0
    %900 = vmatpush.xpose.msra.mxu0 0.0
    %901 = vmatpush.xpose.msra.mxu0 0.0
    %902 = vmatpush.xpose.msra.mxu0 0.0
    %903 = vmatpush.xpose.msra.mxu0 0.0
    %904 = vmatpush.xpose.msra.mxu0 %v888
    %905 = vmatpush.xpose.msra.mxu0 %v886
    %906 = vmatmul.f32.gmra.mxu0 %v882
    %v907 = vpop.f32.mrf.mxu0
    %v908 = vadd.f32 %v304, %v907
    %909 = vmatmul.f32.gmra.mxu0 %v884
    %v910 = vpop.f32.mrf.mxu0
    %v911 = vadd.f32 %v305, %v910
    %912 = vdwg.mxu0
    %v913 = vsel %vm628, %v908, -inf
    %914 = vmax.xlane.f32.xlu0 %v913
    %v915 = vpop.xlane.xlu0 %914
    %v916 = vsel %vm628, %v911, -inf
    %917 = vmax.xlane.f32.xlu0 %v916
    %v918 = vpop.xlane.xlu0 %917
    %v919 = vsub.f32 %v908, %v915
    %v920 = vsub.f32 %v911, %v918
    %v921 = vmul.f32 %v919, 1.442695
    %v922 = vpow.pop %v921
    %v923 = vmul.f32 %v920, 1.442695
    %v924 = vpow.pop %v923
    %v925 = vsel %vm628, %v922, 0.0
    %926 = vadd.xlane.f32.xlu0 %v925
    %v927 = vpop.xlane.xlu0 %926
    %v928 = vsel %vm628, %v924, 0.0
    %929 = vadd.xlane.f32.xlu0 %v928
    %v930 = vpop.xlane.xlu0 %929
    %v931 = vrcp.pop %v927
    %v932 = vrcp.pop %v930
    %v933 = vmul.f32 %v922, %v931
    %v934 = vmul.f32 %v924, %v932
    %935 = vrot.lane.b32.xlu0 %v529, 104
    %v936 = vpop.permute.xlu0 %935
    %937 = vrot.lane.b32.xlu0 %v587, 104
    %v938 = vpop.permute.xlu0 %937
    %v942 = vsel %vm628, %v933, 0
    %v945 = vsel %vm628, %v934, 0
    %947 = vmatpush.msra.mxu0 0.0
    %948 = vmatpush.msra.mxu0 0.0
    %949 = vmatpush.msra.mxu0 0.0
    %950 = vmatpush.msra.mxu0 0.0
    %951 = vmatpush.msra.mxu0 0.0
    %952 = vmatpush.msra.mxu0 0.0
    %953 = vmatpush.msra.mxu0 0.0
    %954 = vmatpush.msra.mxu0 0.0
    %955 = vmatpush.msra.mxu0 0.0
    %956 = vmatpush.msra.mxu0 0.0
    %957 = vmatpush.msra.mxu0 0.0
    %958 = vmatpush.msra.mxu0 0.0
    %959 = vmatpush.msra.mxu0 0.0
    %960 = vmatpush.msra.mxu0 0.0
    %961 = vmatpush.msra.mxu0 %v938
    %962 = vmatpush.msra.mxu0 %v936
    %963 = vmatmul.f32.gmra.mxu0 %v942
    %v964 = vpop.f32.mrf.mxu0
    %v965 = vadd.f32 0.0, %v964
    %966 = vmatmul.f32.gmra.mxu0 %v945
    %v967 = vpop.f32.mrf.mxu0
    %v968 = vadd.f32 0.0, %v967
    %969 = vdwg.mxu0
    %972 = vrot.lane.b32.xlu0 %v773, 8
    %v973 = vpop.permute.xlu0 %972
    %974 = vrot.lane.b32.xlu0 %v776, 8
    %v975 = vpop.permute.xlu0 %974
    %980 = vrot.lane.b32.xlu0 %v869, 16
    %v981 = vpop.permute.xlu0 %980
    %982 = vrot.lane.b32.xlu0 %v872, 16
    %v983 = vpop.permute.xlu0 %982
    %988 = vrot.lane.b32.xlu0 %v965, 24
    %v989 = vpop.permute.xlu0 %988
    %990 = vrot.lane.b32.xlu0 %v968, 24
    %v991 = vpop.permute.xlu0 %990
    %v994 = vsel %vm592, %v675, %v973
    %v995 = vsel %vm592, %v678, %v975
    %v996 = vsel %vm628, %v994, %v981
    %v997 = vsel %vm628, %v995, %v983
    %vm998 = vcmask 195584
    %v999 = vsel %vm998, %v996, %v989
    %v1000 = vsel %vm998, %v997, %v991
    %1002 = vrot.lane.b32.xlu0 %v1000, 32
    %v1003 = vpop.permute.xlu0 %1002
    %vm1005 = vcmask 261120
    %v1006 = vsel %vm1005, %v999, %v1003
    %v1008 = vsel %vm592, %v346, 0
    %v1011 = vsel %vm592, %v404, 0
    %v1014 = vsel %vm592, %v439, 0
    %v1017 = vsel %vm592, %v497, 0
    %1019 = vmatpush.xpose.msra.mxu0 0.0
    %1020 = vmatpush.xpose.msra.mxu0 0.0
    %1021 = vmatpush.xpose.msra.mxu0 0.0
    %1022 = vmatpush.xpose.msra.mxu0 0.0
    %1023 = vmatpush.xpose.msra.mxu0 0.0
    %1024 = vmatpush.xpose.msra.mxu0 0.0
    %1025 = vmatpush.xpose.msra.mxu0 0.0
    %1026 = vmatpush.xpose.msra.mxu0 0.0
    %1027 = vmatpush.xpose.msra.mxu0 0.0
    %1028 = vmatpush.xpose.msra.mxu0 0.0
    %1029 = vmatpush.xpose.msra.mxu0 0.0
    %1030 = vmatpush.xpose.msra.mxu0 0.0
    %1031 = vmatpush.xpose.msra.mxu0 0.0
    %1032 = vmatpush.xpose.msra.mxu0 0.0
    %1033 = vmatpush.xpose.msra.mxu0 %v1017
    %1034 = vmatpush.xpose.msra.mxu0 %v1014
    %1035 = vmatmul.f32.gmra.mxu0 %v1008
    %v1036 = vpop.f32.mrf.mxu0
    %v1037 = vadd.f32 %v304, %v1036
    %1038 = vmatmul.f32.gmra.mxu0 %v1011
    %v1039 = vpop.f32.mrf.mxu0
    %v1040 = vadd.f32 %v305, %v1039
    %1041 = vdwg.mxu0
    %v1042 = vsel %vm628, %v1037, -inf
    %1043 = vmax.xlane.f32.xlu0 %v1042
    %v1044 = vpop.xlane.xlu0 %1043
    %v1045 = vsel %vm628, %v1040, -inf
    %1046 = vmax.xlane.f32.xlu0 %v1045
    %v1047 = vpop.xlane.xlu0 %1046
    %v1048 = vsub.f32 %v1037, %v1044
    %v1049 = vsub.f32 %v1040, %v1047
    %v1050 = vmul.f32 %v1048, 1.442695
    %v1051 = vpow.pop %v1050
    %v1052 = vmul.f32 %v1049, 1.442695
    %v1053 = vpow.pop %v1052
    %v1054 = vsel %vm628, %v1051, 0.0
    %1055 = vadd.xlane.f32.xlu0 %v1054
    %v1056 = vpop.xlane.xlu0 %1055
    %v1057 = vsel %vm628, %v1053, 0.0
    %1058 = vadd.xlane.f32.xlu0 %v1057
    %v1059 = vpop.xlane.xlu0 %1058
    %v1060 = vrcp.pop %v1056
    %v1061 = vrcp.pop %v1059
    %v1062 = vmul.f32 %v1051, %v1060
    %v1063 = vmul.f32 %v1053, %v1061
    %v1065 = vsel %vm628, %v1062, 0
    %v1068 = vsel %vm628, %v1063, 0
    %1070 = vmatpush.msra.mxu0 0.0
    %1071 = vmatpush.msra.mxu0 0.0
    %1072 = vmatpush.msra.mxu0 0.0
    %1073 = vmatpush.msra.mxu0 0.0
    %1074 = vmatpush.msra.mxu0 0.0
    %1075 = vmatpush.msra.mxu0 0.0
    %1076 = vmatpush.msra.mxu0 0.0
    %1077 = vmatpush.msra.mxu0 0.0
    %1078 = vmatpush.msra.mxu0 0.0
    %1079 = vmatpush.msra.mxu0 0.0
    %1080 = vmatpush.msra.mxu0 0.0
    %1081 = vmatpush.msra.mxu0 0.0
    %1082 = vmatpush.msra.mxu0 0.0
    %1083 = vmatpush.msra.mxu0 0.0
    %1084 = vmatpush.msra.mxu0 %v590
    %1085 = vmatpush.msra.mxu0 %v532
    %1086 = vmatmul.f32.gmra.mxu0 %v1065
    %v1087 = vpop.f32.mrf.mxu0
    %v1088 = vadd.f32 0.0, %v1087
    %1089 = vmatmul.f32.gmra.mxu0 %v1068
    %v1090 = vpop.f32.mrf.mxu0
    %v1091 = vadd.f32 0.0, %v1090
    %1092 = vdwg.mxu0
    %1093 = vrot.lane.b32.xlu0 %v346, 120
    %v1094 = vpop.permute.xlu0 %1093
    %1095 = vrot.lane.b32.xlu0 %v404, 120
    %v1096 = vpop.permute.xlu0 %1095
    %1097 = vrot.lane.b32.xlu0 %v439, 120
    %v1098 = vpop.permute.xlu0 %1097
    %1099 = vrot.lane.b32.xlu0 %v497, 120
    %v1100 = vpop.permute.xlu0 %1099
    %v1101 = vsel %vm592, %v1094, 0
    %v1103 = vsel %vm592, %v1096, 0
    %v1105 = vsel %vm592, %v1098, 0
    %v1107 = vsel %vm592, %v1100, 0
    %1109 = vmatpush.xpose.msra.mxu0 0.0
    %1110 = vmatpush.xpose.msra.mxu0 0.0
    %1111 = vmatpush.xpose.msra.mxu0 0.0
    %1112 = vmatpush.xpose.msra.mxu0 0.0
    %1113 = vmatpush.xpose.msra.mxu0 0.0
    %1114 = vmatpush.xpose.msra.mxu0 0.0
    %1115 = vmatpush.xpose.msra.mxu0 0.0
    %1116 = vmatpush.xpose.msra.mxu0 0.0
    %1117 = vmatpush.xpose.msra.mxu0 0.0
    %1118 = vmatpush.xpose.msra.mxu0 0.0
    %1119 = vmatpush.xpose.msra.mxu0 0.0
    %1120 = vmatpush.xpose.msra.mxu0 0.0
    %1121 = vmatpush.xpose.msra.mxu0 0.0
    %1122 = vmatpush.xpose.msra.mxu0 0.0
    %1123 = vmatpush.xpose.msra.mxu0 %v1107
    %1124 = vmatpush.xpose.msra.mxu0 %v1105
    %1125 = vmatmul.f32.gmra.mxu0 %v1101
    %v1126 = vpop.f32.mrf.mxu0
    %v1127 = vadd.f32 %v304, %v1126
    %1128 = vmatmul.f32.gmra.mxu0 %v1103
    %v1129 = vpop.f32.mrf.mxu0
    %v1130 = vadd.f32 %v305, %v1129
    %1131 = vdwg.mxu0
    %v1132 = vsel %vm628, %v1127, -inf
    %1133 = vmax.xlane.f32.xlu0 %v1132
    %v1134 = vpop.xlane.xlu0 %1133
    %v1135 = vsel %vm628, %v1130, -inf
    %1136 = vmax.xlane.f32.xlu0 %v1135
    %v1137 = vpop.xlane.xlu0 %1136
    %v1138 = vsub.f32 %v1127, %v1134
    %v1139 = vsub.f32 %v1130, %v1137
    %v1140 = vmul.f32 %v1138, 1.442695
    %v1141 = vpow.pop %v1140
    %v1142 = vmul.f32 %v1139, 1.442695
    %v1143 = vpow.pop %v1142
    %v1144 = vsel %vm628, %v1141, 0.0
    %1145 = vadd.xlane.f32.xlu0 %v1144
    %v1146 = vpop.xlane.xlu0 %1145
    %v1147 = vsel %vm628, %v1143, 0.0
    %1148 = vadd.xlane.f32.xlu0 %v1147
    %v1149 = vpop.xlane.xlu0 %1148
    %v1150 = vrcp.pop %v1146
    %v1151 = vrcp.pop %v1149
    %v1152 = vmul.f32 %v1141, %v1150
    %v1153 = vmul.f32 %v1143, %v1151
    %1156 = vrot.lane.b32.xlu0 %v532, 120
    %v1157 = vpop.permute.xlu0 %1156
    %1158 = vrot.lane.b32.xlu0 %v590, 120
    %v1159 = vpop.permute.xlu0 %1158
    %v1163 = vsel %vm628, %v1152, 0
    %v1166 = vsel %vm628, %v1153, 0
    %1168 = vmatpush.msra.mxu0 0.0
    %1169 = vmatpush.msra.mxu0 0.0
    %1170 = vmatpush.msra.mxu0 0.0
    %1171 = vmatpush.msra.mxu0 0.0
    %1172 = vmatpush.msra.mxu0 0.0
    %1173 = vmatpush.msra.mxu0 0.0
    %1174 = vmatpush.msra.mxu0 0.0
    %1175 = vmatpush.msra.mxu0 0.0
    %1176 = vmatpush.msra.mxu0 0.0
    %1177 = vmatpush.msra.mxu0 0.0
    %1178 = vmatpush.msra.mxu0 0.0
    %1179 = vmatpush.msra.mxu0 0.0
    %1180 = vmatpush.msra.mxu0 0.0
    %1181 = vmatpush.msra.mxu0 0.0
    %1182 = vmatpush.msra.mxu0 %v1159
    %1183 = vmatpush.msra.mxu0 %v1157
    %1184 = vmatmul.f32.gmra.mxu0 %v1163
    %v1185 = vpop.f32.mrf.mxu0
    %v1186 = vadd.f32 0.0, %v1185
    %1187 = vmatmul.f32.gmra.mxu0 %v1166
    %v1188 = vpop.f32.mrf.mxu0
    %v1189 = vadd.f32 0.0, %v1188
    %1190 = vdwg.mxu0
    %1191 = vrot.lane.b32.xlu0 %v346, 112
    %v1192 = vpop.permute.xlu0 %1191
    %1193 = vrot.lane.b32.xlu0 %v404, 112
    %v1194 = vpop.permute.xlu0 %1193
    %1195 = vrot.lane.b32.xlu0 %v439, 112
    %v1196 = vpop.permute.xlu0 %1195
    %1197 = vrot.lane.b32.xlu0 %v497, 112
    %v1198 = vpop.permute.xlu0 %1197
    %v1199 = vsel %vm592, %v1192, 0
    %v1201 = vsel %vm592, %v1194, 0
    %v1203 = vsel %vm592, %v1196, 0
    %v1205 = vsel %vm592, %v1198, 0
    %1207 = vmatpush.xpose.msra.mxu0 0.0
    %1208 = vmatpush.xpose.msra.mxu0 0.0
    %1209 = vmatpush.xpose.msra.mxu0 0.0
    %1210 = vmatpush.xpose.msra.mxu0 0.0
    %1211 = vmatpush.xpose.msra.mxu0 0.0
    %1212 = vmatpush.xpose.msra.mxu0 0.0
    %1213 = vmatpush.xpose.msra.mxu0 0.0
    %1214 = vmatpush.xpose.msra.mxu0 0.0
    %1215 = vmatpush.xpose.msra.mxu0 0.0
    %1216 = vmatpush.xpose.msra.mxu0 0.0
    %1217 = vmatpush.xpose.msra.mxu0 0.0
    %1218 = vmatpush.xpose.msra.mxu0 0.0
    %1219 = vmatpush.xpose.msra.mxu0 0.0
    %1220 = vmatpush.xpose.msra.mxu0 0.0
    %1221 = vmatpush.xpose.msra.mxu0 %v1205
    %1222 = vmatpush.xpose.msra.mxu0 %v1203
    %1223 = vmatmul.f32.gmra.mxu0 %v1199
    %v1224 = vpop.f32.mrf.mxu0
    %v1225 = vadd.f32 %v304, %v1224
    %1226 = vmatmul.f32.gmra.mxu0 %v1201
    %v1227 = vpop.f32.mrf.mxu0
    %v1228 = vadd.f32 %v305, %v1227
    %1229 = vdwg.mxu0
    %v1230 = vsel %vm628, %v1225, -inf
    %1231 = vmax.xlane.f32.xlu0 %v1230
    %v1232 = vpop.xlane.xlu0 %1231
    %v1233 = vsel %vm628, %v1228, -inf
    %1234 = vmax.xlane.f32.xlu0 %v1233
    %v1235 = vpop.xlane.xlu0 %1234
    %v1236 = vsub.f32 %v1225, %v1232
    %v1237 = vsub.f32 %v1228, %v1235
    %v1238 = vmul.f32 %v1236, 1.442695
    %v1239 = vpow.pop %v1238
    %v1240 = vmul.f32 %v1237, 1.442695
    %v1241 = vpow.pop %v1240
    %v1242 = vsel %vm628, %v1239, 0.0
    %1243 = vadd.xlane.f32.xlu0 %v1242
    %v1244 = vpop.xlane.xlu0 %1243
    %v1245 = vsel %vm628, %v1241, 0.0
    %1246 = vadd.xlane.f32.xlu0 %v1245
    %v1247 = vpop.xlane.xlu0 %1246
    %v1248 = vrcp.pop %v1244
    %v1249 = vrcp.pop %v1247
    %v1250 = vmul.f32 %v1239, %v1248
    %v1251 = vmul.f32 %v1241, %v1249
    %1252 = vrot.lane.b32.xlu0 %v532, 112
    %v1253 = vpop.permute.xlu0 %1252
    %1254 = vrot.lane.b32.xlu0 %v590, 112
    %v1255 = vpop.permute.xlu0 %1254
    %v1259 = vsel %vm628, %v1250, 0
    %v1262 = vsel %vm628, %v1251, 0
    %1264 = vmatpush.msra.mxu0 0.0
    %1265 = vmatpush.msra.mxu0 0.0
    %1266 = vmatpush.msra.mxu0 0.0
    %1267 = vmatpush.msra.mxu0 0.0
    %1268 = vmatpush.msra.mxu0 0.0
    %1269 = vmatpush.msra.mxu0 0.0
    %1270 = vmatpush.msra.mxu0 0.0
    %1271 = vmatpush.msra.mxu0 0.0
    %1272 = vmatpush.msra.mxu0 0.0
    %1273 = vmatpush.msra.mxu0 0.0
    %1274 = vmatpush.msra.mxu0 0.0
    %1275 = vmatpush.msra.mxu0 0.0
    %1276 = vmatpush.msra.mxu0 0.0
    %1277 = vmatpush.msra.mxu0 0.0
    %1278 = vmatpush.msra.mxu0 %v1255
    %1279 = vmatpush.msra.mxu0 %v1253
    %1280 = vmatmul.f32.gmra.mxu0 %v1259
    %v1281 = vpop.f32.mrf.mxu0
    %v1282 = vadd.f32 0.0, %v1281
    %1283 = vmatmul.f32.gmra.mxu0 %v1262
    %v1284 = vpop.f32.mrf.mxu0
    %v1285 = vadd.f32 0.0, %v1284
    %1286 = vdwg.mxu0
    %1287 = vrot.lane.b32.xlu0 %v346, 104
    %v1288 = vpop.permute.xlu0 %1287
    %1289 = vrot.lane.b32.xlu0 %v404, 104
    %v1290 = vpop.permute.xlu0 %1289
    %1291 = vrot.lane.b32.xlu0 %v439, 104
    %v1292 = vpop.permute.xlu0 %1291
    %1293 = vrot.lane.b32.xlu0 %v497, 104
    %v1294 = vpop.permute.xlu0 %1293
    %v1295 = vsel %vm592, %v1288, 0
    %v1297 = vsel %vm592, %v1290, 0
    %v1299 = vsel %vm592, %v1292, 0
    %v1301 = vsel %vm592, %v1294, 0
    %1303 = vmatpush.xpose.msra.mxu0 0.0
    %1304 = vmatpush.xpose.msra.mxu0 0.0
    %1305 = vmatpush.xpose.msra.mxu0 0.0
    %1306 = vmatpush.xpose.msra.mxu0 0.0
    %1307 = vmatpush.xpose.msra.mxu0 0.0
    %1308 = vmatpush.xpose.msra.mxu0 0.0
    %1309 = vmatpush.xpose.msra.mxu0 0.0
    %1310 = vmatpush.xpose.msra.mxu0 0.0
    %1311 = vmatpush.xpose.msra.mxu0 0.0
    %1312 = vmatpush.xpose.msra.mxu0 0.0
    %1313 = vmatpush.xpose.msra.mxu0 0.0
    %1314 = vmatpush.xpose.msra.mxu0 0.0
    %1315 = vmatpush.xpose.msra.mxu0 0.0
    %1316 = vmatpush.xpose.msra.mxu0 0.0
    %1317 = vmatpush.xpose.msra.mxu0 %v1301
    %1318 = vmatpush.xpose.msra.mxu0 %v1299
    %1319 = vmatmul.f32.gmra.mxu0 %v1295
    %v1320 = vpop.f32.mrf.mxu0
    %v1321 = vadd.f32 %v304, %v1320
    %1322 = vmatmul.f32.gmra.mxu0 %v1297
    %v1323 = vpop.f32.mrf.mxu0
    %v1324 = vadd.f32 %v305, %v1323
    %1325 = vdwg.mxu0
    %v1326 = vsel %vm628, %v1321, -inf
    %1327 = vmax.xlane.f32.xlu0 %v1326
    %v1328 = vpop.xlane.xlu0 %1327
    %v1329 = vsel %vm628, %v1324, -inf
    %1330 = vmax.xlane.f32.xlu0 %v1329
    %v1331 = vpop.xlane.xlu0 %1330
    %v1332 = vsub.f32 %v1321, %v1328
    %v1333 = vsub.f32 %v1324, %v1331
    %v1334 = vmul.f32 %v1332, 1.442695
    %v1335 = vpow.pop %v1334
    %v1336 = vmul.f32 %v1333, 1.442695
    %v1337 = vpow.pop %v1336
    %v1338 = vsel %vm628, %v1335, 0.0
    %1339 = vadd.xlane.f32.xlu0 %v1338
    %v1340 = vpop.xlane.xlu0 %1339
    %v1341 = vsel %vm628, %v1337, 0.0
    %1342 = vadd.xlane.f32.xlu0 %v1341
    %v1343 = vpop.xlane.xlu0 %1342
    %v1344 = vrcp.pop %v1340
    %v1345 = vrcp.pop %v1343
    %v1346 = vmul.f32 %v1335, %v1344
    %v1347 = vmul.f32 %v1337, %v1345
    %1348 = vrot.lane.b32.xlu0 %v532, 104
    %v1349 = vpop.permute.xlu0 %1348
    %1350 = vrot.lane.b32.xlu0 %v590, 104
    %v1351 = vpop.permute.xlu0 %1350
    %v1355 = vsel %vm628, %v1346, 0
    %v1358 = vsel %vm628, %v1347, 0
    %1360 = vmatpush.msra.mxu0 0.0
    %1361 = vmatpush.msra.mxu0 0.0
    %1362 = vmatpush.msra.mxu0 0.0
    %1363 = vmatpush.msra.mxu0 0.0
    %1364 = vmatpush.msra.mxu0 0.0
    %1365 = vmatpush.msra.mxu0 0.0
    %1366 = vmatpush.msra.mxu0 0.0
    %1367 = vmatpush.msra.mxu0 0.0
    %1368 = vmatpush.msra.mxu0 0.0
    %1369 = vmatpush.msra.mxu0 0.0
    %1370 = vmatpush.msra.mxu0 0.0
    %1371 = vmatpush.msra.mxu0 0.0
    %1372 = vmatpush.msra.mxu0 0.0
    %1373 = vmatpush.msra.mxu0 0.0
    %1374 = vmatpush.msra.mxu0 %v1351
    %1375 = vmatpush.msra.mxu0 %v1349
    %1376 = vmatmul.f32.gmra.mxu0 %v1355
    %v1377 = vpop.f32.mrf.mxu0
    %v1378 = vadd.f32 0.0, %v1377
    %1379 = vmatmul.f32.gmra.mxu0 %v1358
    %v1380 = vpop.f32.mrf.mxu0
    %v1381 = vadd.f32 0.0, %v1380
    %1382 = vdwg.mxu0
    %1385 = vrot.lane.b32.xlu0 %v1186, 8
    %v1386 = vpop.permute.xlu0 %1385
    %1387 = vrot.lane.b32.xlu0 %v1189, 8
    %v1388 = vpop.permute.xlu0 %1387
    %1393 = vrot.lane.b32.xlu0 %v1282, 16
    %v1394 = vpop.permute.xlu0 %1393
    %1395 = vrot.lane.b32.xlu0 %v1285, 16
    %v1396 = vpop.permute.xlu0 %1395
    %1401 = vrot.lane.b32.xlu0 %v1378, 24
    %v1402 = vpop.permute.xlu0 %1401
    %1403 = vrot.lane.b32.xlu0 %v1381, 24
    %v1404 = vpop.permute.xlu0 %1403
    %v1407 = vsel %vm592, %v1088, %v1386
    %v1408 = vsel %vm592, %v1091, %v1388
    %v1409 = vsel %vm628, %v1407, %v1394
    %v1410 = vsel %vm628, %v1408, %v1396
    %v1411 = vsel %vm998, %v1409, %v1402
    %v1412 = vsel %vm998, %v1410, %v1404
    %1414 = vrot.lane.b32.xlu0 %v1412, 32
    %v1415 = vpop.permute.xlu0 %1414
    %v1417 = vsel %vm1005, %v1411, %v1415
    %v1418 = vld [vmem:[#allocation14] sm:$0xff]
    %v1419 = vld [vmem:[#allocation14 + $0x8] sm:$0xff]
    %v1420 = vld [vmem:[#allocation14 + $0x10] sm:$0xff]
    %v1421 = vld [vmem:[#allocation14 + $0x18] sm:$0xff]
    %v1422 = vld [vmem:[#allocation14 + $0x20] sm:$0xff]
    %v1423 = vld [vmem:[#allocation14 + $0x28] sm:$0xff]
    %v1424 = vld [vmem:[#allocation14 + $0x30] sm:$0xff]
    %v1425 = vld [vmem:[#allocation14 + $0x38] sm:$0xff]
    %v1426 = vld [vmem:[%s23] sm:$0x1]
    %v1428 = vperm.slane %v1426, 0
    %v1431 = vsel %vm318, %v1006, 0
    %v1434 = vsel %vm318, %v1417, 0
    %1436 = vmatpush.msra.mxu0 0.0
    %1437 = vmatpush.msra.mxu0 0.0
    %1438 = vmatpush.msra.mxu0 0.0
    %1439 = vmatpush.msra.mxu0 0.0
    %1440 = vmatpush.msra.mxu0 0.0
    %1441 = vmatpush.msra.mxu0 0.0
    %1442 = vmatpush.msra.mxu0 0.0
    %1443 = vmatpush.msra.mxu0 0.0
    %1444 = vmatpush.msra.mxu0 %v1425
    %1445 = vmatpush.msra.mxu0 %v1424
    %1446 = vmatpush.msra.mxu0 %v1423
    %1447 = vmatpush.msra.mxu0 %v1422
    %1448 = vmatpush.msra.mxu0 %v1421
    %1449 = vmatpush.msra.mxu0 %v1420
    %1450 = vmatpush.msra.mxu0 %v1419
    %1451 = vmatpush.msra.mxu0 %v1418
    %1452 = vmatmul.f32.gmra.mxu0 %v1431
    %v1453 = vpop.f32.mrf.mxu0
    %v1454 = vadd.f32 %v1428, %v1453
    %1455 = vmatmul.f32.gmra.mxu0 %v1434
    %v1456 = vpop.f32.mrf.mxu0
    %v1457 = vadd.f32 %v1428, %v1456
    %1458 = vdwg.mxu0
    %v1459 = vadd.f32 %v1454, %v298
    %v1460 = vadd.f32 %v1457, %v299
    %v1461 = vsel %vm1005, %v1459, 0.0
    %1462 = vadd.xlane.f32.xlu0 %v1461
    %v1463 = vpop.xlane.xlu0 %1462
    %v1464 = vsel %vm1005, %v1460, 0.0
    %1465 = vadd.xlane.f32.xlu0 %v1464
    %v1466 = vpop.xlane.xlu0 %1465
    %v1467 = vrcp.pop 32.0
    %v1468 = vmul.f32 32.0, %v1467
    %v1469 = vsub.f32 1.0, %v1468
    %v1470 = vmul.f32 %v1467, %v1469
    %v1471 = vadd.f32 %v1467, %v1470
    %vm1472 = vweird.f32 %v1467
    %v1473 = vsel %vm1472, %v1467, %v1471
    %v1474 = vmul.f32 %v1463, %v1473
    %v1475 = vmul.f32 %v1466, %v1473
    %v1476 = vsub.f32 %v1459, %v1474
    %v1477 = vsub.f32 %v1460, %v1475
    %v1478 = vmul.f32 %v1476, %v1476
    %v1479 = vmul.f32 %v1477, %v1477
    %v1480 = vsel %vm1005, %v1478, 0.0
    %1481 = vadd.xlane.f32.xlu0 %v1480
    %v1482 = vpop.xlane.xlu0 %1481
    %v1483 = vsel %vm1005, %v1479, 0.0
    %1484 = vadd.xlane.f32.xlu0 %v1483
    %v1485 = vpop.xlane.xlu0 %1484
    %v1486 = vmul.f32 %v1482, %v1473
    %v1487 = vmul.f32 %v1485, %v1473
    %v1488 = vadd.f32 %v1486, 1e-05
    %v1489 = vadd.f32 %v1487, 1e-05
    %v1490 = vrsqrt.pop %v1488
    %v1491 = vmul.f32 %v1490, %v1488
    %v1492 = vmul.f32 %v1491, %v1490
    %v1493 = vmul.f32 0.5, %v1492
    %v1494 = vsub.f32 1.5, %v1493
    %v1495 = vmul.f32 %v1490, %v1494
    %vm1496 = vweird.f32 %v1488
    %vm1497 = vweird.f32 %v1490
    %vm1498 = vmor %vm1496, %vm1497
    %v1499 = vsel %vm1498, %v1490, %v1495
    %v1500 = vrsqrt.pop %v1489
    %v1501 = vmul.f32 %v1500, %v1489
    %v1502 = vmul.f32 %v1501, %v1500
    %v1503 = vmul.f32 0.5, %v1502
    %v1504 = vsub.f32 1.5, %v1503
    %v1505 = vmul.f32 %v1500, %v1504
    %vm1506 = vweird.f32 %v1489
    %vm1507 = vweird.f32 %v1500
    %vm1508 = vmor %vm1506, %vm1507
    %v1509 = vsel %vm1508, %v1500, %v1505
    %v1510 = vmul.f32 %v1476, %v1499
    %v1511 = vmul.f32 %v1477, %v1509
    %1514 = vrot.lane.b32.xlu0 %v1459, 96
    %v1515 = vpop.permute.xlu0 %1514
    %1516 = vrot.lane.b32.xlu0 %v1460, 96
    %v1517 = vpop.permute.xlu0 %1516
    %v1520 = vsel %vm1005, %v1515, 0.0
    %1521 = vadd.xlane.f32.xlu0 %v1520
    %v1522 = vpop.xlane.xlu0 %1521
    %v1523 = vsel %vm1005, %v1517, 0.0
    %1524 = vadd.xlane.f32.xlu0 %v1523
    %v1525 = vpop.xlane.xlu0 %1524
    %v1526 = vmul.f32 %v1522, %v1473
    %v1527 = vmul.f32 %v1525, %v1473
    %v1528 = vsub.f32 %v1459, %v1526
    %v1529 = vsub.f32 %v1460, %v1527
    %v1530 = vmul.f32 %v1528, %v1528
    %v1531 = vmul.f32 %v1529, %v1529
    %1534 = vrot.lane.b32.xlu0 %v1530, 96
    %v1535 = vpop.permute.xlu0 %1534
    %1536 = vrot.lane.b32.xlu0 %v1531, 96
    %v1537 = vpop.permute.xlu0 %1536
    %v1540 = vsel %vm1005, %v1535, 0.0
    %1541 = vadd.xlane.f32.xlu0 %v1540
    %v1542 = vpop.xlane.xlu0 %1541
    %v1543 = vsel %vm1005, %v1537, 0.0
    %1544 = vadd.xlane.f32.xlu0 %v1543
    %v1545 = vpop.xlane.xlu0 %1544
    %v1546 = vmul.f32 %v1542, %v1473
    %v1547 = vmul.f32 %v1545, %v1473
    %v1548 = vadd.f32 %v1546, 1e-05
    %v1549 = vadd.f32 %v1547, 1e-05
    %v1550 = vrsqrt.pop %v1548
    %v1551 = vmul.f32 %v1550, %v1548
    %v1552 = vmul.f32 %v1551, %v1550
    %v1553 = vmul.f32 0.5, %v1552
    %v1554 = vsub.f32 1.5, %v1553
    %v1555 = vmul.f32 %v1550, %v1554
    %vm1556 = vweird.f32 %v1548
    %vm1557 = vweird.f32 %v1550
    %vm1558 = vmor %vm1556, %vm1557
    %v1559 = vsel %vm1558, %v1550, %v1555
    %v1560 = vrsqrt.pop %v1549
    %v1561 = vmul.f32 %v1560, %v1549
    %v1562 = vmul.f32 %v1561, %v1560
    %v1563 = vmul.f32 0.5, %v1562
    %v1564 = vsub.f32 1.5, %v1563
    %v1565 = vmul.f32 %v1560, %v1564
    %vm1566 = vweird.f32 %v1549
    %vm1567 = vweird.f32 %v1560
    %vm1568 = vmor %vm1566, %vm1567
    %v1569 = vsel %vm1568, %v1560, %v1565
    %v1570 = vmul.f32 %v1528, %v1559
    %v1571 = vmul.f32 %v1529, %v1569
    %v1572 = vsel %vm1005, %v1510, %v1570
    %v1573 = vsel %vm1005, %v1511, %v1571
    %v1574 = vld [vmem:[%s25] sm:$0x1]
    %v1576 = vperm.slane %v1574, 0
    %v1578 = vmul.f32 %v1572, %v1576
    %v1579 = vmul.f32 %v1573, %v1576
    %v1580 = vld [vmem:[%s27] sm:$0x1]
    %v1582 = vperm.slane %v1580, 0
    %v1584 = vadd.f32 %v1578, %v1582
    %v1585 = vadd.f32 %v1579, %v1582
    %v1586 = vlaneseq
    %v1587 = vand.u32 %v1586, 127
    %vm1588 = vcmp.lt.s32.totalorder %v1587, 0
    %v1589 = vsub.s32 0, %v1587
    %v1590 = vsel %vm1588, %v1589, %v1587
    %v1591 = vshrl.u32 %v1590, 3
    %v1592 = vand.u32 %v1590, 7
    %v1593 = vsub.s32 0, %v1592
    %v1594 = vsel %vm1588, %v1593, %v1592
    %vm1595 = vcmp.ne.s32.totalorder %v1594, 0
    %vm1596 = vcmp.lt.s32.totalorder %v1594, 0
    %vm1597 = vmand %vm1596, %vm1595
    %v1598 = vadd.s32 %v1594, 8
    %v1599 = vsel %vm1597, %v1598, %v1594
    %vm1600 = vcmp.lt.s32.totalorder %v1599, 6
    %v1601 = vsel %vm1600, 0.0, -1e+20
    %v1602 = vld [vmem:[#allocation16] sm:$0xff]
    %v1603 = vld [vmem:[#allocation16 + $0x8] sm:$0xff]
    %v1604 = vld [vmem:[#allocation16 + $0x10] sm:$0xff]
    %v1605 = vld [vmem:[#allocation16 + $0x18] sm:$0xff]
    %v1606 = vld [vmem:[#allocation16 + $0x20] sm:$0xff]
    %v1607 = vld [vmem:[#allocation16 + $0x28] sm:$0xff]
    %v1608 = vld [vmem:[#allocation16 + $0x30] sm:$0xff]
    %v1609 = vld [vmem:[#allocation16 + $0x38] sm:$0xff]
    %v1610 = vld [vmem:[%s31] sm:$0x1]
    %v1612 = vperm.slane %v1610, 0
    %v1615 = vsel %vm318, %v1584, 0
    %v1618 = vsel %vm318, %v1585, 0
    %1620 = vmatpush.msra.mxu0 0.0
    %1621 = vmatpush.msra.mxu0 0.0
    %1622 = vmatpush.msra.mxu0 0.0
    %1623 = vmatpush.msra.mxu0 0.0
    %1624 = vmatpush.msra.mxu0 0.0
    %1625 = vmatpush.msra.mxu0 0.0
    %1626 = vmatpush.msra.mxu0 0.0
    %1627 = vmatpush.msra.mxu0 0.0
    %1628 = vmatpush.msra.mxu0 %v1609
    %1629 = vmatpush.msra.mxu0 %v1608
    %1630 = vmatpush.msra.mxu0 %v1607
    %1631 = vmatpush.msra.mxu0 %v1606
    %1632 = vmatpush.msra.mxu0 %v1605
    %1633 = vmatpush.msra.mxu0 %v1604
    %1634 = vmatpush.msra.mxu0 %v1603
    %1635 = vmatpush.msra.mxu0 %v1602
    %1636 = vmatmul.f32.gmra.mxu0 %v1615
    %v1637 = vpop.f32.mrf.mxu0
    %v1638 = vadd.f32 %v1612, %v1637
    %1639 = vmatmul.f32.gmra.mxu0 %v1618
    %v1640 = vpop.f32.mrf.mxu0
    %v1641 = vadd.f32 %v1612, %v1640
    %1642 = vdwg.mxu0
    %1651 = vrot.lane.b32.xlu0 %v1602, 96
    %v1652 = vpop.permute.xlu0 %1651
    %1653 = vrot.lane.b32.xlu0 %v1603, 96
    %v1654 = vpop.permute.xlu0 %1653
    %1655 = vrot.lane.b32.xlu0 %v1604, 96
    %v1656 = vpop.permute.xlu0 %1655
    %1657 = vrot.lane.b32.xlu0 %v1605, 96
    %v1658 = vpop.permute.xlu0 %1657
    %1659 = vrot.lane.b32.xlu0 %v1606, 96
    %v1660 = vpop.permute.xlu0 %1659
    %1661 = vrot.lane.b32.xlu0 %v1607, 96
    %v1662 = vpop.permute.xlu0 %1661
    %1663 = vrot.lane.b32.xlu0 %v1608, 96
    %v1664 = vpop.permute.xlu0 %1663
    %1665 = vrot.lane.b32.xlu0 %v1609, 96
    %v1666 = vpop.permute.xlu0 %1665
    %1675 = vrot.lane.b32.xlu0 %v1612, 96
    %v1676 = vpop.permute.xlu0 %1675
    %1678 = vmatpush.msra.mxu0 0.0
    %1679 = vmatpush.msra.mxu0 0.0
    %1680 = vmatpush.msra.mxu0 0.0
    %1681 = vmatpush.msra.mxu0 0.0
    %1682 = vmatpush.msra.mxu0 0.0
    %1683 = vmatpush.msra.mxu0 0.0
    %1684 = vmatpush.msra.mxu0 0.0
    %1685 = vmatpush.msra.mxu0 0.0
    %1686 = vmatpush.msra.mxu0 %v1666
    %1687 = vmatpush.msra.mxu0 %v1664
    %1688 = vmatpush.msra.mxu0 %v1662
    %1689 = vmatpush.msra.mxu0 %v1660
    %1690 = vmatpush.msra.mxu0 %v1658
    %1691 = vmatpush.msra.mxu0 %v1656
    %1692 = vmatpush.msra.mxu0 %v1654
    %1693 = vmatpush.msra.mxu0 %v1652
    %1694 = vmatmul.f32.gmra.mxu0 %v1615
    %v1695 = vpop.f32.mrf.mxu0
    %v1696 = vadd.f32 %v1676, %v1695
    %1697 = vmatmul.f32.gmra.mxu0 %v1618
    %v1698 = vpop.f32.mrf.mxu0
    %v1699 = vadd.f32 %v1676, %v1698
    %1700 = vdwg.mxu0
    %v1701 = vld [vmem:[%s33] sm:$0xff]
    %v1702 = vld [vmem:[%s33 + $0x8] sm:$0xff]
    %v1703 = vld [vmem:[%s33 + $0x10] sm:$0xff]
    %v1704 = vld [vmem:[%s33 + $0x18] sm:$0xff]
    %v1705 = vld [vmem:[%s33 + $0x20] sm:$0xff]
    %v1706 = vld [vmem:[%s33 + $0x28] sm:$0xff]
    %v1707 = vld [vmem:[%s33 + $0x30] sm:$0xff]
    %v1708 = vld [vmem:[%s33 + $0x38] sm:$0xff]
    %v1709 = vld [vmem:[%s33 + $0x40] sm:$0xff]
    %v1710 = vld [vmem:[%s33 + $0x48] sm:$0xff]
    %v1711 = vld [vmem:[%s33 + $0x50] sm:$0xff]
    %v1712 = vld [vmem:[%s33 + $0x58] sm:$0xff]
    %v1713 = vld [vmem:[%s35] sm:$0x1]
    %v1715 = vperm.slane %v1713, 0
    %vm1717 = vcmask 785408
    %v1719 = vsel %vm1717, %v300, 0
    %v1722 = vsel %vm1717, %v301, 0
    %1724 = vmatpush.msra.mxu0 0.0
    %1725 = vmatpush.msra.mxu0 0.0
    %1726 = vmatpush.msra.mxu0 0.0
    %1727 = vmatpush.msra.mxu0 0.0
    %1728 = vmatpush.msra.mxu0 %v1712
    %1729 = vmatpush.msra.mxu0 %v1711
    %1730 = vmatpush.msra.mxu0 %v1710
    %1731 = vmatpush.msra.mxu0 %v1709
    %1732 = vmatpush.msra.mxu0 %v1708
    %1733 = vmatpush.msra.mxu0 %v1707
    %1734 = vmatpush.msra.mxu0 %v1706
    %1735 = vmatpush.msra.mxu0 %v1705
    %1736 = vmatpush.msra.mxu0 %v1704
    %1737 = vmatpush.msra.mxu0 %v1703
    %1738 = vmatpush.msra.mxu0 %v1702
    %1739 = vmatpush.msra.mxu0 %v1701
    %1740 = vmatmul.f32.gmra.mxu0 %v1719
    %v1741 = vpop.f32.mrf.mxu0
    %v1742 = vadd.f32 %v1715, %v1741
    %1743 = vmatmul.f32.gmra.mxu0 %v1722
    %v1744 = vpop.f32.mrf.mxu0
    %v1745 = vadd.f32 %v1715, %v1744
    %1746 = vdwg.mxu0
    %1759 = vrot.lane.b32.xlu0 %v1701, 96
    %v1760 = vpop.permute.xlu0 %1759
    %1761 = vrot.lane.b32.xlu0 %v1702, 96
    %v1762 = vpop.permute.xlu0 %1761
    %1763 = vrot.lane.b32.xlu0 %v1703, 96
    %v1764 = vpop.permute.xlu0 %1763
    %1765 = vrot.lane.b32.xlu0 %v1704, 96
    %v1766 = vpop.permute.xlu0 %1765
    %1767 = vrot.lane.b32.xlu0 %v1705, 96
    %v1768 = vpop.permute.xlu0 %1767
    %1769 = vrot.lane.b32.xlu0 %v1706, 96
    %v1770 = vpop.permute.xlu0 %1769
    %1771 = vrot.lane.b32.xlu0 %v1707, 96
    %v1772 = vpop.permute.xlu0 %1771
    %1773 = vrot.lane.b32.xlu0 %v1708, 96
    %v1774 = vpop.permute.xlu0 %1773
    %1775 = vrot.lane.b32.xlu0 %v1709, 96
    %v1776 = vpop.permute.xlu0 %1775
    %1777 = vrot.lane.b32.xlu0 %v1710, 96
    %v1778 = vpop.permute.xlu0 %1777
    %1779 = vrot.lane.b32.xlu0 %v1711, 96
    %v1780 = vpop.permute.xlu0 %1779
    %1781 = vrot.lane.b32.xlu0 %v1712, 96
    %v1782 = vpop.permute.xlu0 %1781
    %1795 = vrot.lane.b32.xlu0 %v1715, 96
    %v1796 = vpop.permute.xlu0 %1795
    %1798 = vmatpush.msra.mxu0 0.0
    %1799 = vmatpush.msra.mxu0 0.0
    %1800 = vmatpush.msra.mxu0 0.0
    %1801 = vmatpush.msra.mxu0 0.0
    %1802 = vmatpush.msra.mxu0 %v1782
    %1803 = vmatpush.msra.mxu0 %v1780
    %1804 = vmatpush.msra.mxu0 %v1778
    %1805 = vmatpush.msra.mxu0 %v1776
    %1806 = vmatpush.msra.mxu0 %v1774
    %1807 = vmatpush.msra.mxu0 %v1772
    %1808 = vmatpush.msra.mxu0 %v1770
    %1809 = vmatpush.msra.mxu0 %v1768
    %1810 = vmatpush.msra.mxu0 %v1766
    %1811 = vmatpush.msra.mxu0 %v1764
    %1812 = vmatpush.msra.mxu0 %v1762
    %1813 = vmatpush.msra.mxu0 %v1760
    %1814 = vmatmul.f32.gmra.mxu0 %v1719
    %v1815 = vpop.f32.mrf.mxu0
    %v1816 = vadd.f32 %v1796, %v1815
    %1817 = vmatmul.f32.gmra.mxu0 %v1722
    %v1818 = vpop.f32.mrf.mxu0
    %v1819 = vadd.f32 %v1796, %v1818
    %1820 = vdwg.mxu0
    %1821 = vrot.lane.b32.xlu0 %v1701, 64
    %v1822 = vpop.permute.xlu0 %1821
    %1823 = vrot.lane.b32.xlu0 %v1702, 64
    %v1824 = vpop.permute.xlu0 %1823
    %1825 = vrot.lane.b32.xlu0 %v1703, 64
    %v1826 = vpop.permute.xlu0 %1825
    %1827 = vrot.lane.b32.xlu0 %v1704, 64
    %v1828 = vpop.permute.xlu0 %1827
    %1829 = vrot.lane.b32.xlu0 %v1705, 64
    %v1830 = vpop.permute.xlu0 %1829
    %1831 = vrot.lane.b32.xlu0 %v1706, 64
    %v1832 = vpop.permute.xlu0 %1831
    %1833 = vrot.lane.b32.xlu0 %v1707, 64
    %v1834 = vpop.permute.xlu0 %1833
    %1835 = vrot.lane.b32.xlu0 %v1708, 64
    %v1836 = vpop.permute.xlu0 %1835
    %1837 = vrot.lane.b32.xlu0 %v1709, 64
    %v1838 = vpop.permute.xlu0 %1837
    %1839 = vrot.lane.b32.xlu0 %v1710, 64
    %v1840 = vpop.permute.xlu0 %1839
    %1841 = vrot.lane.b32.xlu0 %v1711, 64
    %v1842 = vpop.permute.xlu0 %1841
    %1843 = vrot.lane.b32.xlu0 %v1712, 64
    %v1844 = vpop.permute.xlu0 %1843
    %1857 = vrot.lane.b32.xlu0 %v1715, 64
    %v1858 = vpop.permute.xlu0 %1857
    %1860 = vmatpush.msra.mxu0 0.0
    %1861 = vmatpush.msra.mxu0 0.0
    %1862 = vmatpush.msra.mxu0 0.0
    %1863 = vmatpush.msra.mxu0 0.0
    %1864 = vmatpush.msra.mxu0 %v1844
    %1865 = vmatpush.msra.mxu0 %v1842
    %1866 = vmatpush.msra.mxu0 %v1840
    %1867 = vmatpush.msra.mxu0 %v1838
    %1868 = vmatpush.msra.mxu0 %v1836
    %1869 = vmatpush.msra.mxu0 %v1834
    %1870 = vmatpush.msra.mxu0 %v1832
    %1871 = vmatpush.msra.mxu0 %v1830
    %1872 = vmatpush.msra.mxu0 %v1828
    %1873 = vmatpush.msra.mxu0 %v1826
    %1874 = vmatpush.msra.mxu0 %v1824
    %1875 = vmatpush.msra.mxu0 %v1822
    %1876 = vmatmul.f32.gmra.mxu0 %v1719
    %v1877 = vpop.f32.mrf.mxu0
    %v1878 = vadd.f32 %v1858, %v1877
    %1879 = vmatmul.f32.gmra.mxu0 %v1722
    %v1880 = vpop.f32.mrf.mxu0
    %v1881 = vadd.f32 %v1858, %v1880
    %1882 = vdwg.mxu0
    %v1883 = vld [vmem:[%s37] sm:$0xff]
    %v1884 = vld [vmem:[%s37 + $0x8] sm:$0xff]
    %v1885 = vld [vmem:[%s37 + $0x10] sm:$0xff]
    %v1886 = vld [vmem:[%s37 + $0x18] sm:$0xff]
    %v1887 = vld [vmem:[%s37 + $0x20] sm:$0xff]
    %v1888 = vld [vmem:[%s37 + $0x28] sm:$0xff]
    %v1889 = vld [vmem:[%s37 + $0x30] sm:$0xff]
    %v1890 = vld [vmem:[%s37 + $0x38] sm:$0xff]
    %v1891 = vld [vmem:[%s37 + $0x40] sm:$0xff]
    %v1892 = vld [vmem:[%s37 + $0x48] sm:$0xff]
    %v1893 = vld [vmem:[%s37 + $0x50] sm:$0xff]
    %v1894 = vld [vmem:[%s37 + $0x58] sm:$0xff]
    %v1895 = vld [vmem:[%s39] sm:$0x1]
    %v1897 = vperm.slane %v1895, 0
    %v1900 = vsel %vm1717, %v302, 0
    %v1903 = vsel %vm1717, %v303, 0
    %1905 = vmatpush.msra.mxu0 0.0
    %1906 = vmatpush.msra.mxu0 0.0
    %1907 = vmatpush.msra.mxu0 0.0
    %1908 = vmatpush.msra.mxu0 0.0
    %1909 = vmatpush.msra.mxu0 %v1894
    %1910 = vmatpush.msra.mxu0 %v1893
    %1911 = vmatpush.msra.mxu0 %v1892
    %1912 = vmatpush.msra.mxu0 %v1891
    %1913 = vmatpush.msra.mxu0 %v1890
    %1914 = vmatpush.msra.mxu0 %v1889
    %1915 = vmatpush.msra.mxu0 %v1888
    %1916 = vmatpush.msra.mxu0 %v1887
    %1917 = vmatpush.msra.mxu0 %v1886
    %1918 = vmatpush.msra.mxu0 %v1885
    %1919 = vmatpush.msra.mxu0 %v1884
    %1920 = vmatpush.msra.mxu0 %v1883
    %1921 = vmatmul.f32.gmra.mxu0 %v1900
    %v1922 = vpop.f32.mrf.mxu0
    %v1923 = vadd.f32 %v1897, %v1922
    %1924 = vmatmul.f32.gmra.mxu0 %v1903
    %v1925 = vpop.f32.mrf.mxu0
    %v1926 = vadd.f32 %v1897, %v1925
    %1927 = vdwg.mxu0
    %1940 = vrot.lane.b32.xlu0 %v1883, 96
    %v1941 = vpop.permute.xlu0 %1940
    %1942 = vrot.lane.b32.xlu0 %v1884, 96
    %v1943 = vpop.permute.xlu0 %1942
    %1944 = vrot.lane.b32.xlu0 %v1885, 96
    %v1945 = vpop.permute.xlu0 %1944
    %1946 = vrot.lane.b32.xlu0 %v1886, 96
    %v1947 = vpop.permute.xlu0 %1946
    %1948 = vrot.lane.b32.xlu0 %v1887, 96
    %v1949 = vpop.permute.xlu0 %1948
    %1950 = vrot.lane.b32.xlu0 %v1888, 96
    %v1951 = vpop.permute.xlu0 %1950
    %1952 = vrot.lane.b32.xlu0 %v1889, 96
    %v1953 = vpop.permute.xlu0 %1952
    %1954 = vrot.lane.b32.xlu0 %v1890, 96
    %v1955 = vpop.permute.xlu0 %1954
    %1956 = vrot.lane.b32.xlu0 %v1891, 96
    %v1957 = vpop.permute.xlu0 %1956
    %1958 = vrot.lane.b32.xlu0 %v1892, 96
    %v1959 = vpop.permute.xlu0 %1958
    %1960 = vrot.lane.b32.xlu0 %v1893, 96
    %v1961 = vpop.permute.xlu0 %1960
    %1962 = vrot.lane.b32.xlu0 %v1894, 96
    %v1963 = vpop.permute.xlu0 %1962
    %1976 = vrot.lane.b32.xlu0 %v1897, 96
    %v1977 = vpop.permute.xlu0 %1976
    %1979 = vmatpush.msra.mxu0 0.0
    %1980 = vmatpush.msra.mxu0 0.0
    %1981 = vmatpush.msra.mxu0 0.0
    %1982 = vmatpush.msra.mxu0 0.0
    %1983 = vmatpush.msra.mxu0 %v1963
    %1984 = vmatpush.msra.mxu0 %v1961
    %1985 = vmatpush.msra.mxu0 %v1959
    %1986 = vmatpush.msra.mxu0 %v1957
    %1987 = vmatpush.msra.mxu0 %v1955
    %1988 = vmatpush.msra.mxu0 %v1953
    %1989 = vmatpush.msra.mxu0 %v1951
    %1990 = vmatpush.msra.mxu0 %v1949
    %1991 = vmatpush.msra.mxu0 %v1947
    %1992 = vmatpush.msra.mxu0 %v1945
    %1993 = vmatpush.msra.mxu0 %v1943
    %1994 = vmatpush.msra.mxu0 %v1941
    %1995 = vmatmul.f32.gmra.mxu0 %v1900
    %v1996 = vpop.f32.mrf.mxu0
    %v1997 = vadd.f32 %v1977, %v1996
    %1998 = vmatmul.f32.gmra.mxu0 %v1903
    %v1999 = vpop.f32.mrf.mxu0
    %v2000 = vadd.f32 %v1977, %v1999
    %2001 = vdwg.mxu0
    %2002 = vrot.lane.b32.xlu0 %v1883, 64
    %v2003 = vpop.permute.xlu0 %2002
    %2004 = vrot.lane.b32.xlu0 %v1884, 64
    %v2005 = vpop.permute.xlu0 %2004
    %2006 = vrot.lane.b32.xlu0 %v1885, 64
    %v2007 = vpop.permute.xlu0 %2006
    %2008 = vrot.lane.b32.xlu0 %v1886, 64
    %v2009 = vpop.permute.xlu0 %2008
    %2010 = vrot.lane.b32.xlu0 %v1887, 64
    %v2011 = vpop.permute.xlu0 %2010
    %2012 = vrot.lane.b32.xlu0 %v1888, 64
    %v2013 = vpop.permute.xlu0 %2012
    %2014 = vrot.lane.b32.xlu0 %v1889, 64
    %v2015 = vpop.permute.xlu0 %2014
    %2016 = vrot.lane.b32.xlu0 %v1890, 64
    %v2017 = vpop.permute.xlu0 %2016
    %2018 = vrot.lane.b32.xlu0 %v1891, 64
    %v2019 = vpop.permute.xlu0 %2018
    %2020 = vrot.lane.b32.xlu0 %v1892, 64
    %v2021 = vpop.permute.xlu0 %2020
    %2022 = vrot.lane.b32.xlu0 %v1893, 64
    %v2023 = vpop.permute.xlu0 %2022
    %2024 = vrot.lane.b32.xlu0 %v1894, 64
    %v2025 = vpop.permute.xlu0 %2024
    %2038 = vrot.lane.b32.xlu0 %v1897, 64
    %v2039 = vpop.permute.xlu0 %2038
    %2041 = vmatpush.msra.mxu0 0.0
    %2042 = vmatpush.msra.mxu0 0.0
    %2043 = vmatpush.msra.mxu0 0.0
    %2044 = vmatpush.msra.mxu0 0.0
    %2045 = vmatpush.msra.mxu0 %v2025
    %2046 = vmatpush.msra.mxu0 %v2023
    %2047 = vmatpush.msra.mxu0 %v2021
    %2048 = vmatpush.msra.mxu0 %v2019
    %2049 = vmatpush.msra.mxu0 %v2017
    %2050 = vmatpush.msra.mxu0 %v2015
    %2051 = vmatpush.msra.mxu0 %v2013
    %2052 = vmatpush.msra.mxu0 %v2011
    %2053 = vmatpush.msra.mxu0 %v2009
    %2054 = vmatpush.msra.mxu0 %v2007
    %2055 = vmatpush.msra.mxu0 %v2005
    %2056 = vmatpush.msra.mxu0 %v2003
    %2057 = vmatmul.f32.gmra.mxu0 %v1900
    %v2058 = vpop.f32.mrf.mxu0
    %v2059 = vadd.f32 %v2039, %v2058
    %2060 = vmatmul.f32.gmra.mxu0 %v1903
    %v2061 = vpop.f32.mrf.mxu0
    %v2062 = vadd.f32 %v2039, %v2061
    %2063 = vdwg.mxu0
    %v2065 = vsel %vm592, %v1638, 0
    %v2068 = vsel %vm592, %v1696, 0
    %v2071 = vsel %vm592, %v1742, 0
    %v2074 = vsel %vm592, %v1816, 0
    %v2077 = vsel %vm592, %v1878, 0
    %2079 = vmatpush.xpose.msra.mxu0 0.0
    %2080 = vmatpush.xpose.msra.mxu0 0.0
    %2081 = vmatpush.xpose.msra.mxu0 0.0
    %2082 = vmatpush.xpose.msra.mxu0 0.0
    %2083 = vmatpush.xpose.msra.mxu0 0.0
    %2084 = vmatpush.xpose.msra.mxu0 0.0
    %2085 = vmatpush.xpose.msra.mxu0 0.0
    %2086 = vmatpush.xpose.msra.mxu0 0.0
    %2087 = vmatpush.xpose.msra.mxu0 0.0
    %2088 = vmatpush.xpose.msra.mxu0 0.0
    %2089 = vmatpush.xpose.msra.mxu0 0.0
    %2090 = vmatpush.xpose.msra.mxu0 0.0
    %2091 = vmatpush.xpose.msra.mxu0 0.0
    %2092 = vmatpush.xpose.msra.mxu0 %v2077
    %2093 = vmatpush.xpose.msra.mxu0 %v2074
    %2094 = vmatpush.xpose.msra.mxu0 %v2071
    %2095 = vmatmul.f32.gmra.mxu0 %v2065
    %v2096 = vpop.f32.mrf.mxu0
    %v2097 = vadd.f32 %v1601, %v2096
    %2098 = vmatmul.f32.gmra.mxu0 %v2068
    %v2099 = vpop.f32.mrf.mxu0
    %v2100 = vadd.f32 %v1601, %v2099
    %2101 = vdwg.mxu0
    %v2102 = vsel %vm998, %v2097, -inf
    %2103 = vmax.xlane.f32.xlu0 %v2102
    %v2104 = vpop.xlane.xlu0 %2103
    %v2105 = vsel %vm998, %v2100, -inf
    %2106 = vmax.xlane.f32.xlu0 %v2105
    %v2107 = vpop.xlane.xlu0 %2106
    %v2108 = vsub.f32 %v2097, %v2104
    %v2109 = vsub.f32 %v2100, %v2107
    %v2110 = vmul.f32 %v2108, 1.442695
    %v2111 = vpow.pop %v2110
    %v2112 = vmul.f32 %v2109, 1.442695
    %v2113 = vpow.pop %v2112
    %v2114 = vsel %vm998, %v2111, 0.0
    %2115 = vadd.xlane.f32.xlu0 %v2114
    %v2116 = vpop.xlane.xlu0 %2115
    %v2117 = vsel %vm998, %v2113, 0.0
    %2118 = vadd.xlane.f32.xlu0 %v2117
    %v2119 = vpop.xlane.xlu0 %2118
    %v2120 = vrcp.pop %v2116
    %v2121 = vrcp.pop %v2119
    %v2122 = vmul.f32 %v2111, %v2120
    %v2123 = vmul.f32 %v2113, %v2121
    %v2125 = vsel %vm998, %v2122, 0
    %v2128 = vsel %vm998, %v2123, 0
    %2130 = vmatpush.msra.mxu0 0.0
    %2131 = vmatpush.msra.mxu0 0.0
    %2132 = vmatpush.msra.mxu0 0.0
    %2133 = vmatpush.msra.mxu0 0.0
    %2134 = vmatpush.msra.mxu0 0.0
    %2135 = vmatpush.msra.mxu0 0.0
    %2136 = vmatpush.msra.mxu0 0.0
    %2137 = vmatpush.msra.mxu0 0.0
    %2138 = vmatpush.msra.mxu0 0.0
    %2139 = vmatpush.msra.mxu0 0.0
    %2140 = vmatpush.msra.mxu0 0.0
    %2141 = vmatpush.msra.mxu0 0.0
    %2142 = vmatpush.msra.mxu0 0.0
    %2143 = vmatpush.msra.mxu0 %v2059
    %2144 = vmatpush.msra.mxu0 %v1997
    %2145 = vmatpush.msra.mxu0 %v1923
    %2146 = vmatmul.f32.gmra.mxu0 %v2125
    %v2147 = vpop.f32.mrf.mxu0
    %v2148 = vadd.f32 0.0, %v2147
    %2149 = vmatmul.f32.gmra.mxu0 %v2128
    %v2150 = vpop.f32.mrf.mxu0
    %v2151 = vadd.f32 0.0, %v2150
    %2152 = vdwg.mxu0
    %2153 = vrot.lane.b32.xlu0 %v1638, 120
    %v2154 = vpop.permute.xlu0 %2153
    %2155 = vrot.lane.b32.xlu0 %v1696, 120
    %v2156 = vpop.permute.xlu0 %2155
    %2157 = vrot.lane.b32.xlu0 %v1742, 120
    %v2158 = vpop.permute.xlu0 %2157
    %2159 = vrot.lane.b32.xlu0 %v1816, 120
    %v2160 = vpop.permute.xlu0 %2159
    %2161 = vrot.lane.b32.xlu0 %v1878, 120
    %v2162 = vpop.permute.xlu0 %2161
    %v2163 = vsel %vm592, %v2154, 0
    %v2165 = vsel %vm592, %v2156, 0
    %v2167 = vsel %vm592, %v2158, 0
    %v2169 = vsel %vm592, %v2160, 0
    %v2171 = vsel %vm592, %v2162, 0
    %2173 = vmatpush.xpose.msra.mxu0 0.0
    %2174 = vmatpush.xpose.msra.mxu0 0.0
    %2175 = vmatpush.xpose.msra.mxu0 0.0
    %2176 = vmatpush.xpose.msra.mxu0 0.0
    %2177 = vmatpush.xpose.msra.mxu0 0.0
    %2178 = vmatpush.xpose.msra.mxu0 0.0
    %2179 = vmatpush.xpose.msra.mxu0 0.0
    %2180 = vmatpush.xpose.msra.mxu0 0.0
    %2181 = vmatpush.xpose.msra.mxu0 0.0
    %2182 = vmatpush.xpose.msra.mxu0 0.0
    %2183 = vmatpush.xpose.msra.mxu0 0.0
    %2184 = vmatpush.xpose.msra.mxu0 0.0
    %2185 = vmatpush.xpose.msra.mxu0 0.0
    %2186 = vmatpush.xpose.msra.mxu0 %v2171
    %2187 = vmatpush.xpose.msra.mxu0 %v2169
    %2188 = vmatpush.xpose.msra.mxu0 %v2167
    %2189 = vmatmul.f32.gmra.mxu0 %v2163
    %v2190 = vpop.f32.mrf.mxu0
    %v2191 = vadd.f32 %v1601, %v2190
    %2192 = vmatmul.f32.gmra.mxu0 %v2165
    %v2193 = vpop.f32.mrf.mxu0
    %v2194 = vadd.f32 %v1601, %v2193
    %2195 = vdwg.mxu0
    %v2196 = vsel %vm998, %v2191, -inf
    %2197 = vmax.xlane.f32.xlu0 %v2196
    %v2198 = vpop.xlane.xlu0 %2197
    %v2199 = vsel %vm998, %v2194, -inf
    %2200 = vmax.xlane.f32.xlu0 %v2199
    %v2201 = vpop.xlane.xlu0 %2200
    %v2202 = vsub.f32 %v2191, %v2198
    %v2203 = vsub.f32 %v2194, %v2201
    %v2204 = vmul.f32 %v2202, 1.442695
    %v2205 = vpow.pop %v2204
    %v2206 = vmul.f32 %v2203, 1.442695
    %v2207 = vpow.pop %v2206
    %v2208 = vsel %vm998, %v2205, 0.0
    %2209 = vadd.xlane.f32.xlu0 %v2208
    %v2210 = vpop.xlane.xlu0 %2209
    %v2211 = vsel %vm998, %v2207, 0.0
    %2212 = vadd.xlane.f32.xlu0 %v2211
    %v2213 = vpop.xlane.xlu0 %2212
    %v2214 = vrcp.pop %v2210
    %v2215 = vrcp.pop %v2213
    %v2216 = vmul.f32 %v2205, %v2214
    %v2217 = vmul.f32 %v2207, %v2215
    %2221 = vrot.lane.b32.xlu0 %v1923, 120
    %v2222 = vpop.permute.xlu0 %2221
    %2223 = vrot.lane.b32.xlu0 %v1997, 120
    %v2224 = vpop.permute.xlu0 %2223
    %2225 = vrot.lane.b32.xlu0 %v2059, 120
    %v2226 = vpop.permute.xlu0 %2225
    %v2231 = vsel %vm998, %v2216, 0
    %v2234 = vsel %vm998, %v2217, 0
    %2236 = vmatpush.msra.mxu0 0.0
    %2237 = vmatpush.msra.mxu0 0.0
    %2238 = vmatpush.msra.mxu0 0.0
    %2239 = vmatpush.msra.mxu0 0.0
    %2240 = vmatpush.msra.mxu0 0.0
    %2241 = vmatpush.msra.mxu0 0.0
    %2242 = vmatpush.msra.mxu0 0.0
    %2243 = vmatpush.msra.mxu0 0.0
    %2244 = vmatpush.msra.mxu0 0.0
    %2245 = vmatpush.msra.mxu0 0.0
    %2246 = vmatpush.msra.mxu0 0.0
    %2247 = vmatpush.msra.mxu0 0.0
    %2248 = vmatpush.msra.mxu0 0.0
    %2249 = vmatpush.msra.mxu0 %v2226
    %2250 = vmatpush.msra.mxu0 %v2224
    %2251 = vmatpush.msra.mxu0 %v2222
    %2252 = vmatmul.f32.gmra.mxu0 %v2231
    %v2253 = vpop.f32.mrf.mxu0
    %v2254 = vadd.f32 0.0, %v2253
    %2255 = vmatmul.f32.gmra.mxu0 %v2234
    %v2256 = vpop.f32.mrf.mxu0
    %v2257 = vadd.f32 0.0, %v2256
    %2258 = vdwg.mxu0
    %2259 = vrot.lane.b32.xlu0 %v1638, 112
    %v2260 = vpop.permute.xlu0 %2259
    %2261 = vrot.lane.b32.xlu0 %v1696, 112
    %v2262 = vpop.permute.xlu0 %2261
    %2263 = vrot.lane.b32.xlu0 %v1742, 112
    %v2264 = vpop.permute.xlu0 %2263
    %2265 = vrot.lane.b32.xlu0 %v1816, 112
    %v2266 = vpop.permute.xlu0 %2265
    %2267 = vrot.lane.b32.xlu0 %v1878, 112
    %v2268 = vpop.permute.xlu0 %2267
    %v2269 = vsel %vm592, %v2260, 0
    %v2271 = vsel %vm592, %v2262, 0
    %v2273 = vsel %vm592, %v2264, 0
    %v2275 = vsel %vm592, %v2266, 0
    %v2277 = vsel %vm592, %v2268, 0
    %2279 = vmatpush.xpose.msra.mxu0 0.0
    %2280 = vmatpush.xpose.msra.mxu0 0.0
    %2281 = vmatpush.xpose.msra.mxu0 0.0
    %2282 = vmatpush.xpose.msra.mxu0 0.0
    %2283 = vmatpush.xpose.msra.mxu0 0.0
    %2284 = vmatpush.xpose.msra.mxu0 0.0
    %2285 = vmatpush.xpose.msra.mxu0 0.0
    %2286 = vmatpush.xpose.msra.mxu0 0.0
    %2287 = vmatpush.xpose.msra.mxu0 0.0
    %2288 = vmatpush.xpose.msra.mxu0 0.0
    %2289 = vmatpush.xpose.msra.mxu0 0.0
    %2290 = vmatpush.xpose.msra.mxu0 0.0
    %2291 = vmatpush.xpose.msra.mxu0 0.0
    %2292 = vmatpush.xpose.msra.mxu0 %v2277
    %2293 = vmatpush.xpose.msra.mxu0 %v2275
    %2294 = vmatpush.xpose.msra.mxu0 %v2273
    %2295 = vmatmul.f32.gmra.mxu0 %v2269
    %v2296 = vpop.f32.mrf.mxu0
    %v2297 = vadd.f32 %v1601, %v2296
    %2298 = vmatmul.f32.gmra.mxu0 %v2271
    %v2299 = vpop.f32.mrf.mxu0
    %v2300 = vadd.f32 %v1601, %v2299
    %2301 = vdwg.mxu0
    %v2302 = vsel %vm998, %v2297, -inf
    %2303 = vmax.xlane.f32.xlu0 %v2302
    %v2304 = vpop.xlane.xlu0 %2303
    %v2305 = vsel %vm998, %v2300, -inf
    %2306 = vmax.xlane.f32.xlu0 %v2305
    %v2307 = vpop.xlane.xlu0 %2306
    %v2308 = vsub.f32 %v2297, %v2304
    %v2309 = vsub.f32 %v2300, %v2307
    %v2310 = vmul.f32 %v2308, 1.442695
    %v2311 = vpow.pop %v2310
    %v2312 = vmul.f32 %v2309, 1.442695
    %v2313 = vpow.pop %v2312
    %v2314 = vsel %vm998, %v2311, 0.0
    %2315 = vadd.xlane.f32.xlu0 %v2314
    %v2316 = vpop.xlane.xlu0 %2315
    %v2317 = vsel %vm998, %v2313, 0.0
    %2318 = vadd.xlane.f32.xlu0 %v2317
    %v2319 = vpop.xlane.xlu0 %2318
    %v2320 = vrcp.pop %v2316
    %v2321 = vrcp.pop %v2319
    %v2322 = vmul.f32 %v2311, %v2320
    %v2323 = vmul.f32 %v2313, %v2321
    %2324 = vrot.lane.b32.xlu0 %v1923, 112
    %v2325 = vpop.permute.xlu0 %2324
    %2326 = vrot.lane.b32.xlu0 %v1997, 112
    %v2327 = vpop.permute.xlu0 %2326
    %2328 = vrot.lane.b32.xlu0 %v2059, 112
    %v2329 = vpop.permute.xlu0 %2328
    %v2334 = vsel %vm998, %v2322, 0
    %v2337 = vsel %vm998, %v2323, 0
    %2339 = vmatpush.msra.mxu0 0.0
    %2340 = vmatpush.msra.mxu0 0.0
    %2341 = vmatpush.msra.mxu0 0.0
    %2342 = vmatpush.msra.mxu0 0.0
    %2343 = vmatpush.msra.mxu0 0.0
    %2344 = vmatpush.msra.mxu0 0.0
    %2345 = vmatpush.msra.mxu0 0.0
    %2346 = vmatpush.msra.mxu0 0.0
    %2347 = vmatpush.msra.mxu0 0.0
    %2348 = vmatpush.msra.mxu0 0.0
    %2349 = vmatpush.msra.mxu0 0.0
    %2350 = vmatpush.msra.mxu0 0.0
    %2351 = vmatpush.msra.mxu0 0.0
    %2352 = vmatpush.msra.mxu0 %v2329
    %2353 = vmatpush.msra.mxu0 %v2327
    %2354 = vmatpush.msra.mxu0 %v2325
    %2355 = vmatmul.f32.gmra.mxu0 %v2334
    %v2356 = vpop.f32.mrf.mxu0
    %v2357 = vadd.f32 0.0, %v2356
    %2358 = vmatmul.f32.gmra.mxu0 %v2337
    %v2359 = vpop.f32.mrf.mxu0
    %v2360 = vadd.f32 0.0, %v2359
    %2361 = vdwg.mxu0
    %2362 = vrot.lane.b32.xlu0 %v1638, 104
    %v2363 = vpop.permute.xlu0 %2362
    %2364 = vrot.lane.b32.xlu0 %v1696, 104
    %v2365 = vpop.permute.xlu0 %2364
    %2366 = vrot.lane.b32.xlu0 %v1742, 104
    %v2367 = vpop.permute.xlu0 %2366
    %2368 = vrot.lane.b32.xlu0 %v1816, 104
    %v2369 = vpop.permute.xlu0 %2368
    %2370 = vrot.lane.b32.xlu0 %v1878, 104
    %v2371 = vpop.permute.xlu0 %2370
    %v2372 = vsel %vm592, %v2363, 0
    %v2374 = vsel %vm592, %v2365, 0
    %v2376 = vsel %vm592, %v2367, 0
    %v2378 = vsel %vm592, %v2369, 0
    %v2380 = vsel %vm592, %v2371, 0
    %2382 = vmatpush.xpose.msra.mxu0 0.0
    %2383 = vmatpush.xpose.msra.mxu0 0.0
    %2384 = vmatpush.xpose.msra.mxu0 0.0
    %2385 = vmatpush.xpose.msra.mxu0 0.0
    %2386 = vmatpush.xpose.msra.mxu0 0.0
    %2387 = vmatpush.xpose.msra.mxu0 0.0
    %2388 = vmatpush.xpose.msra.mxu0 0.0
    %2389 = vmatpush.xpose.msra.mxu0 0.0
    %2390 = vmatpush.xpose.msra.mxu0 0.0
    %2391 = vmatpush.xpose.msra.mxu0 0.0
    %2392 = vmatpush.xpose.msra.mxu0 0.0
    %2393 = vmatpush.xpose.msra.mxu0 0.0
    %2394 = vmatpush.xpose.msra.mxu0 0.0
    %2395 = vmatpush.xpose.msra.mxu0 %v2380
    %2396 = vmatpush.xpose.msra.mxu0 %v2378
    %2397 = vmatpush.xpose.msra.mxu0 %v2376
    %2398 = vmatmul.f32.gmra.mxu0 %v2372
    %v2399 = vpop.f32.mrf.mxu0
    %v2400 = vadd.f32 %v1601, %v2399
    %2401 = vmatmul.f32.gmra.mxu0 %v2374
    %v2402 = vpop.f32.mrf.mxu0
    %v2403 = vadd.f32 %v1601, %v2402
    %2404 = vdwg.mxu0
    %v2405 = vsel %vm998, %v2400, -inf
    %2406 = vmax.xlane.f32.xlu0 %v2405
    %v2407 = vpop.xlane.xlu0 %2406
    %v2408 = vsel %vm998, %v2403, -inf
    %2409 = vmax.xlane.f32.xlu0 %v2408
    %v2410 = vpop.xlane.xlu0 %2409
    %v2411 = vsub.f32 %v2400, %v2407
    %v2412 = vsub.f32 %v2403, %v2410
    %v2413 = vmul.f32 %v2411, 1.442695
    %v2414 = vpow.pop %v2413
    %v2415 = vmul.f32 %v2412, 1.442695
    %v2416 = vpow.pop %v2415
    %v2417 = vsel %vm998, %v2414, 0.0
    %2418 = vadd.xlane.f32.xlu0 %v2417
    %v2419 = vpop.xlane.xlu0 %2418
    %v2420 = vsel %vm998, %v2416, 0.0
    %2421 = vadd.xlane.f32.xlu0 %v2420
    %v2422 = vpop.xlane.xlu0 %2421
    %v2423 = vrcp.pop %v2419
    %v2424 = vrcp.pop %v2422
    %v2425 = vmul.f32 %v2414, %v2423
    %v2426 = vmul.f32 %v2416, %v2424
    %2427 = vrot.lane.b32.xlu0 %v1923, 104
    %v2428 = vpop.permute.xlu0 %2427
    %2429 = vrot.lane.b32.xlu0 %v1997, 104
    %v2430 = vpop.permute.xlu0 %2429
    %2431 = vrot.lane.b32.xlu0 %v2059, 104
    %v2432 = vpop.permute.xlu0 %2431
    %v2437 = vsel %vm998, %v2425, 0
    %v2440 = vsel %vm998, %v2426, 0
    %2442 = vmatpush.msra.mxu0 0.0
    %2443 = vmatpush.msra.mxu0 0.0
    %2444 = vmatpush.msra.mxu0 0.0
    %2445 = vmatpush.msra.mxu0 0.0
    %2446 = vmatpush.msra.mxu0 0.0
    %2447 = vmatpush.msra.mxu0 0.0
    %2448 = vmatpush.msra.mxu0 0.0
    %2449 = vmatpush.msra.mxu0 0.0
    %2450 = vmatpush.msra.mxu0 0.0
    %2451 = vmatpush.msra.mxu0 0.0
    %2452 = vmatpush.msra.mxu0 0.0
    %2453 = vmatpush.msra.mxu0 0.0
    %2454 = vmatpush.msra.mxu0 0.0
    %2455 = vmatpush.msra.mxu0 %v2432
    %2456 = vmatpush.msra.mxu0 %v2430
    %2457 = vmatpush.msra.mxu0 %v2428
    %2458 = vmatmul.f32.gmra.mxu0 %v2437
    %v2459 = vpop.f32.mrf.mxu0
    %v2460 = vadd.f32 0.0, %v2459
    %2461 = vmatmul.f32.gmra.mxu0 %v2440
    %v2462 = vpop.f32.mrf.mxu0
    %v2463 = vadd.f32 0.0, %v2462
    %2464 = vdwg.mxu0
    %2467 = vrot.lane.b32.xlu0 %v2254, 8
    %v2468 = vpop.permute.xlu0 %2467
    %2469 = vrot.lane.b32.xlu0 %v2257, 8
    %v2470 = vpop.permute.xlu0 %2469
    %2475 = vrot.lane.b32.xlu0 %v2357, 16
    %v2476 = vpop.permute.xlu0 %2475
    %2477 = vrot.lane.b32.xlu0 %v2360, 16
    %v2478 = vpop.permute.xlu0 %2477
    %2483 = vrot.lane.b32.xlu0 %v2460, 24
    %v2484 = vpop.permute.xlu0 %2483
    %2485 = vrot.lane.b32.xlu0 %v2463, 24
    %v2486 = vpop.permute.xlu0 %2485
    %v2489 = vsel %vm592, %v2148, %v2468
    %v2490 = vsel %vm592, %v2151, %v2470
    %v2491 = vsel %vm628, %v2489, %v2476
    %v2492 = vsel %vm628, %v2490, %v2478
    %v2493 = vsel %vm998, %v2491, %v2484
    %v2494 = vsel %vm998, %v2492, %v2486
    %2496 = vrot.lane.b32.xlu0 %v2494, 32
    %v2497 = vpop.permute.xlu0 %2496
    %v2499 = vsel %vm1005, %v2493, %v2497
    %v2501 = vsel %vm592, %v1641, 0
    %v2504 = vsel %vm592, %v1699, 0
    %v2507 = vsel %vm592, %v1745, 0
    %v2510 = vsel %vm592, %v1819, 0
    %v2513 = vsel %vm592, %v1881, 0
    %2515 = vmatpush.xpose.msra.mxu0 0.0
    %2516 = vmatpush.xpose.msra.mxu0 0.0
    %2517 = vmatpush.xpose.msra.mxu0 0.0
    %2518 = vmatpush.xpose.msra.mxu0 0.0
    %2519 = vmatpush.xpose.msra.mxu0 0.0
    %2520 = vmatpush.xpose.msra.mxu0 0.0
    %2521 = vmatpush.xpose.msra.mxu0 0.0
    %2522 = vmatpush.xpose.msra.mxu0 0.0
    %2523 = vmatpush.xpose.msra.mxu0 0.0
    %2524 = vmatpush.xpose.msra.mxu0 0.0
    %2525 = vmatpush.xpose.msra.mxu0 0.0
    %2526 = vmatpush.xpose.msra.mxu0 0.0
    %2527 = vmatpush.xpose.msra.mxu0 0.0
    %2528 = vmatpush.xpose.msra.mxu0 %v2513
    %2529 = vmatpush.xpose.msra.mxu0 %v2510
    %2530 = vmatpush.xpose.msra.mxu0 %v2507
    %2531 = vmatmul.f32.gmra.mxu0 %v2501
    %v2532 = vpop.f32.mrf.mxu0
    %v2533 = vadd.f32 %v1601, %v2532
    %2534 = vmatmul.f32.gmra.mxu0 %v2504
    %v2535 = vpop.f32.mrf.mxu0
    %v2536 = vadd.f32 %v1601, %v2535
    %2537 = vdwg.mxu0
    %v2538 = vsel %vm998, %v2533, -inf
    %2539 = vmax.xlane.f32.xlu0 %v2538
    %v2540 = vpop.xlane.xlu0 %2539
    %v2541 = vsel %vm998, %v2536, -inf
    %2542 = vmax.xlane.f32.xlu0 %v2541
    %v2543 = vpop.xlane.xlu0 %2542
    %v2544 = vsub.f32 %v2533, %v2540
    %v2545 = vsub.f32 %v2536, %v2543
    %v2546 = vmul.f32 %v2544, 1.442695
    %v2547 = vpow.pop %v2546
    %v2548 = vmul.f32 %v2545, 1.442695
    %v2549 = vpow.pop %v2548
    %v2550 = vsel %vm998, %v2547, 0.0
    %2551 = vadd.xlane.f32.xlu0 %v2550
    %v2552 = vpop.xlane.xlu0 %2551
    %v2553 = vsel %vm998, %v2549, 0.0
    %2554 = vadd.xlane.f32.xlu0 %v2553
    %v2555 = vpop.xlane.xlu0 %2554
    %v2556 = vrcp.pop %v2552
    %v2557 = vrcp.pop %v2555
    %v2558 = vmul.f32 %v2547, %v2556
    %v2559 = vmul.f32 %v2549, %v2557
    %v2561 = vsel %vm998, %v2558, 0
    %v2564 = vsel %vm998, %v2559, 0
    %2566 = vmatpush.msra.mxu0 0.0
    %2567 = vmatpush.msra.mxu0 0.0
    %2568 = vmatpush.msra.mxu0 0.0
    %2569 = vmatpush.msra.mxu0 0.0
    %2570 = vmatpush.msra.mxu0 0.0
    %2571 = vmatpush.msra.mxu0 0.0
    %2572 = vmatpush.msra.mxu0 0.0
    %2573 = vmatpush.msra.mxu0 0.0
    %2574 = vmatpush.msra.mxu0 0.0
    %2575 = vmatpush.msra.mxu0 0.0
    %2576 = vmatpush.msra.mxu0 0.0
    %2577 = vmatpush.msra.mxu0 0.0
    %2578 = vmatpush.msra.mxu0 0.0
    %2579 = vmatpush.msra.mxu0 %v2062
    %2580 = vmatpush.msra.mxu0 %v2000
    %2581 = vmatpush.msra.mxu0 %v1926
    %2582 = vmatmul.f32.gmra.mxu0 %v2561
    %v2583 = vpop.f32.mrf.mxu0
    %v2584 = vadd.f32 0.0, %v2583
    %2585 = vmatmul.f32.gmra.mxu0 %v2564
    %v2586 = vpop.f32.mrf.mxu0
    %v2587 = vadd.f32 0.0, %v2586
    %2588 = vdwg.mxu0
    %2589 = vrot.lane.b32.xlu0 %v1641, 120
    %v2590 = vpop.permute.xlu0 %2589
    %2591 = vrot.lane.b32.xlu0 %v1699, 120
    %v2592 = vpop.permute.xlu0 %2591
    %2593 = vrot.lane.b32.xlu0 %v1745, 120
    %v2594 = vpop.permute.xlu0 %2593
    %2595 = vrot.lane.b32.xlu0 %v1819, 120
    %v2596 = vpop.permute.xlu0 %2595
    %2597 = vrot.lane.b32.xlu0 %v1881, 120
    %v2598 = vpop.permute.xlu0 %2597
    %v2599 = vsel %vm592, %v2590, 0
    %v2601 = vsel %vm592, %v2592, 0
    %v2603 = vsel %vm592, %v2594, 0
    %v2605 = vsel %vm592, %v2596, 0
    %v2607 = vsel %vm592, %v2598, 0
    %2609 = vmatpush.xpose.msra.mxu0 0.0
    %2610 = vmatpush.xpose.msra.mxu0 0.0
    %2611 = vmatpush.xpose.msra.mxu0 0.0
    %2612 = vmatpush.xpose.msra.mxu0 0.0
    %2613 = vmatpush.xpose.msra.mxu0 0.0
    %2614 = vmatpush.xpose.msra.mxu0 0.0
    %2615 = vmatpush.xpose.msra.mxu0 0.0
    %2616 = vmatpush.xpose.msra.mxu0 0.0
    %2617 = vmatpush.xpose.msra.mxu0 0.0
    %2618 = vmatpush.xpose.msra.mxu0 0.0
    %2619 = vmatpush.xpose.msra.mxu0 0.0
    %2620 = vmatpush.xpose.msra.mxu0 0.0
    %2621 = vmatpush.xpose.msra.mxu0 0.0
    %2622 = vmatpush.xpose.msra.mxu0 %v2607
    %2623 = vmatpush.xpose.msra.mxu0 %v2605
    %2624 = vmatpush.xpose.msra.mxu0 %v2603
    %2625 = vmatmul.f32.gmra.mxu0 %v2599
    %v2626 = vpop.f32.mrf.mxu0
    %v2627 = vadd.f32 %v1601, %v2626
    %2628 = vmatmul.f32.gmra.mxu0 %v2601
    %v2629 = vpop.f32.mrf.mxu0
    %v2630 = vadd.f32 %v1601, %v2629
    %2631 = vdwg.mxu0
    %v2632 = vsel %vm998, %v2627, -inf
    %2633 = vmax.xlane.f32.xlu0 %v2632
    %v2634 = vpop.xlane.xlu0 %2633
    %v2635 = vsel %vm998, %v2630, -inf
    %2636 = vmax.xlane.f32.xlu0 %v2635
    %v2637 = vpop.xlane.xlu0 %2636
    %v2638 = vsub.f32 %v2627, %v2634
    %v2639 = vsub.f32 %v2630, %v2637
    %v2640 = vmul.f32 %v2638, 1.442695
    %v2641 = vpow.pop %v2640
    %v2642 = vmul.f32 %v2639, 1.442695
    %v2643 = vpow.pop %v2642
    %v2644 = vsel %vm998, %v2641, 0.0
    %2645 = vadd.xlane.f32.xlu0 %v2644
    %v2646 = vpop.xlane.xlu0 %2645
    %v2647 = vsel %vm998, %v2643, 0.0
    %2648 = vadd.xlane.f32.xlu0 %v2647
    %v2649 = vpop.xlane.xlu0 %2648
    %v2650 = vrcp.pop %v2646
    %v2651 = vrcp.pop %v2649
    %v2652 = vmul.f32 %v2641, %v2650
    %v2653 = vmul.f32 %v2643, %v2651
    %2657 = vrot.lane.b32.xlu0 %v1926, 120
    %v2658 = vpop.permute.xlu0 %2657
    %2659 = vrot.lane.b32.xlu0 %v2000, 120
    %v2660 = vpop.permute.xlu0 %2659
    %2661 = vrot.lane.b32.xlu0 %v2062, 120
    %v2662 = vpop.permute.xlu0 %2661
    %v2667 = vsel %vm998, %v2652, 0
    %v2670 = vsel %vm998, %v2653, 0
    %2672 = vmatpush.msra.mxu0 0.0
    %2673 = vmatpush.msra.mxu0 0.0
    %2674 = vmatpush.msra.mxu0 0.0
    %2675 = vmatpush.msra.mxu0 0.0
    %2676 = vmatpush.msra.mxu0 0.0
    %2677 = vmatpush.msra.mxu0 0.0
    %2678 = vmatpush.msra.mxu0 0.0
    %2679 = vmatpush.msra.mxu0 0.0
    %2680 = vmatpush.msra.mxu0 0.0
    %2681 = vmatpush.msra.mxu0 0.0
    %2682 = vmatpush.msra.mxu0 0.0
    %2683 = vmatpush.msra.mxu0 0.0
    %2684 = vmatpush.msra.mxu0 0.0
    %2685 = vmatpush.msra.mxu0 %v2662
    %2686 = vmatpush.msra.mxu0 %v2660
    %2687 = vmatpush.msra.mxu0 %v2658
    %2688 = vmatmul.f32.gmra.mxu0 %v2667
    %v2689 = vpop.f32.mrf.mxu0
    %v2690 = vadd.f32 0.0, %v2689
    %2691 = vmatmul.f32.gmra.mxu0 %v2670
    %v2692 = vpop.f32.mrf.mxu0
    %v2693 = vadd.f32 0.0, %v2692
    %2694 = vdwg.mxu0
    %2695 = vrot.lane.b32.xlu0 %v1641, 112
    %v2696 = vpop.permute.xlu0 %2695
    %2697 = vrot.lane.b32.xlu0 %v1699, 112
    %v2698 = vpop.permute.xlu0 %2697
    %2699 = vrot.lane.b32.xlu0 %v1745, 112
    %v2700 = vpop.permute.xlu0 %2699
    %2701 = vrot.lane.b32.xlu0 %v1819, 112
    %v2702 = vpop.permute.xlu0 %2701
    %2703 = vrot.lane.b32.xlu0 %v1881, 112
    %v2704 = vpop.permute.xlu0 %2703
    %v2705 = vsel %vm592, %v2696, 0
    %v2707 = vsel %vm592, %v2698, 0
    %v2709 = vsel %vm592, %v2700, 0
    %v2711 = vsel %vm592, %v2702, 0
    %v2713 = vsel %vm592, %v2704, 0
    %2715 = vmatpush.xpose.msra.mxu0 0.0
    %2716 = vmatpush.xpose.msra.mxu0 0.0
    %2717 = vmatpush.xpose.msra.mxu0 0.0
    %2718 = vmatpush.xpose.msra.mxu0 0.0
    %2719 = vmatpush.xpose.msra.mxu0 0.0
    %2720 = vmatpush.xpose.msra.mxu0 0.0
    %2721 = vmatpush.xpose.msra.mxu0 0.0
    %2722 = vmatpush.xpose.msra.mxu0 0.0
    %2723 = vmatpush.xpose.msra.mxu0 0.0
    %2724 = vmatpush.xpose.msra.mxu0 0.0
    %2725 = vmatpush.xpose.msra.mxu0 0.0
    %2726 = vmatpush.xpose.msra.mxu0 0.0
    %2727 = vmatpush.xpose.msra.mxu0 0.0
    %2728 = vmatpush.xpose.msra.mxu0 %v2713
    %2729 = vmatpush.xpose.msra.mxu0 %v2711
    %2730 = vmatpush.xpose.msra.mxu0 %v2709
    %2731 = vmatmul.f32.gmra.mxu0 %v2705
    %v2732 = vpop.f32.mrf.mxu0
    %v2733 = vadd.f32 %v1601, %v2732
    %2734 = vmatmul.f32.gmra.mxu0 %v2707
    %v2735 = vpop.f32.mrf.mxu0
    %v2736 = vadd.f32 %v1601, %v2735
    %2737 = vdwg.mxu0
    %v2738 = vsel %vm998, %v2733, -inf
    %2739 = vmax.xlane.f32.xlu0 %v2738
    %v2740 = vpop.xlane.xlu0 %2739
    %v2741 = vsel %vm998, %v2736, -inf
    %2742 = vmax.xlane.f32.xlu0 %v2741
    %v2743 = vpop.xlane.xlu0 %2742
    %v2744 = vsub.f32 %v2733, %v2740
    %v2745 = vsub.f32 %v2736, %v2743
    %v2746 = vmul.f32 %v2744, 1.442695
    %v2747 = vpow.pop %v2746
    %v2748 = vmul.f32 %v2745, 1.442695
    %v2749 = vpow.pop %v2748
    %v2750 = vsel %vm998, %v2747, 0.0
    %2751 = vadd.xlane.f32.xlu0 %v2750
    %v2752 = vpop.xlane.xlu0 %2751
    %v2753 = vsel %vm998, %v2749, 0.0
    %2754 = vadd.xlane.f32.xlu0 %v2753
    %v2755 = vpop.xlane.xlu0 %2754
    %v2756 = vrcp.pop %v2752
    %v2757 = vrcp.pop %v2755
    %v2758 = vmul.f32 %v2747, %v2756
    %v2759 = vmul.f32 %v2749, %v2757
    %2760 = vrot.lane.b32.xlu0 %v1926, 112
    %v2761 = vpop.permute.xlu0 %2760
    %2762 = vrot.lane.b32.xlu0 %v2000, 112
    %v2763 = vpop.permute.xlu0 %2762
    %2764 = vrot.lane.b32.xlu0 %v2062, 112
    %v2765 = vpop.permute.xlu0 %2764
    %v2770 = vsel %vm998, %v2758, 0
    %v2773 = vsel %vm998, %v2759, 0
    %2775 = vmatpush.msra.mxu0 0.0
    %2776 = vmatpush.msra.mxu0 0.0
    %2777 = vmatpush.msra.mxu0 0.0
    %2778 = vmatpush.msra.mxu0 0.0
    %2779 = vmatpush.msra.mxu0 0.0
    %2780 = vmatpush.msra.mxu0 0.0
    %2781 = vmatpush.msra.mxu0 0.0
    %2782 = vmatpush.msra.mxu0 0.0
    %2783 = vmatpush.msra.mxu0 0.0
    %2784 = vmatpush.msra.mxu0 0.0
    %2785 = vmatpush.msra.mxu0 0.0
    %2786 = vmatpush.msra.mxu0 0.0
    %2787 = vmatpush.msra.mxu0 0.0
    %2788 = vmatpush.msra.mxu0 %v2765
    %2789 = vmatpush.msra.mxu0 %v2763
    %2790 = vmatpush.msra.mxu0 %v2761
    %2791 = vmatmul.f32.gmra.mxu0 %v2770
    %v2792 = vpop.f32.mrf.mxu0
    %v2793 = vadd.f32 0.0, %v2792
    %2794 = vmatmul.f32.gmra.mxu0 %v2773
    %v2795 = vpop.f32.mrf.mxu0
    %v2796 = vadd.f32 0.0, %v2795
    %2797 = vdwg.mxu0
    %2798 = vrot.lane.b32.xlu0 %v1641, 104
    %v2799 = vpop.permute.xlu0 %2798
    %2800 = vrot.lane.b32.xlu0 %v1699, 104
    %v2801 = vpop.permute.xlu0 %2800
    %2802 = vrot.lane.b32.xlu0 %v1745, 104
    %v2803 = vpop.permute.xlu0 %2802
    %2804 = vrot.lane.b32.xlu0 %v1819, 104
    %v2805 = vpop.permute.xlu0 %2804
    %2806 = vrot.lane.b32.xlu0 %v1881, 104
    %v2807 = vpop.permute.xlu0 %2806
    %v2808 = vsel %vm592, %v2799, 0
    %v2810 = vsel %vm592, %v2801, 0
    %v2812 = vsel %vm592, %v2803, 0
    %v2814 = vsel %vm592, %v2805, 0
    %v2816 = vsel %vm592, %v2807, 0
    %2818 = vmatpush.xpose.msra.mxu0 0.0
    %2819 = vmatpush.xpose.msra.mxu0 0.0
    %2820 = vmatpush.xpose.msra.mxu0 0.0
    %2821 = vmatpush.xpose.msra.mxu0 0.0
    %2822 = vmatpush.xpose.msra.mxu0 0.0
    %2823 = vmatpush.xpose.msra.mxu0 0.0
    %2824 = vmatpush.xpose.msra.mxu0 0.0
    %2825 = vmatpush.xpose.msra.mxu0 0.0
    %2826 = vmatpush.xpose.msra.mxu0 0.0
    %2827 = vmatpush.xpose.msra.mxu0 0.0
    %2828 = vmatpush.xpose.msra.mxu0 0.0
    %2829 = vmatpush.xpose.msra.mxu0 0.0
    %2830 = vmatpush.xpose.msra.mxu0 0.0
    %2831 = vmatpush.xpose.msra.mxu0 %v2816
    %2832 = vmatpush.xpose.msra.mxu0 %v2814
    %2833 = vmatpush.xpose.msra.mxu0 %v2812
    %2834 = vmatmul.f32.gmra.mxu0 %v2808
    %v2835 = vpop.f32.mrf.mxu0
    %v2836 = vadd.f32 %v1601, %v2835
    %2837 = vmatmul.f32.gmra.mxu0 %v2810
    %v2838 = vpop.f32.mrf.mxu0
    %v2839 = vadd.f32 %v1601, %v2838
    %2840 = vdwg.mxu0
    %v2841 = vsel %vm998, %v2836, -inf
    %2842 = vmax.xlane.f32.xlu0 %v2841
    %v2843 = vpop.xlane.xlu0 %2842
    %v2844 = vsel %vm998, %v2839, -inf
    %2845 = vmax.xlane.f32.xlu0 %v2844
    %v2846 = vpop.xlane.xlu0 %2845
    %v2847 = vsub.f32 %v2836, %v2843
    %v2848 = vsub.f32 %v2839, %v2846
    %v2849 = vmul.f32 %v2847, 1.442695
    %v2850 = vpow.pop %v2849
    %v2851 = vmul.f32 %v2848, 1.442695
    %v2852 = vpow.pop %v2851
    %v2853 = vsel %vm998, %v2850, 0.0
    %2854 = vadd.xlane.f32.xlu0 %v2853
    %v2855 = vpop.xlane.xlu0 %2854
    %v2856 = vsel %vm998, %v2852, 0.0
    %2857 = vadd.xlane.f32.xlu0 %v2856
    %v2858 = vpop.xlane.xlu0 %2857
    %v2859 = vrcp.pop %v2855
    %v2860 = vrcp.pop %v2858
    %v2861 = vmul.f32 %v2850, %v2859
    %v2862 = vmul.f32 %v2852, %v2860
    %2863 = vrot.lane.b32.xlu0 %v1926, 104
    %v2864 = vpop.permute.xlu0 %2863
    %2865 = vrot.lane.b32.xlu0 %v2000, 104
    %v2866 = vpop.permute.xlu0 %2865
    %2867 = vrot.lane.b32.xlu0 %v2062, 104
    %v2868 = vpop.permute.xlu0 %2867
    %v2873 = vsel %vm998, %v2861, 0
    %v2876 = vsel %vm998, %v2862, 0
    %2878 = vmatpush.msra.mxu0 0.0
    %2879 = vmatpush.msra.mxu0 0.0
    %2880 = vmatpush.msra.mxu0 0.0
    %2881 = vmatpush.msra.mxu0 0.0
    %2882 = vmatpush.msra.mxu0 0.0
    %2883 = vmatpush.msra.mxu0 0.0
    %2884 = vmatpush.msra.mxu0 0.0
    %2885 = vmatpush.msra.mxu0 0.0
    %2886 = vmatpush.msra.mxu0 0.0
    %2887 = vmatpush.msra.mxu0 0.0
    %2888 = vmatpush.msra.mxu0 0.0
    %2889 = vmatpush.msra.mxu0 0.0
    %2890 = vmatpush.msra.mxu0 0.0
    %2891 = vmatpush.msra.mxu0 %v2868
    %2892 = vmatpush.msra.mxu0 %v2866
    %2893 = vmatpush.msra.mxu0 %v2864
    %2894 = vmatmul.f32.gmra.mxu0 %v2873
    %v2895 = vpop.f32.mrf.mxu0
    %v2896 = vadd.f32 0.0, %v2895
    %2897 = vmatmul.f32.gmra.mxu0 %v2876
    %v2898 = vpop.f32.mrf.mxu0
    %v2899 = vadd.f32 0.0, %v2898
    %2900 = vdwg.mxu0
    %2903 = vrot.lane.b32.xlu0 %v2690, 8
    %v2904 = vpop.permute.xlu0 %2903
    %2905 = vrot.lane.b32.xlu0 %v2693, 8
    %v2906 = vpop.permute.xlu0 %2905
    %2911 = vrot.lane.b32.xlu0 %v2793, 16
    %v2912 = vpop.permute.xlu0 %2911
    %2913 = vrot.lane.b32.xlu0 %v2796, 16
    %v2914 = vpop.permute.xlu0 %2913
    %2919 = vrot.lane.b32.xlu0 %v2896, 24
    %v2920 = vpop.permute.xlu0 %2919
    %2921 = vrot.lane.b32.xlu0 %v2899, 24
    %v2922 = vpop.permute.xlu0 %2921
    %v2925 = vsel %vm592, %v2584, %v2904
    %v2926 = vsel %vm592, %v2587, %v2906
    %v2927 = vsel %vm628, %v2925, %v2912
    %v2928 = vsel %vm628, %v2926, %v2914
    %v2929 = vsel %vm998, %v2927, %v2920
    %v2930 = vsel %vm998, %v2928, %v2922
    %2932 = vrot.lane.b32.xlu0 %v2930, 32
    %v2933 = vpop.permute.xlu0 %2932
    %v2935 = vsel %vm1005, %v2929, %v2933
    %v2936 = vld [vmem:[#allocation17] sm:$0xff]
    %v2937 = vld [vmem:[#allocation17 + $0x8] sm:$0xff]
    %v2938 = vld [vmem:[#allocation17 + $0x10] sm:$0xff]
    %v2939 = vld [vmem:[#allocation17 + $0x18] sm:$0xff]
    %v2940 = vld [vmem:[#allocation17 + $0x20] sm:$0xff]
    %v2941 = vld [vmem:[#allocation17 + $0x28] sm:$0xff]
    %v2942 = vld [vmem:[#allocation17 + $0x30] sm:$0xff]
    %v2943 = vld [vmem:[#allocation17 + $0x38] sm:$0xff]
    %v2944 = vld [vmem:[%s43] sm:$0x1]
    %v2946 = vperm.slane %v2944, 0
    %v2949 = vsel %vm318, %v2499, 0
    %v2952 = vsel %vm318, %v2935, 0
    %2954 = vmatpush.msra.mxu0 0.0
    %2955 = vmatpush.msra.mxu0 0.0
    %2956 = vmatpush.msra.mxu0 0.0
    %2957 = vmatpush.msra.mxu0 0.0
    %2958 = vmatpush.msra.mxu0 0.0
    %2959 = vmatpush.msra.mxu0 0.0
    %2960 = vmatpush.msra.mxu0 0.0
    %2961 = vmatpush.msra.mxu0 0.0
    %2962 = vmatpush.msra.mxu0 %v2943
    %2963 = vmatpush.msra.mxu0 %v2942
    %2964 = vmatpush.msra.mxu0 %v2941
    %2965 = vmatpush.msra.mxu0 %v2940
    %2966 = vmatpush.msra.mxu0 %v2939
    %2967 = vmatpush.msra.mxu0 %v2938
    %2968 = vmatpush.msra.mxu0 %v2937
    %2969 = vmatpush.msra.mxu0 %v2936
    %2970 = vmatmul.f32.gmra.mxu0 %v2949
    %v2971 = vpop.f32.mrf.mxu0
    %v2972 = vadd.f32 %v2946, %v2971
    %2973 = vmatmul.f32.gmra.mxu0 %v2952
    %v2974 = vpop.f32.mrf.mxu0
    %v2975 = vadd.f32 %v2946, %v2974
    %2976 = vdwg.mxu0
    %v2977 = vadd.f32 %v2972, %v1584
    %v2978 = vadd.f32 %v2975, %v1585
    %v2979 = vsel %vm1005, %v2977, 0.0
    %2980 = vadd.xlane.f32.xlu0 %v2979
    %v2981 = vpop.xlane.xlu0 %2980
    %v2982 = vsel %vm1005, %v2978, 0.0
    %2983 = vadd.xlane.f32.xlu0 %v2982
    %v2984 = vpop.xlane.xlu0 %2983
    %v2985 = vmul.f32 %v2981, %v1473
    %v2986 = vmul.f32 %v2984, %v1473
    %v2987 = vsub.f32 %v2977, %v2985
    %v2988 = vsub.f32 %v2978, %v2986
    %v2989 = vmul.f32 %v2987, %v2987
    %v2990 = vmul.f32 %v2988, %v2988
    %v2991 = vsel %vm1005, %v2989, 0.0
    %2992 = vadd.xlane.f32.xlu0 %v2991
    %v2993 = vpop.xlane.xlu0 %2992
    %v2994 = vsel %vm1005, %v2990, 0.0
    %2995 = vadd.xlane.f32.xlu0 %v2994
    %v2996 = vpop.xlane.xlu0 %2995
    %v2997 = vmul.f32 %v2993, %v1473
    %v2998 = vmul.f32 %v2996, %v1473
    %v2999 = vadd.f32 %v2997, 1e-05
    %v3000 = vadd.f32 %v2998, 1e-05
    %v3001 = vrsqrt.pop %v2999
    %v3002 = vmul.f32 %v3001, %v2999
    %v3003 = vmul.f32 %v3002, %v3001
    %v3004 = vmul.f32 0.5, %v3003
    %v3005 = vsub.f32 1.5, %v3004
    %v3006 = vmul.f32 %v3001, %v3005
    %vm3007 = vweird.f32 %v2999
    %vm3008 = vweird.f32 %v3001
    %vm3009 = vmor %vm3007, %vm3008
    %v3010 = vsel %vm3009, %v3001, %v3006
    %v3011 = vrsqrt.pop %v3000
    %v3012 = vmul.f32 %v3011, %v3000
    %v3013 = vmul.f32 %v3012, %v3011
    %v3014 = vmul.f32 0.5, %v3013
    %v3015 = vsub.f32 1.5, %v3014
    %v3016 = vmul.f32 %v3011, %v3015
    %vm3017 = vweird.f32 %v3000
    %vm3018 = vweird.f32 %v3011
    %vm3019 = vmor %vm3017, %vm3018
    %v3020 = vsel %vm3019, %v3011, %v3016
    %v3021 = vmul.f32 %v2987, %v3010
    %v3022 = vmul.f32 %v2988, %v3020
    %3025 = vrot.lane.b32.xlu0 %v2977, 96
    %v3026 = vpop.permute.xlu0 %3025
    %3027 = vrot.lane.b32.xlu0 %v2978, 96
    %v3028 = vpop.permute.xlu0 %3027
    %v3031 = vsel %vm1005, %v3026, 0.0
    %3032 = vadd.xlane.f32.xlu0 %v3031
    %v3033 = vpop.xlane.xlu0 %3032
    %v3034 = vsel %vm1005, %v3028, 0.0
    %3035 = vadd.xlane.f32.xlu0 %v3034
    %v3036 = vpop.xlane.xlu0 %3035
    %v3037 = vmul.f32 %v3033, %v1473
    %v3038 = vmul.f32 %v3036, %v1473
    %v3039 = vsub.f32 %v2977, %v3037
    %v3040 = vsub.f32 %v2978, %v3038
    %v3041 = vmul.f32 %v3039, %v3039
    %v3042 = vmul.f32 %v3040, %v3040
    %3045 = vrot.lane.b32.xlu0 %v3041, 96
    %v3046 = vpop.permute.xlu0 %3045
    %3047 = vrot.lane.b32.xlu0 %v3042, 96
    %v3048 = vpop.permute.xlu0 %3047
    %v3051 = vsel %vm1005, %v3046, 0.0
    %3052 = vadd.xlane.f32.xlu0 %v3051
    %v3053 = vpop.xlane.xlu0 %3052
    %v3054 = vsel %vm1005, %v3048, 0.0
    %3055 = vadd.xlane.f32.xlu0 %v3054
    %v3056 = vpop.xlane.xlu0 %3055
    %v3057 = vmul.f32 %v3053, %v1473
    %v3058 = vmul.f32 %v3056, %v1473
    %v3059 = vadd.f32 %v3057, 1e-05
    %v3060 = vadd.f32 %v3058, 1e-05
    %v3061 = vrsqrt.pop %v3059
    %v3062 = vmul.f32 %v3061, %v3059
    %v3063 = vmul.f32 %v3062, %v3061
    %v3064 = vmul.f32 0.5, %v3063
    %v3065 = vsub.f32 1.5, %v3064
    %v3066 = vmul.f32 %v3061, %v3065
    %vm3067 = vweird.f32 %v3059
    %vm3068 = vweird.f32 %v3061
    %vm3069 = vmor %vm3067, %vm3068
    %v3070 = vsel %vm3069, %v3061, %v3066
    %v3071 = vrsqrt.pop %v3060
    %v3072 = vmul.f32 %v3071, %v3060
    %v3073 = vmul.f32 %v3072, %v3071
    %v3074 = vmul.f32 0.5, %v3073
    %v3075 = vsub.f32 1.5, %v3074
    %v3076 = vmul.f32 %v3071, %v3075
    %vm3077 = vweird.f32 %v3060
    %vm3078 = vweird.f32 %v3071
    %vm3079 = vmor %vm3077, %vm3078
    %v3080 = vsel %vm3079, %v3071, %v3076
    %v3081 = vmul.f32 %v3039, %v3070
    %v3082 = vmul.f32 %v3040, %v3080
    %v3083 = vsel %vm1005, %v3021, %v3081
    %v3084 = vsel %vm1005, %v3022, %v3082
    %v3085 = vld [vmem:[%s45] sm:$0x1]
    %v3087 = vperm.slane %v3085, 0
    %v3089 = vmul.f32 %v3083, %v3087
    %v3090 = vmul.f32 %v3084, %v3087
    %v3091 = vld [vmem:[%s47] sm:$0x1]
    %v3093 = vperm.slane %v3091, 0
    %v3095 = vadd.f32 %v3089, %v3093
    %v3096 = vadd.f32 %v3090, %v3093
    %v3097 = vld [vmem:[#allocation19] sm:$0xff]
    %v3098 = vld [vmem:[#allocation19 + $0x8] sm:$0xff]
    %v3099 = vld [vmem:[#allocation19 + $0x10] sm:$0xff]
    %v3100 = vld [vmem:[#allocation19 + $0x18] sm:$0xff]
    %v3101 = vld [vmem:[#allocation19 + $0x20] sm:$0xff]
    %v3102 = vld [vmem:[#allocation19 + $0x28] sm:$0xff]
    %v3103 = vld [vmem:[#allocation19 + $0x30] sm:$0xff]
    %v3104 = vld [vmem:[#allocation19 + $0x38] sm:$0xff]
    %v3105 = vld [vmem:[%s51] sm:$0x1]
    %v3107 = vperm.slane %v3105, 0
    %v3110 = vsel %vm318, %v3095, 0
    %v3113 = vsel %vm318, %v3096, 0
    %3115 = vmatpush.msra.mxu0 0.0
    %3116 = vmatpush.msra.mxu0 0.0
    %3117 = vmatpush.msra.mxu0 0.0
    %3118 = vmatpush.msra.mxu0 0.0
    %3119 = vmatpush.msra.mxu0 0.0
    %3120 = vmatpush.msra.mxu0 0.0
    %3121 = vmatpush.msra.mxu0 0.0
    %3122 = vmatpush.msra.mxu0 0.0
    %3123 = vmatpush.msra.mxu0 %v3104
    %3124 = vmatpush.msra.mxu0 %v3103
    %3125 = vmatpush.msra.mxu0 %v3102
    %3126 = vmatpush.msra.mxu0 %v3101
    %3127 = vmatpush.msra.mxu0 %v3100
    %3128 = vmatpush.msra.mxu0 %v3099
    %3129 = vmatpush.msra.mxu0 %v3098
    %3130 = vmatpush.msra.mxu0 %v3097
    %3131 = vmatmul.f32.gmra.mxu0 %v3110
    %v3132 = vpop.f32.mrf.mxu0
    %v3133 = vadd.f32 %v3107, %v3132
    %3134 = vmatmul.f32.gmra.mxu0 %v3113
    %v3135 = vpop.f32.mrf.mxu0
    %v3136 = vadd.f32 %v3107, %v3135
    %3137 = vdwg.mxu0
    %v3138 = vmul.f32 %v3133, 0.05
    %v3139 = vmul.f32 %v3136, 0.05
    %v3140 = vmax.f32 %v3133, %v3138
    %v3141 = vmax.f32 %v3136, %v3139
    %v3142 = vld [vmem:[%s53] sm:$0xff]
    %v3143 = vld [vmem:[%s53 + $0x8] sm:$0xff]
    %v3144 = vld [vmem:[%s53 + $0x10] sm:$0xff]
    %v3145 = vld [vmem:[%s53 + $0x18] sm:$0xff]
    %v3146 = vld [vmem:[%s53 + $0x20] sm:$0xff]
    %v3147 = vld [vmem:[%s53 + $0x28] sm:$0xff]
    %v3148 = vld [vmem:[%s53 + $0x30] sm:$0xff]
    %v3149 = vld [vmem:[%s53 + $0x38] sm:$0xff]
    %v3150 = vld [vmem:[%s53 + $0x40] sm:$0xff]
    %v3151 = vld [vmem:[%s53 + $0x48] sm:$0xff]
    %v3152 = vld [vmem:[%s53 + $0x50] sm:$0xff]
    %v3153 = vld [vmem:[%s53 + $0x58] sm:$0xff]
    %v3154 = vld [vmem:[%s53 + $0x60] sm:$0xff]
    %v3155 = vld [vmem:[%s53 + $0x68] sm:$0xff]
    %v3156 = vld [vmem:[%s53 + $0x70] sm:$0xff]
    %v3157 = vld [vmem:[%s53 + $0x78] sm:$0xff]
    %v3158 = vld [vmem:[%s55] sm:$0x1]
    %v3160 = vperm.slane %v3158, 0
    %3162 = vmatpush.msra.mxu0 %v3157
    %3163 = vmatpush.msra.mxu0 %v3156
    %3164 = vmatpush.msra.mxu0 %v3155
    %3165 = vmatpush.msra.mxu0 %v3154
    %3166 = vmatpush.msra.mxu0 %v3153
    %3167 = vmatpush.msra.mxu0 %v3152
    %3168 = vmatpush.msra.mxu0 %v3151
    %3169 = vmatpush.msra.mxu0 %v3150
    %3170 = vmatpush.msra.mxu0 %v3149
    %3171 = vmatpush.msra.mxu0 %v3148
    %3172 = vmatpush.msra.mxu0 %v3147
    %3173 = vmatpush.msra.mxu0 %v3146
    %3174 = vmatpush.msra.mxu0 %v3145
    %3175 = vmatpush.msra.mxu0 %v3144
    %3176 = vmatpush.msra.mxu0 %v3143
    %3177 = vmatpush.msra.mxu0 %v3142
    %3178 = vmatmul.f32.gmra.mxu0 %v3140
    %v3179 = vpop.f32.mrf.mxu0
    %v3180 = vadd.f32 %v3160, %v3179
    %3181 = vmatmul.f32.gmra.mxu0 %v3141
    %v3182 = vpop.f32.mrf.mxu0
    %v3183 = vadd.f32 %v3160, %v3182
    %3184 = vdwg.mxu0
    %v3185 = vadd.f32 %v3180, %v3095
    %v3186 = vadd.f32 %v3183, %v3096
    %v3187 = vsel %vm1005, %v3185, 0.0
    %3188 = vadd.xlane.f32.xlu0 %v3187
    %v3189 = vpop.xlane.xlu0 %3188
    %v3190 = vsel %vm1005, %v3186, 0.0
    %3191 = vadd.xlane.f32.xlu0 %v3190
    %v3192 = vpop.xlane.xlu0 %3191
    %v3193 = vmul.f32 %v3189, %v1473
    %v3194 = vmul.f32 %v3192, %v1473
    %v3195 = vsub.f32 %v3185, %v3193
    %v3196 = vsub.f32 %v3186, %v3194
    %v3197 = vmul.f32 %v3195, %v3195
    %v3198 = vmul.f32 %v3196, %v3196
    %v3199 = vsel %vm1005, %v3197, 0.0
    %3200 = vadd.xlane.f32.xlu0 %v3199
    %v3201 = vpop.xlane.xlu0 %3200
    %v3202 = vsel %vm1005, %v3198, 0.0
    %3203 = vadd.xlane.f32.xlu0 %v3202
    %v3204 = vpop.xlane.xlu0 %3203
    %v3205 = vmul.f32 %v3201, %v1473
    %v3206 = vmul.f32 %v3204, %v1473
    %v3207 = vadd.f32 %v3205, 1e-05
    %v3208 = vadd.f32 %v3206, 1e-05
    %v3209 = vrsqrt.pop %v3207
    %v3210 = vmul.f32 %v3209, %v3207
    %v3211 = vmul.f32 %v3210, %v3209
    %v3212 = vmul.f32 0.5, %v3211
    %v3213 = vsub.f32 1.5, %v3212
    %v3214 = vmul.f32 %v3209, %v3213
    %vm3215 = vweird.f32 %v3207
    %vm3216 = vweird.f32 %v3209
    %vm3217 = vmor %vm3215, %vm3216
    %v3218 = vsel %vm3217, %v3209, %v3214
    %v3219 = vrsqrt.pop %v3208
    %v3220 = vmul.f32 %v3219, %v3208
    %v3221 = vmul.f32 %v3220, %v3219
    %v3222 = vmul.f32 0.5, %v3221
    %v3223 = vsub.f32 1.5, %v3222
    %v3224 = vmul.f32 %v3219, %v3223
    %vm3225 = vweird.f32 %v3208
    %vm3226 = vweird.f32 %v3219
    %vm3227 = vmor %vm3225, %vm3226
    %v3228 = vsel %vm3227, %v3219, %v3224
    %v3229 = vmul.f32 %v3195, %v3218
    %v3230 = vmul.f32 %v3196, %v3228
    %3233 = vrot.lane.b32.xlu0 %v3185, 96
    %v3234 = vpop.permute.xlu0 %3233
    %3235 = vrot.lane.b32.xlu0 %v3186, 96
    %v3236 = vpop.permute.xlu0 %3235
    %v3239 = vsel %vm1005, %v3234, 0.0
    %3240 = vadd.xlane.f32.xlu0 %v3239
    %v3241 = vpop.xlane.xlu0 %3240
    %v3242 = vsel %vm1005, %v3236, 0.0
    %3243 = vadd.xlane.f32.xlu0 %v3242
    %v3244 = vpop.xlane.xlu0 %3243
    %v3245 = vmul.f32 %v3241, %v1473
    %v3246 = vmul.f32 %v3244, %v1473
    %v3247 = vsub.f32 %v3185, %v3245
    %v3248 = vsub.f32 %v3186, %v3246
    %v3249 = vmul.f32 %v3247, %v3247
    %v3250 = vmul.f32 %v3248, %v3248
    %3253 = vrot.lane.b32.xlu0 %v3249, 96
    %v3254 = vpop.permute.xlu0 %3253
    %3255 = vrot.lane.b32.xlu0 %v3250, 96
    %v3256 = vpop.permute.xlu0 %3255
    %v3259 = vsel %vm1005, %v3254, 0.0
    %3260 = vadd.xlane.f32.xlu0 %v3259
    %v3261 = vpop.xlane.xlu0 %3260
    %v3262 = vsel %vm1005, %v3256, 0.0
    %3263 = vadd.xlane.f32.xlu0 %v3262
    %v3264 = vpop.xlane.xlu0 %3263
    %v3265 = vmul.f32 %v3261, %v1473
    %v3266 = vmul.f32 %v3264, %v1473
    %v3267 = vadd.f32 %v3265, 1e-05
    %v3268 = vadd.f32 %v3266, 1e-05
    %v3269 = vrsqrt.pop %v3267
    %v3270 = vmul.f32 %v3269, %v3267
    %v3271 = vmul.f32 %v3270, %v3269
    %v3272 = vmul.f32 0.5, %v3271
    %v3273 = vsub.f32 1.5, %v3272
    %v3274 = vmul.f32 %v3269, %v3273
    %vm3275 = vweird.f32 %v3267
    %vm3276 = vweird.f32 %v3269
    %vm3277 = vmor %vm3275, %vm3276
    %v3278 = vsel %vm3277, %v3269, %v3274
    %v3279 = vrsqrt.pop %v3268
    %v3280 = vmul.f32 %v3279, %v3268
    %v3281 = vmul.f32 %v3280, %v3279
    %v3282 = vmul.f32 0.5, %v3281
    %v3283 = vsub.f32 1.5, %v3282
    %v3284 = vmul.f32 %v3279, %v3283
    %vm3285 = vweird.f32 %v3268
    %vm3286 = vweird.f32 %v3279
    %vm3287 = vmor %vm3285, %vm3286
    %v3288 = vsel %vm3287, %v3279, %v3284
    %v3289 = vmul.f32 %v3247, %v3278
    %v3290 = vmul.f32 %v3248, %v3288
    %v3291 = vsel %vm1005, %v3229, %v3289
    %v3292 = vsel %vm1005, %v3230, %v3290
    %v3293 = vld [vmem:[%s57] sm:$0x1]
    %v3295 = vperm.slane %v3293, 0
    %v3297 = vmul.f32 %v3291, %v3295
    %v3298 = vmul.f32 %v3292, %v3295
    %v3299 = vld [vmem:[%s59] sm:$0x1]
    %v3301 = vperm.slane %v3299, 0
    %v3303 = vadd.f32 %v3297, %v3301
    %v3304 = vadd.f32 %v3298, %v3301
    %3305 = vst.msk [vmem:[#allocation20] sm:$0xff] %vm318, %v3303
    %3306 = vst.msk [vmem:[#allocation20 + $0x8] sm:$0xff] %vm318, %v3304
    // Predicated region
    $region166: #{tpu_custom_call.1} parent=1 // pred_check
      _
    $region167: #{tpu_custom_call.1} parent=1 // pred_check_branch
      %3308 = sbr.rel (0) target = $region169
    $region168: #{tpu_custom_call.1} parent=1 // pred_region
      %3310 = vsyncadd [#allocation4], 0
      %s3311 = sshll.u32 [#allocation20], 4
      %s3312 = int_to_ptr.vmem [resolvable:$true] %s3311
      %s3313 = sshll.u32 %s61, 4
      %s3314 = int_to_ptr.hbm [resolvable:$true] %s3313
      %3319 = dma.vmem_to_hbm [thread:$0]  %s3312, 256, %s3314, [#allocation4], 128, 128, 8
    $region169: #{tpu_custom_call.1} parent=1 // pred_fallthru
      _
    // Predicated region
    $region170: #{tpu_custom_call.1} parent=1 // pred_check
      _
    $region171: #{tpu_custom_call.1} parent=1 // pred_check_branch
      %3321 = sbr.rel (0) target = $region173
    $region172: #{tpu_custom_call.1} parent=1 // pred_region
      %3323 = dma.done [#allocation4], 256
    $region173: #{tpu_custom_call.1} parent=1 // pred_fallthru
      _
    %3324 = vsyncpa [#allocation3], 1
    %3325 = vsyncpa [#allocation6], 1
    %3326 = vsyncpa [#allocation9], 1
    %3327 = vsyncpa [#allocation12], 1
    %3328 = vsyncpa [#allocation15], 1
    %3329 = vsyncpa [#allocation18], 1
    %3330 = vsyncpa [#allocation4], 1

</llo_original>
